<compile_context>
chip_gen: v5e
topology: v5e:2x2
jax: 0.10.0
libtpu: 0.0.40
codegen_flags: <defaults>
</compile_context>

<pallas_src>
import jax
import jax.numpy as jnp
from jax import lax
from jax.experimental import pallas as pl
from jax.experimental.pallas import tpu as pltpu

EPS = 1e-5        # BatchNorm2d default eps
LANE = 128
SUBLANE = 8
VMEM_LIMIT = 32 * 1024 * 1024   # safe on v5e/v6e/v7x; blocks here are tiny


def _round_up(v, m):
    return ((v + m - 1) // m) * m


def _row_tile(n, cap=256):
    """Largest multiple-of-8 divisor of n that is <= cap (fallback: n itself)."""
    best = None
    t = SUBLANE
    while t <= n and t <= cap:
        if n % t == 0:
            best = t
        t += SUBLANE
    return best if best is not None else n


def nconv2d(x, weight, bias, gamma, beta, *, stride=1, padding=1):
    """x: (N, in_c, H, W) NCHW f32; weight: (out_c, in_c, KH, KW) OIHW f32."""
    del bias  # cancelled exactly by the BatchNorm mean subtraction (no-op on output)

    n, in_c, h, w = x.shape
    out_c, _, kh, kw = weight.shape

    h_p, w_p = h + 2 * padding, w + 2 * padding
    h_dense = h_p - kh + 1                      # stride-1 dense output rows
    oh = (h_p - kh) // stride + 1
    ow = (w_p - kw) // stride + 1
    L = h_dense * w_p                           # dense flat output positions / image
    flat = (kh - 1) * w_p + (kw - 1) + L        # flat input length incl. tap halo
    cin_p = _round_up(max(in_c, SUBLANE), SUBLANE)
    cout_p = _round_up(max(out_c, LANE), LANE)  # lane-dense output channels

    # ---- glue: pad + NHWC + flatten (no im2col array is ever built) --------
    xp = jnp.pad(x, ((0, 0), (0, 0), (padding, padding), (padding, padding)))
    xp = xp.transpose(0, 2, 3, 1)                                    # (N,H_p,W_p,C)
    xp = jnp.pad(xp, ((0, 0), (0, 0), (0, 0), (0, cin_p - in_c)))
    xflat = xp.reshape(n, h_p * w_p, cin_p)
    xflat = jnp.pad(xflat, ((0, 0), (0, flat - h_p * w_p), (0, 0)))  # tap halo rows

    # weights: (O,I,kh,kw) -> (kh*kw, I_pad, O_pad) bf16 for the MXU
    w_taps = weight.transpose(2, 3, 1, 0).reshape(kh * kw, in_c, out_c)
    w_taps = jnp.pad(w_taps, ((0, 0), (0, cin_p - in_c), (0, cout_p - out_c)))
    w_taps = w_taps.astype(jnp.bfloat16)

    # ---- phase 1: tap-wise conv (bf16 MXU, f32 acc) + per-image BN partials -
    def conv_stats_kernel(x_ref, w_ref, y_ref, s_ref, q_ref):
        # x_ref: (1, flat, cin_p) f32, w_ref: (kh*kw, cin_p, cout_p) bf16
        # y_ref: (1, L, cout_p) f32, s_ref/q_ref: (1, 8, cout_p) f32
        acc = jnp.zeros((L, cout_p), jnp.float32)
        for t in range(kh * kw):
            start = (t // kw) * w_p + (t % kw)
            xs = x_ref[0, start:start + L, :].astype(jnp.bfloat16)
            acc = acc + jnp.dot(xs, w_ref[t], preferred_element_type=jnp.float32)
        y_ref[0] = acc

        # mask out "wrapped" dense positions (ow >= OW) so stats are exact
        rows = lax.broadcasted_iota(jnp.int32, (L, cout_p), 0)
        ow_d = rows % w_p
        valid = ow_d < ow * stride
        if stride > 1:
            oh_d = rows // w_p
            valid = valid & ((ow_d % stride) == 0) & ((oh_d % stride) == 0) \
                          & (oh_d < oh * stride)
        yv = jnp.where(valid, acc, 0.0)
        s_ref[0] = jnp.broadcast_to(jnp.sum(yv, axis=0, keepdims=True),
                                    (SUBLANE, cout_p))
        q_ref[0] = jnp.broadcast_to(jnp.sum(yv * yv, axis=0, keepdims=True),
                                    (SUBLANE, cout_p))

    y_wide, psum, psumsq = pl.pallas_call(
        conv_stats_kernel,
        out_shape=(
            jax.ShapeDtypeStruct((n, L, cout_p), jnp.float32),
            jax.ShapeDtypeStruct((n, SUBLANE, cout_p), jnp.float32),
            jax.ShapeDtypeStruct((n, SUBLANE, cout_p), jnp.float32),
        ),
        grid_spec=pltpu.PrefetchScalarGridSpec(
            num_scalar_prefetch=0,
            grid=(n,),
            in_specs=[
                pl.BlockSpec((1, flat, cin_p), lambda b: (b, 0, 0)),
                pl.BlockSpec((kh * kw, cin_p, cout_p), lambda b: (0, 0, 0)),
            ],
            out_specs=(
                pl.BlockSpec((1, L, cout_p), lambda b: (b, 0, 0)),
                pl.BlockSpec((1, SUBLANE, cout_p), lambda b: (b, 0, 0)),
                pl.BlockSpec((1, SUBLANE, cout_p), lambda b: (b, 0, 0)),
            ),
        ),
        compiler_params=pltpu.CompilerParams(
            dimension_semantics=("parallel",),
            vmem_limit_bytes=VMEM_LIMIT,
        ),
    )(xflat, w_taps)

    # ---- tiny global stats finalize + BN fold (glue, per-channel only) -----
    count = float(n * oh * ow)
    s = jnp.sum(psum[:, 0, :], axis=0)            # (cout_p,)
    q = jnp.sum(psumsq[:, 0, :], axis=0)
    mean = s / count
    var = jnp.maximum(q / count - mean * mean, 0.0)   # one-pass E[y^2]-mean^2
    gamma_p = jnp.pad(gamma.astype(jnp.float32), (0, cout_p - out_c))
    beta_p = jnp.pad(beta.astype(jnp.float32), (0, cout_p - out_c))
    scale = gamma_p * lax.rsqrt(var + EPS)
    shift = beta_p - mean * scale
    scale = scale.reshape(1, cout_p)
    shift = shift.reshape(1, cout_p)

    # ---- phase 2: lane-dense, row-tiled normalize + ReLU --------------------
    tl = _row_tile(L)

    def bn_relu_kernel(y_ref, sc_ref, sh_ref, o_ref):
        # (1, tl, cout_p) * (1, cout_p) + (1, cout_p): single fused pass + ReLU
        o_ref[...] = jnp.maximum(y_ref[...] * sc_ref[...] + sh_ref[...],
                                 0.0).astype(o_ref.dtype)

    out_wide = pl.pallas_call(
        bn_relu_kernel,
        out_shape=jax.ShapeDtypeStruct((n, L, cout_p), jnp.float32),
        grid_spec=pltpu.PrefetchScalarGridSpec(
            num_scalar_prefetch=0,
            grid=(n, L // tl),
            in_specs=[
                pl.BlockSpec((1, tl, cout_p), lambda b, t: (b, t, 0)),
                pl.BlockSpec((1, cout_p), lambda b, t: (0, 0)),
                pl.BlockSpec((1, cout_p), lambda b, t: (0, 0)),
            ],
            out_specs=pl.BlockSpec((1, tl, cout_p), lambda b, t: (b, t, 0)),
        ),
        compiler_params=pltpu.CompilerParams(
            dimension_semantics=("parallel", "parallel"),
            vmem_limit_bytes=VMEM_LIMIT,
        ),
    )(y_wide, scale, shift)

    # ---- glue: keep valid (strided) positions, drop channel padding, NCHW --
    out = out_wide.reshape(n, h_dense, w_p, cout_p)
    out = out[:, ::stride, ::stride, :out_c][:, :oh, :ow, :]
    return out.transpose(0, 3, 1, 2)


def _reference(x, weight, bias, gamma, beta, stride, padding, conv_dtype):
    y = lax.conv_general_dilated(
        x.astype(conv_dtype), weight.astype(conv_dtype),
        window_strides=(stride, stride),
        padding=((padding, padding), (padding, padding)),
        dimension_numbers=("NCHW", "OIHW", "NCHW"),
        preferred_element_type=jnp.float32)
    y = y + bias[None, :, None, None]
    mean = jnp.mean(y, axis=(0, 2, 3), keepdims=True)
    var = jnp.mean((y - mean) ** 2, axis=(0, 2, 3), keepdims=True)
    y = (y - mean) * lax.rsqrt(var + EPS)
    y = y * gamma[None, :, None, None] + beta[None, :, None, None]
    return jnp.maximum(y, 0.0)


if __name__ == "__main__":
    # NConv2d(in_c=4, out_c=8, kernel_size=3, stride=1, padding=1, actv=F.relu)
    N, IN_C, OUT_C, H, W = 2, 4, 8, 16, 16
    KH = KW = 3
    STRIDE, PADDING = 1, 1

    key = jax.random.PRNGKey(0)
    kx, kw_, kb = jax.random.split(key, 3)
    x = jax.random.normal(kx, (N, IN_C, H, W), dtype=jnp.float32)

    fan_in = IN_C * KH * KW
    bound = 1.0 / (fan_in ** 0.5)
    weight = jax.random.uniform(kw_, (OUT_C, IN_C, KH, KW), jnp.float32,
                                minval=-bound, maxval=bound)
    bias = jax.random.uniform(kb, (OUT_C,), jnp.float32,
                              minval=-bound, maxval=bound)
    gamma = jnp.ones((OUT_C,), jnp.float32)   # BatchNorm2d default weight
    beta = jnp.zeros((OUT_C,), jnp.float32)   # BatchNorm2d default bias

    out = nconv2d(x, weight, bias, gamma, beta, stride=STRIDE, padding=PADDING)
    out = jax.block_until_ready(out)

    # Tight check vs. a reference whose conv operands are also bf16 (the kernel
    # feeds the MXU bf16 with f32 accumulation); differences are summation order.
    ref_bf16 = _reference(x, weight, bias, gamma, beta, STRIDE, PADDING, jnp.bfloat16)
    if not jnp.allclose(out, ref_bf16, atol=2e-3, rtol=2e-3):
        raise AssertionError(
            "Pallas NConv2d mismatch vs bf16-conv reference, max abs diff = %g"
            % float(jnp.max(jnp.abs(out - ref_bf16))))

    # Loose check vs. the pure-f32 module semantics (only bf16 MXU rounding).
    ref_f32 = _reference(x, weight, bias, gamma, beta, STRIDE, PADDING, jnp.float32)
    if not jnp.allclose(out, ref_f32, atol=5e-2, rtol=5e-2):
        raise AssertionError(
            "Pallas NConv2d mismatch vs f32 reference, max abs diff = %g"
            % float(jnp.max(jnp.abs(out - ref_f32))))

    print("KERNEL_OK")
</pallas_src>

<mosaic_0001>
module attributes {stable_mosaic.version = 11 : i64} {
  func.func @conv_stats_kernel(%arg0: i32, %arg1: memref<1x326x8xf32, #tpu.memory_space<vmem>>, %arg2: memref<9x8x128xbf16, #tpu.memory_space<vmem>>, %arg3: memref<1x288x128xf32, #tpu.memory_space<vmem>>, %arg4: memref<1x8x128xf32, #tpu.memory_space<vmem>>, %arg5: memref<1x8x128xf32, #tpu.memory_space<vmem>>) attributes {dimension_semantics = [#tpu.dimension_semantics<parallel>], iteration_bounds = array<i64: 2>, scalar_prefetch = 0 : i64, scratch_operands = 0 : i64, tpu.core_type = #tpu.core_type<tc>, window_params = [{transform_indices = @transform_0, window_bounds = array<i64: 1, 326, 8>}, {pipeline_mode = #tpu.pipeline_mode<synchronous>, transform_indices = @transform_1, window_bounds = array<i64: 9, 8, 128>}, {transform_indices = @transform_2, window_bounds = array<i64: 1, 288, 128>}, {transform_indices = @transform_3, window_bounds = array<i64: 1, 8, 128>}, {transform_indices = @transform_4, window_bounds = array<i64: 1, 8, 128>}]} {
    %cst = arith.constant 0.000000e+00 : f32
    %0 = vector.broadcast %cst : f32 to vector<288x128xf32>
    %c0 = arith.constant 0 : index
    %c0_0 = arith.constant 0 : index
    %c0_1 = arith.constant 0 : index
    %1 = vector.load %arg1[%c0, %c0_0, %c0_1] : memref<1x326x8xf32, #tpu.memory_space<vmem>>, vector<1x288x8xf32>
    %2 = vector.shape_cast %1 : vector<1x288x8xf32> to vector<288x8xf32>
    %3 = arith.truncf %2 : vector<288x8xf32> to vector<288x8xbf16>
    %c0_2 = arith.constant 0 : index
    %c0_3 = arith.constant 0 : index
    %c0_4 = arith.constant 0 : index
    %4 = vector.load %arg2[%c0_2, %c0_3, %c0_4] : memref<9x8x128xbf16, #tpu.memory_space<vmem>>, vector<1x8x128xbf16>
    %5 = vector.shape_cast %4 : vector<1x8x128xbf16> to vector<8x128xbf16>
    %cst_5 = arith.constant dense<0.000000e+00> : vector<288x128xf32>
    %6 = tpu.matmul %3, %5, %cst_5 {dimension_numbers = #tpu.dot_dimension_numbers<[1], [0], [0], [1], [0, 0, 1, 1], [], []>} : vector<288x8xbf16>, vector<8x128xbf16>, vector<288x128xf32> -> vector<288x128xf32>
    %7 = arith.addf %0, %6 : vector<288x128xf32>
    %c0_6 = arith.constant 0 : index
    %c1 = arith.constant 1 : index
    %c0_7 = arith.constant 0 : index
    %8 = vector.load %arg1[%c0_6, %c1, %c0_7] : memref<1x326x8xf32, #tpu.memory_space<vmem>>, vector<1x288x8xf32>
    %9 = vector.shape_cast %8 : vector<1x288x8xf32> to vector<288x8xf32>
    %10 = arith.truncf %9 : vector<288x8xf32> to vector<288x8xbf16>
    %c1_8 = arith.constant 1 : index
    %c0_9 = arith.constant 0 : index
    %c0_10 = arith.constant 0 : index
    %11 = vector.load %arg2[%c1_8, %c0_9, %c0_10] : memref<9x8x128xbf16, #tpu.memory_space<vmem>>, vector<1x8x128xbf16>
    %12 = vector.shape_cast %11 : vector<1x8x128xbf16> to vector<8x128xbf16>
    %cst_11 = arith.constant dense<0.000000e+00> : vector<288x128xf32>
    %13 = tpu.matmul %10, %12, %cst_11 {dimension_numbers = #tpu.dot_dimension_numbers<[1], [0], [0], [1], [0, 0, 1, 1], [], []>} : vector<288x8xbf16>, vector<8x128xbf16>, vector<288x128xf32> -> vector<288x128xf32>
    %14 = arith.addf %7, %13 : vector<288x128xf32>
    %c0_12 = arith.constant 0 : index
    %c2 = arith.constant 2 : index
    %c0_13 = arith.constant 0 : index
    %15 = vector.load %arg1[%c0_12, %c2, %c0_13] : memref<1x326x8xf32, #tpu.memory_space<vmem>>, vector<1x288x8xf32>
    %16 = vector.shape_cast %15 : vector<1x288x8xf32> to vector<288x8xf32>
    %17 = arith.truncf %16 : vector<288x8xf32> to vector<288x8xbf16>
    %c2_14 = arith.constant 2 : index
    %c0_15 = arith.constant 0 : index
    %c0_16 = arith.constant 0 : index
    %18 = vector.load %arg2[%c2_14, %c0_15, %c0_16] : memref<9x8x128xbf16, #tpu.memory_space<vmem>>, vector<1x8x128xbf16>
    %19 = vector.shape_cast %18 : vector<1x8x128xbf16> to vector<8x128xbf16>
    %cst_17 = arith.constant dense<0.000000e+00> : vector<288x128xf32>
    %20 = tpu.matmul %17, %19, %cst_17 {dimension_numbers = #tpu.dot_dimension_numbers<[1], [0], [0], [1], [0, 0, 1, 1], [], []>} : vector<288x8xbf16>, vector<8x128xbf16>, vector<288x128xf32> -> vector<288x128xf32>
    %21 = arith.addf %14, %20 : vector<288x128xf32>
    %c0_18 = arith.constant 0 : index
    %c18 = arith.constant 18 : index
    %c0_19 = arith.constant 0 : index
    %22 = vector.load %arg1[%c0_18, %c18, %c0_19] : memref<1x326x8xf32, #tpu.memory_space<vmem>>, vector<1x288x8xf32>
    %23 = vector.shape_cast %22 : vector<1x288x8xf32> to vector<288x8xf32>
    %24 = arith.truncf %23 : vector<288x8xf32> to vector<288x8xbf16>
    %c3 = arith.constant 3 : index
    %c0_20 = arith.constant 0 : index
    %c0_21 = arith.constant 0 : index
    %25 = vector.load %arg2[%c3, %c0_20, %c0_21] : memref<9x8x128xbf16, #tpu.memory_space<vmem>>, vector<1x8x128xbf16>
    %26 = vector.shape_cast %25 : vector<1x8x128xbf16> to vector<8x128xbf16>
    %cst_22 = arith.constant dense<0.000000e+00> : vector<288x128xf32>
    %27 = tpu.matmul %24, %26, %cst_22 {dimension_numbers = #tpu.dot_dimension_numbers<[1], [0], [0], [1], [0, 0, 1, 1], [], []>} : vector<288x8xbf16>, vector<8x128xbf16>, vector<288x128xf32> -> vector<288x128xf32>
    %28 = arith.addf %21, %27 : vector<288x128xf32>
    %c0_23 = arith.constant 0 : index
    %c19 = arith.constant 19 : index
    %c0_24 = arith.constant 0 : index
    %29 = vector.load %arg1[%c0_23, %c19, %c0_24] : memref<1x326x8xf32, #tpu.memory_space<vmem>>, vector<1x288x8xf32>
    %30 = vector.shape_cast %29 : vector<1x288x8xf32> to vector<288x8xf32>
    %31 = arith.truncf %30 : vector<288x8xf32> to vector<288x8xbf16>
    %c4 = arith.constant 4 : index
    %c0_25 = arith.constant 0 : index
    %c0_26 = arith.constant 0 : index
    %32 = vector.load %arg2[%c4, %c0_25, %c0_26] : memref<9x8x128xbf16, #tpu.memory_space<vmem>>, vector<1x8x128xbf16>
    %33 = vector.shape_cast %32 : vector<1x8x128xbf16> to vector<8x128xbf16>
    %cst_27 = arith.constant dense<0.000000e+00> : vector<288x128xf32>
    %34 = tpu.matmul %31, %33, %cst_27 {dimension_numbers = #tpu.dot_dimension_numbers<[1], [0], [0], [1], [0, 0, 1, 1], [], []>} : vector<288x8xbf16>, vector<8x128xbf16>, vector<288x128xf32> -> vector<288x128xf32>
    %35 = arith.addf %28, %34 : vector<288x128xf32>
    %c0_28 = arith.constant 0 : index
    %c20 = arith.constant 20 : index
    %c0_29 = arith.constant 0 : index
    %36 = vector.load %arg1[%c0_28, %c20, %c0_29] : memref<1x326x8xf32, #tpu.memory_space<vmem>>, vector<1x288x8xf32>
    %37 = vector.shape_cast %36 : vector<1x288x8xf32> to vector<288x8xf32>
    %38 = arith.truncf %37 : vector<288x8xf32> to vector<288x8xbf16>
    %c5 = arith.constant 5 : index
    %c0_30 = arith.constant 0 : index
    %c0_31 = arith.constant 0 : index
    %39 = vector.load %arg2[%c5, %c0_30, %c0_31] : memref<9x8x128xbf16, #tpu.memory_space<vmem>>, vector<1x8x128xbf16>
    %40 = vector.shape_cast %39 : vector<1x8x128xbf16> to vector<8x128xbf16>
    %cst_32 = arith.constant dense<0.000000e+00> : vector<288x128xf32>
    %41 = tpu.matmul %38, %40, %cst_32 {dimension_numbers = #tpu.dot_dimension_numbers<[1], [0], [0], [1], [0, 0, 1, 1], [], []>} : vector<288x8xbf16>, vector<8x128xbf16>, vector<288x128xf32> -> vector<288x128xf32>
    %42 = arith.addf %35, %41 : vector<288x128xf32>
    %c0_33 = arith.constant 0 : index
    %c36 = arith.constant 36 : index
    %c0_34 = arith.constant 0 : index
    %43 = vector.load %arg1[%c0_33, %c36, %c0_34] : memref<1x326x8xf32, #tpu.memory_space<vmem>>, vector<1x288x8xf32>
    %44 = vector.shape_cast %43 : vector<1x288x8xf32> to vector<288x8xf32>
    %45 = arith.truncf %44 : vector<288x8xf32> to vector<288x8xbf16>
    %c6 = arith.constant 6 : index
    %c0_35 = arith.constant 0 : index
    %c0_36 = arith.constant 0 : index
    %46 = vector.load %arg2[%c6, %c0_35, %c0_36] : memref<9x8x128xbf16, #tpu.memory_space<vmem>>, vector<1x8x128xbf16>
    %47 = vector.shape_cast %46 : vector<1x8x128xbf16> to vector<8x128xbf16>
    %cst_37 = arith.constant dense<0.000000e+00> : vector<288x128xf32>
    %48 = tpu.matmul %45, %47, %cst_37 {dimension_numbers = #tpu.dot_dimension_numbers<[1], [0], [0], [1], [0, 0, 1, 1], [], []>} : vector<288x8xbf16>, vector<8x128xbf16>, vector<288x128xf32> -> vector<288x128xf32>
    %49 = arith.addf %42, %48 : vector<288x128xf32>
    %c0_38 = arith.constant 0 : index
    %c37 = arith.constant 37 : index
    %c0_39 = arith.constant 0 : index
    %50 = vector.load %arg1[%c0_38, %c37, %c0_39] : memref<1x326x8xf32, #tpu.memory_space<vmem>>, vector<1x288x8xf32>
    %51 = vector.shape_cast %50 : vector<1x288x8xf32> to vector<288x8xf32>
    %52 = arith.truncf %51 : vector<288x8xf32> to vector<288x8xbf16>
    %c7 = arith.constant 7 : index
    %c0_40 = arith.constant 0 : index
    %c0_41 = arith.constant 0 : index
    %53 = vector.load %arg2[%c7, %c0_40, %c0_41] : memref<9x8x128xbf16, #tpu.memory_space<vmem>>, vector<1x8x128xbf16>
    %54 = vector.shape_cast %53 : vector<1x8x128xbf16> to vector<8x128xbf16>
    %cst_42 = arith.constant dense<0.000000e+00> : vector<288x128xf32>
    %55 = tpu.matmul %52, %54, %cst_42 {dimension_numbers = #tpu.dot_dimension_numbers<[1], [0], [0], [1], [0, 0, 1, 1], [], []>} : vector<288x8xbf16>, vector<8x128xbf16>, vector<288x128xf32> -> vector<288x128xf32>
    %56 = arith.addf %49, %55 : vector<288x128xf32>
    %c0_43 = arith.constant 0 : index
    %c38 = arith.constant 38 : index
    %c0_44 = arith.constant 0 : index
    %57 = vector.load %arg1[%c0_43, %c38, %c0_44] : memref<1x326x8xf32, #tpu.memory_space<vmem>>, vector<1x288x8xf32>
    %58 = vector.shape_cast %57 : vector<1x288x8xf32> to vector<288x8xf32>
    %59 = arith.truncf %58 : vector<288x8xf32> to vector<288x8xbf16>
    %c8 = arith.constant 8 : index
    %c0_45 = arith.constant 0 : index
    %c0_46 = arith.constant 0 : index
    %60 = vector.load %arg2[%c8, %c0_45, %c0_46] : memref<9x8x128xbf16, #tpu.memory_space<vmem>>, vector<1x8x128xbf16>
    %61 = vector.shape_cast %60 : vector<1x8x128xbf16> to vector<8x128xbf16>
    %cst_47 = arith.constant dense<0.000000e+00> : vector<288x128xf32>
    %62 = tpu.matmul %59, %61, %cst_47 {dimension_numbers = #tpu.dot_dimension_numbers<[1], [0], [0], [1], [0, 0, 1, 1], [], []>} : vector<288x8xbf16>, vector<8x128xbf16>, vector<288x128xf32> -> vector<288x128xf32>
    %63 = arith.addf %56, %62 : vector<288x128xf32>
    %c0_48 = arith.constant 0 : index
    %c0_49 = arith.constant 0 : index
    %c0_50 = arith.constant 0 : index
    %64 = vector.load %arg3[%c0_48, %c0_49, %c0_50] : memref<1x288x128xf32, #tpu.memory_space<vmem>>, vector<1x288x128xf32>
    %65 = vector.shape_cast %64 : vector<1x288x128xf32> to vector<288x128xf32>
    %66 = vector.shape_cast %63 : vector<288x128xf32> to vector<1x288x128xf32>
    tpu.vector_store %arg3[%c0_48, %c0_49, %c0_50], %66 {strides = array<i32>} : memref<1x288x128xf32, #tpu.memory_space<vmem>>, vector<1x288x128xf32>,
    %67 = tpu.iota {dimensions = array<i32: 0>} : vector<288x128xi32>
    %c18_i32 = arith.constant 18 : i32
    %c0_i32 = arith.constant 0 : i32
    %68 = arith.cmpi eq, %c18_i32, %c0_i32 : i32
    %c1_i32 = arith.constant 1 : i32
    %69 = arith.select %68, %c1_i32, %c18_i32 : i32
    %70 = vector.broadcast %69 : i32 to vector<288x128xi32>
    %71 = arith.remsi %67, %70 : vector<288x128xi32>
    %c0_i32_51 = arith.constant 0 : i32
    %72 = vector.broadcast %c0_i32_51 : i32 to vector<288x128xi32>
    %73 = arith.cmpi ne, %71, %72 : vector<288x128xi32>
    %c0_i32_52 = arith.constant 0 : i32
    %74 = vector.broadcast %c0_i32_52 : i32 to vector<288x128xi32>
    %75 = arith.cmpi slt, %71, %74 : vector<288x128xi32>
    %c0_i32_53 = arith.constant 0 : i32
    %76 = arith.cmpi slt, %69, %c0_i32_53 : i32
    %77 = vector.broadcast %76 : i1 to vector<288x128xi1>
    %78 = vector.broadcast %77 : vector<288x128xi1> to vector<288x128xi1>
    %79 = arith.xori %75, %78 : vector<288x128xi1>
    %80 = arith.andi %79, %73 : vector<288x128xi1>
    %81 = vector.broadcast %69 : i32 to vector<288x128xi32>
    %82 = arith.addi %71, %81 : vector<288x128xi32>
    %83 = arith.select %80, %82, %71 : vector<288x128xi1>, vector<288x128xi32>
    %c16_i32 = arith.constant 16 : i32
    %84 = vector.broadcast %c16_i32 : i32 to vector<288x128xi32>
    %85 = arith.cmpi slt, %83, %84 : vector<288x128xi32>
    %cst_54 = arith.constant 0.000000e+00 : f32
    %86 = vector.broadcast %cst_54 : f32 to vector<288x128xf32>
    %87 = arith.select %85, %63, %86 : vector<288x128xi1>, vector<288x128xf32>
    %cst_55 = arith.constant dense<0.000000e+00> : vector<128xf32>
    %88 = vector.multi_reduction <add>, %87, %cst_55 [0] : vector<288x128xf32> to vector<128xf32>
    %89 = vector.shape_cast %88 : vector<128xf32> to vector<1x128xf32>
    %90 = vector.shape_cast %89 : vector<1x128xf32> to vector<1x128xf32>
    %91 = vector.broadcast %90 : vector<1x128xf32> to vector<8x128xf32>
    %c0_56 = arith.constant 0 : index
    %c0_57 = arith.constant 0 : index
    %c0_58 = arith.constant 0 : index
    %92 = vector.load %arg4[%c0_56, %c0_57, %c0_58] : memref<1x8x128xf32, #tpu.memory_space<vmem>>, vector<1x8x128xf32>
    %93 = vector.shape_cast %92 : vector<1x8x128xf32> to vector<8x128xf32>
    %94 = vector.shape_cast %91 : vector<8x128xf32> to vector<1x8x128xf32>
    tpu.vector_store %arg4[%c0_56, %c0_57, %c0_58], %94 {strides = array<i32>} : memref<1x8x128xf32, #tpu.memory_space<vmem>>, vector<1x8x128xf32>,
    %95 = arith.mulf %87, %87 : vector<288x128xf32>
    %cst_59 = arith.constant dense<0.000000e+00> : vector<128xf32>
    %96 = vector.multi_reduction <add>, %95, %cst_59 [0] : vector<288x128xf32> to vector<128xf32>
    %97 = vector.shape_cast %96 : vector<128xf32> to vector<1x128xf32>
    %98 = vector.shape_cast %97 : vector<1x128xf32> to vector<1x128xf32>
    %99 = vector.broadcast %98 : vector<1x128xf32> to vector<8x128xf32>
    %c0_60 = arith.constant 0 : index
    %c0_61 = arith.constant 0 : index
    %c0_62 = arith.constant 0 : index
    %100 = vector.load %arg5[%c0_60, %c0_61, %c0_62] : memref<1x8x128xf32, #tpu.memory_space<vmem>>, vector<1x8x128xf32>
    %101 = vector.shape_cast %100 : vector<1x8x128xf32> to vector<8x128xf32>
    %102 = vector.shape_cast %99 : vector<8x128xf32> to vector<1x8x128xf32>
    tpu.vector_store %arg5[%c0_60, %c0_61, %c0_62], %102 {strides = array<i32>} : memref<1x8x128xf32, #tpu.memory_space<vmem>>, vector<1x8x128xf32>,
    return
  }
  func.func @transform_0(%arg0: i32) -> (i32, i32, i32) {
    %c0_i32 = arith.constant 0 : i32
    %c0_i32_0 = arith.constant 0 : i32
    %c0_i32_1 = arith.constant 0 : i32
    return %arg0, %c0_i32, %c0_i32_0 : i32, i32, i32
  }
  func.func @transform_1(%arg0: i32) -> (i32, i32, i32) {
    %c0_i32 = arith.constant 0 : i32
    %c0_i32_0 = arith.constant 0 : i32
    %c0_i32_1 = arith.constant 0 : i32
    %c0_i32_2 = arith.constant 0 : i32
    return %c0_i32, %c0_i32_0, %c0_i32_1 : i32, i32, i32
  }
  func.func @transform_2(%arg0: i32) -> (i32, i32, i32) {
    %c0_i32 = arith.constant 0 : i32
    %c0_i32_0 = arith.constant 0 : i32
    %c0_i32_1 = arith.constant 0 : i32
    return %arg0, %c0_i32, %c0_i32_0 : i32, i32, i32
  }
  func.func @transform_3(%arg0: i32) -> (i32, i32, i32) {
    %c0_i32 = arith.constant 0 : i32
    %c0_i32_0 = arith.constant 0 : i32
    %c0_i32_1 = arith.constant 0 : i32
    return %arg0, %c0_i32, %c0_i32_0 : i32, i32, i32
  }
  func.func @transform_4(%arg0: i32) -> (i32, i32, i32) {
    %c0_i32 = arith.constant 0 : i32
    %c0_i32_0 = arith.constant 0 : i32
    %c0_i32_1 = arith.constant 0 : i32
    return %arg0, %c0_i32, %c0_i32_0 : i32, i32, i32
  }
}

</mosaic_0001>

<llo_original>
// kernel: tpu_custom_call.1
$region0: #{tpu_custom_call.1}
  #allocation0 [shape = 'u32[]', space=smem, size = 0x4, offset = 0x4, fixed_abs, tag = 'smem constant byte address 0x4 - core index']
  #allocation1 [shape = 'u32[72,128]{1,0:T(1,128)}', space=vmem, size = 0x9000, scoped, tag = 'internal scratch']
  %s0 = inlined_call_operand.vmem [shape: f32[2,326,8], index: 0, kind: input, shape index: {}]
  %s1 = inlined_call_operand.vmem [shape: bf16[9,8,128], index: 1, kind: input, shape index: {}]
  %s2 = inlined_call_operand.hbm [shape: f32[2,288,128], index: 2, kind: output, shape index: {0}]
  %s3 = inlined_call_operand.hbm [shape: f32[2,8,128], index: 3, kind: output, shape index: {1}]
  %s4 = inlined_call_operand.hbm [shape: f32[2,8,128], index: 4, kind: output, shape index: {2}]
  %5 = xla_tuple %s2, %s3, %s4
  %s6 = sld [smem:[#allocation0]]
  $region57: #{tpu_custom_call.1} parent=0
    _
  %s8 = ssub.s32 1, %s6
  %s9 = scalar_select 0, %s8, %s6
  $region1: #{tpu_custom_call.1} parent=0
    #allocation2 [shape = 'u8[294912]{0}', space=vmem, size = 0x48000, scoped, tag = 'output window, operand 0']
    #allocation3 [shape = 's32[2]{0}', space=sflag, size = 0x8, scoped, tag = 'scoped memory for tpu_custom_call.1']
    #allocation4 [shape = 'u8[8192]{0}', space=vmem, size = 0x2000, scoped, tag = 'output window, operand 1']
    #allocation5 [shape = 's32[2]{0}', space=sflag, size = 0x8, scoped, tag = 'scoped memory for tpu_custom_call.1']
    #allocation6 [shape = 'u8[8192]{0}', space=vmem, size = 0x2000, scoped, tag = 'output window, operand 2']
    %10 = vsyncpa [#allocation3], 0
    %s11 = scalar_lea.sflag [#allocation3], 1
    %12 = vsyncpa %s11, 0
    %13 = vsyncpa [#allocation5], 0
    %s14 = scalar_lea.sflag [#allocation5], 1
    %15 = vsyncpa %s14, 0
    loop: start=0, step=1, limit=4
    $region2: #{tpu_custom_call.1} parent=1 // loop_pre_header
      _
    $region3: #{tpu_custom_call.1} parent=1 // loop_header
      %s17 = sphi 0, %s21
      %p18 = scmp.ge.s32.totalorder %s17, 4
      %s27 = sphi 0, %s29
      %s30 = sphi 0, %s27
      %s31 = sphi 0, %s30
      %s47 = sphi 0, %s31
      %s51 = sphi 0, %s51
      %s53 = sphi 0, %s51
      %s54 = sphi 0, %s53
      %s68 = sphi 0, %s54
      %s74 = sphi 0, %s76
      %s77 = sphi 0, %s74
      %s78 = sphi 0, %s77
      %s94 = sphi 0, %s78
      %s100 = sphi 0, %s102
      %s103 = sphi 0, %s100
      %s104 = sphi 0, %s103
      %s120 = sphi 0, %s104
      %s126 = sphi 0, %s128
      %s129 = sphi 0, %s126
      %s130 = sphi 0, %s129
      %s146 = sphi 0, %s130
    $region4: #{tpu_custom_call.1} parent=1 // loop_header_branch
      %20 = sbr.rel (%p18) target = $region8
    $region5: #{tpu_custom_call.1} parent=1 // loop_body
      %s22 = ssub.s32 %s17, 1
      %s23 = ssub.s32 %s17, 2
      %s24 = sadd.s32 %s17, 1
      %s25 = ssub.s32 %s17, %s24
      %p26 = scmp.eq.s32.totalorder %s25, 0
      %s28 = sadd.s32 %s27, 1
      %s29 = scalar_select %p26, %s27, %s28
      %p32 = pneg %p26
      %p33 = scmp.eq.s32.totalorder %s17, 1
      %p34 = por %p32, %p33
      %p35 = scmp.ne.s32.totalorder %s27, %s30
      %p36 = scmp.eq.s32.totalorder %s17, 0
      %p37 = por %p35, %p36
      %p38 = scmp.ne.s32.totalorder %s27, %s30
      %p39 = scmp.eq.s32.totalorder %s22, 1
      %p40 = por %p38, %p39
      %p41 = scmp.ne.s32.totalorder %s30, %s31
      %p42 = scmp.eq.s32.totalorder %s22, 0
      %p43 = por %p41, %p42
      %p44 = scmp.ne.s32.totalorder %s30, %s31
      %p45 = scmp.eq.s32.totalorder %s23, 1
      %p46 = por %p44, %p45
      %p48 = scmp.ne.s32.totalorder %s31, %s47
      %p49 = scmp.eq.s32.totalorder %s23, 0
      %p50 = por %p48, %p49
      %s52 = sadd.s32 %s51, 1
      %p55 = scmp.eq.s32.totalorder %s17, 1
      %p56 = scmp.ne.s32.totalorder %s51, %s53
      %p57 = scmp.eq.s32.totalorder %s17, 0
      %p58 = por %p56, %p57
      %p59 = scmp.ne.s32.totalorder %s51, %s53
      %p60 = scmp.eq.s32.totalorder %s22, 1
      %p61 = por %p59, %p60
      %p62 = scmp.ne.s32.totalorder %s53, %s54
      %p63 = scmp.eq.s32.totalorder %s22, 0
      %p64 = por %p62, %p63
      %p65 = scmp.ne.s32.totalorder %s53, %s54
      %p66 = scmp.eq.s32.totalorder %s23, 1
      %p67 = por %p65, %p66
      %p69 = scmp.ne.s32.totalorder %s54, %s68
      %p70 = scmp.eq.s32.totalorder %s23, 0
      %p71 = por %p69, %p70
      %s72 = ssub.s32 %s17, %s24
      %p73 = scmp.eq.s32.totalorder %s72, 0
      %s75 = sadd.s32 %s74, 1
      %s76 = scalar_select %p73, %s74, %s75
      %p79 = pneg %p73
      %p80 = scmp.eq.s32.totalorder %s17, 1
      %p81 = por %p79, %p80
      %p82 = scmp.ne.s32.totalorder %s74, %s77
      %p83 = scmp.eq.s32.totalorder %s17, 0
      %p84 = por %p82, %p83
      %p85 = scmp.ne.s32.totalorder %s74, %s77
      %p86 = scmp.eq.s32.totalorder %s22, 1
      %p87 = por %p85, %p86
      %p88 = scmp.ne.s32.totalorder %s77, %s78
      %p89 = scmp.eq.s32.totalorder %s22, 0
      %p90 = por %p88, %p89
      %p91 = scmp.ne.s32.totalorder %s77, %s78
      %p92 = scmp.eq.s32.totalorder %s23, 1
      %p93 = por %p91, %p92
      %p95 = scmp.ne.s32.totalorder %s78, %s94
      %p96 = scmp.eq.s32.totalorder %s23, 0
      %p97 = por %p95, %p96
      %s98 = ssub.s32 %s17, %s24
      %p99 = scmp.eq.s32.totalorder %s98, 0
      %s101 = sadd.s32 %s100, 1
      %s102 = scalar_select %p99, %s100, %s101
      %p105 = pneg %p99
      %p106 = scmp.eq.s32.totalorder %s17, 1
      %p107 = por %p105, %p106
      %p108 = scmp.ne.s32.totalorder %s100, %s103
      %p109 = scmp.eq.s32.totalorder %s17, 0
      %p110 = por %p108, %p109
      %p111 = scmp.ne.s32.totalorder %s100, %s103
      %p112 = scmp.eq.s32.totalorder %s22, 1
      %p113 = por %p111, %p112
      %p114 = scmp.ne.s32.totalorder %s103, %s104
      %p115 = scmp.eq.s32.totalorder %s22, 0
      %p116 = por %p114, %p115
      %p117 = scmp.ne.s32.totalorder %s103, %s104
      %p118 = scmp.eq.s32.totalorder %s23, 1
      %p119 = por %p117, %p118
      %p121 = scmp.ne.s32.totalorder %s104, %s120
      %p122 = scmp.eq.s32.totalorder %s23, 0
      %p123 = por %p121, %p122
      %s124 = ssub.s32 %s17, %s24
      %p125 = scmp.eq.s32.totalorder %s124, 0
      %s127 = sadd.s32 %s126, 1
      %s128 = scalar_select %p125, %s126, %s127
      %p131 = pneg %p125
      %p132 = scmp.eq.s32.totalorder %s17, 1
      %p133 = por %p131, %p132
      %p134 = scmp.ne.s32.totalorder %s126, %s129
      %p135 = scmp.eq.s32.totalorder %s17, 0
      %p136 = por %p134, %p135
      %p137 = scmp.ne.s32.totalorder %s126, %s129
      %p138 = scmp.eq.s32.totalorder %s22, 1
      %p139 = por %p137, %p138
      %p140 = scmp.ne.s32.totalorder %s129, %s130
      %p141 = scmp.eq.s32.totalorder %s22, 0
      %p142 = por %p140, %p141
      %p143 = scmp.ne.s32.totalorder %s129, %s130
      %p144 = scmp.eq.s32.totalorder %s23, 1
      %p145 = por %p143, %p144
      %p147 = scmp.ne.s32.totalorder %s130, %s146
      %p148 = scmp.eq.s32.totalorder %s23, 0
      %p149 = por %p147, %p148
      %p150 = scmp.le.s32.totalorder 1, %s17
      %p151 = scmp.lt.s32.totalorder %s17, 3
      %p152 = pnand %p150, %p151
      %p153 = pneg %p152
      // Predicated region
      $region9: #{tpu_custom_call.1} parent=5 // pred_check
        _
      $region10: #{tpu_custom_call.1} parent=5 // pred_check_branch
        %155 = sbr.rel (%p152) target = $region12
      $region11: #{tpu_custom_call.1} parent=5 // pred_region
        %s156 = ssub.s32 %s17, 1
        // Predicated region
        $region13: #{tpu_custom_call.1} parent=11 // pred_check
          %p157 = pneg %p64
        $region14: #{tpu_custom_call.1} parent=11 // pred_check_branch
          %159 = sbr.rel (%p157) target = $region16
        $region15: #{tpu_custom_call.1} parent=11 // pred_region
          _
        $region16: #{tpu_custom_call.1} parent=11 // pred_fallthru
          _
      $region12: #{tpu_custom_call.1} parent=5 // pred_fallthru
        _
      %p160 = scmp.lt.s32.totalorder %s17, 2
      // Predicated region
      $region17: #{tpu_custom_call.1} parent=5 // pred_check
        %p161 = pneg %p160
      $region18: #{tpu_custom_call.1} parent=5 // pred_check_branch
        %163 = sbr.rel (%p161) target = $region20
      $region19: #{tpu_custom_call.1} parent=5 // pred_region
        // Predicated region
        $region21: #{tpu_custom_call.1} parent=19 // pred_check
          %p164 = pneg %p37
        $region22: #{tpu_custom_call.1} parent=19 // pred_check_branch
          %166 = sbr.rel (%p164) target = $region24
        $region23: #{tpu_custom_call.1} parent=19 // pred_region
          %p167 = scmp.lt.s32.totalorder %s17, 1
          %s168 = scalar_select %p167, %s17, 1
          %s169 = smul.addr %s168, 41
          %s170 = smul.addr %s169, 8
          %s171 = scalar_lea.vmem %s0, %s170
        $region24: #{tpu_custom_call.1} parent=19 // pred_fallthru
          _
      $region20: #{tpu_custom_call.1} parent=5 // pred_fallthru
        _
      %p172 = scmp.le.s32.totalorder 1, %s17
      %p173 = scmp.lt.s32.totalorder %s17, 3
      %p174 = pnand %p172, %p173
      %p175 = pneg %p174
      // Predicated region
      $region25: #{tpu_custom_call.1} parent=5 // pred_check
        _
      $region26: #{tpu_custom_call.1} parent=5 // pred_check_branch
        %177 = sbr.rel (%p174) target = $region28
      $region27: #{tpu_custom_call.1} parent=5 // pred_region
        %s178 = ssub.s32 %s17, 1
        %p179 = scmp.lt.s32.totalorder %s22, 1
        %s180 = scalar_select %p179, %s22, 1
        %s181 = smul.addr %s180, 41
        %s182 = smul.addr %s181, 8
        %s183 = scalar_lea.vmem %s0, %s182
        %p184 = pneg %p43
        %p185 = pneg %p40
        %p186 = pneg %p64
        %p187 = pneg %p61
        %p188 = pneg %p90
        %p189 = pneg %p87
        %s190 = sand.u32 %s77, 1
        %s191 = scalar_lea.sflag [#allocation3], %s190
        %s192 = sand.u32 %s77, 1
        %s193 = smul.addr %s192, 288
        %s194 = scalar_lea.vmem [#allocation2], %s193
        %p195 = pneg %p116
        %p196 = pneg %p113
        %s197 = sand.u32 %s22, 1
        %s198 = scalar_lea.sflag [#allocation5], %s197
        %s199 = sand.u32 %s103, 1
        %s200 = smul.addr %s199, 8
        %s201 = scalar_lea.vmem [#allocation4], %s200
        %p202 = pneg %p142
        %p203 = pneg %p139
        %s204 = sand.u32 %s22, 1
        %s205 = scalar_lea.sflag [#allocation5], %s204
        %s206 = sand.u32 %s129, 1
        %s207 = smul.addr %s206, 8
        %s208 = scalar_lea.vmem [#allocation6], %s207
        %p209 = scmp.lt.s32.totalorder %s22, 1
        %s210 = scalar_select %p209, %s22, 1
        %s211 = smul.addr %s210, 41
        %s212 = smul.addr %s211, 8
        %s213 = scalar_lea.vmem %s0, %s212
        %v215 = vld [vmem:[%s213] sm:$0xff]
        %v216 = vld [vmem:[%s213 + $0x8] sm:$0xff]
        %v217 = vld [vmem:[%s213 + $0x10] sm:$0xff]
        %v218 = vld [vmem:[%s213 + $0x18] sm:$0xff]
        %v219 = vld [vmem:[%s213 + $0x20] sm:$0xff]
        %v220 = vld [vmem:[%s213 + $0x28] sm:$0xff]
        %v221 = vld [vmem:[%s213 + $0x30] sm:$0xff]
        %v222 = vld [vmem:[%s213 + $0x38] sm:$0xff]
        %v223 = vld [vmem:[%s213 + $0x40] sm:$0xff]
        %v224 = vld [vmem:[%s213 + $0x48] sm:$0xff]
        %v225 = vld [vmem:[%s213 + $0x50] sm:$0xff]
        %v226 = vld [vmem:[%s213 + $0x58] sm:$0xff]
        %v227 = vld [vmem:[%s213 + $0x60] sm:$0xff]
        %v228 = vld [vmem:[%s213 + $0x68] sm:$0xff]
        %v229 = vld [vmem:[%s213 + $0x70] sm:$0xff]
        %v230 = vld [vmem:[%s213 + $0x78] sm:$0xff]
        %v231 = vld [vmem:[%s213 + $0x80] sm:$0xff]
        %v232 = vld [vmem:[%s213 + $0x88] sm:$0xff]
        %v233 = vld [vmem:[%s213 + $0x90] sm:$0xff]
        %v234 = vld [vmem:[%s213 + $0x98] sm:$0xff]
        %v235 = vld [vmem:[%s213 + $0xa0] sm:$0xff]
        %v236 = vld [vmem:[%s213 + $0xa8] sm:$0xff]
        %v237 = vld [vmem:[%s213 + $0xb0] sm:$0xff]
        %v238 = vld [vmem:[%s213 + $0xb8] sm:$0xff]
        %v239 = vld [vmem:[%s213 + $0xc0] sm:$0xff]
        %v240 = vld [vmem:[%s213 + $0xc8] sm:$0xff]
        %v241 = vld [vmem:[%s213 + $0xd0] sm:$0xff]
        %v242 = vld [vmem:[%s213 + $0xd8] sm:$0xff]
        %v243 = vld [vmem:[%s213 + $0xe0] sm:$0xff]
        %v244 = vld [vmem:[%s213 + $0xe8] sm:$0xff]
        %v245 = vld [vmem:[%s213 + $0xf0] sm:$0xff]
        %v246 = vld [vmem:[%s213 + $0xf8] sm:$0xff]
        %v247 = vld [vmem:[%s213 + $0x100] sm:$0xff]
        %v248 = vld [vmem:[%s213 + $0x108] sm:$0xff]
        %v249 = vld [vmem:[%s213 + $0x110] sm:$0xff]
        %v250 = vld [vmem:[%s213 + $0x118] sm:$0xff]
        %v251 = vpack.c.bf16 %v216, %v215
        %v252 = vpack.c.bf16 %v218, %v217
        %v253 = vpack.c.bf16 %v220, %v219
        %v254 = vpack.c.bf16 %v222, %v221
        %v255 = vpack.c.bf16 %v224, %v223
        %v256 = vpack.c.bf16 %v226, %v225
        %v257 = vpack.c.bf16 %v228, %v227
        %v258 = vpack.c.bf16 %v230, %v229
        %v259 = vpack.c.bf16 %v232, %v231
        %v260 = vpack.c.bf16 %v234, %v233
        %v261 = vpack.c.bf16 %v236, %v235
        %v262 = vpack.c.bf16 %v238, %v237
        %v263 = vpack.c.bf16 %v240, %v239
        %v264 = vpack.c.bf16 %v242, %v241
        %v265 = vpack.c.bf16 %v244, %v243
        %v266 = vpack.c.bf16 %v246, %v245
        %v267 = vpack.c.bf16 %v248, %v247
        %v268 = vpack.c.bf16 %v250, %v249
        %v269 = vld [vmem:[%s1] sm:$0xf]
        %v270 = vld [vmem:[%s213 + $0x1] sm:$0xff]
        %v271 = vld [vmem:[%s213 + $0x9] sm:$0xff]
        %v272 = vld [vmem:[%s213 + $0x11] sm:$0xff]
        %v273 = vld [vmem:[%s213 + $0x19] sm:$0xff]
        %v274 = vld [vmem:[%s213 + $0x21] sm:$0xff]
        %v275 = vld [vmem:[%s213 + $0x29] sm:$0xff]
        %v276 = vld [vmem:[%s213 + $0x31] sm:$0xff]
        %v277 = vld [vmem:[%s213 + $0x39] sm:$0xff]
        %v278 = vld [vmem:[%s213 + $0x41] sm:$0xff]
        %v279 = vld [vmem:[%s213 + $0x49] sm:$0xff]
        %v280 = vld [vmem:[%s213 + $0x51] sm:$0xff]
        %v281 = vld [vmem:[%s213 + $0x59] sm:$0xff]
        %v282 = vld [vmem:[%s213 + $0x61] sm:$0xff]
        %v283 = vld [vmem:[%s213 + $0x69] sm:$0xff]
        %v284 = vld [vmem:[%s213 + $0x71] sm:$0xff]
        %v285 = vld [vmem:[%s213 + $0x79] sm:$0xff]
        %v286 = vld [vmem:[%s213 + $0x81] sm:$0xff]
        %v287 = vld [vmem:[%s213 + $0x89] sm:$0xff]
        %v288 = vld [vmem:[%s213 + $0x91] sm:$0xff]
        %v289 = vld [vmem:[%s213 + $0x99] sm:$0xff]
        %v290 = vld [vmem:[%s213 + $0xa1] sm:$0xff]
        %v291 = vld [vmem:[%s213 + $0xa9] sm:$0xff]
        %v292 = vld [vmem:[%s213 + $0xb1] sm:$0xff]
        %v293 = vld [vmem:[%s213 + $0xb9] sm:$0xff]
        %v294 = vld [vmem:[%s213 + $0xc1] sm:$0xff]
        %v295 = vld [vmem:[%s213 + $0xc9] sm:$0xff]
        %v296 = vld [vmem:[%s213 + $0xd1] sm:$0xff]
        %v297 = vld [vmem:[%s213 + $0xd9] sm:$0xff]
        %v298 = vld [vmem:[%s213 + $0xe1] sm:$0xff]
        %v299 = vld [vmem:[%s213 + $0xe9] sm:$0xff]
        %v300 = vld [vmem:[%s213 + $0xf1] sm:$0xff]
        %v301 = vld [vmem:[%s213 + $0xf9] sm:$0xff]
        %v302 = vld [vmem:[%s213 + $0x101] sm:$0xff]
        %v303 = vld [vmem:[%s213 + $0x109] sm:$0xff]
        %v304 = vld [vmem:[%s213 + $0x111] sm:$0xff]
        %v305 = vld [vmem:[%s213 + $0x119] sm:$0xff]
        %v306 = vpack.c.bf16 %v271, %v270
        %v307 = vpack.c.bf16 %v273, %v272
        %v308 = vpack.c.bf16 %v275, %v274
        %v309 = vpack.c.bf16 %v277, %v276
        %v310 = vpack.c.bf16 %v279, %v278
        %v311 = vpack.c.bf16 %v281, %v280
        %v312 = vpack.c.bf16 %v283, %v282
        %v313 = vpack.c.bf16 %v285, %v284
        %v314 = vpack.c.bf16 %v287, %v286
        %v315 = vpack.c.bf16 %v289, %v288
        %v316 = vpack.c.bf16 %v291, %v290
        %v317 = vpack.c.bf16 %v293, %v292
        %v318 = vpack.c.bf16 %v295, %v294
        %v319 = vpack.c.bf16 %v297, %v296
        %v320 = vpack.c.bf16 %v299, %v298
        %v321 = vpack.c.bf16 %v301, %v300
        %v322 = vpack.c.bf16 %v303, %v302
        %v323 = vpack.c.bf16 %v305, %v304
        %s324 = scalar_lea.vmem %s1, 4
        %v325 = vld [vmem:[%s324] sm:$0xf]
        %vm326 = vcmask 64512
        %v328 = vsel %vm326, %v306, 0
        %v331 = vsel %vm326, %v307, 0
        %v334 = vsel %vm326, %v308, 0
        %v337 = vsel %vm326, %v309, 0
        %v340 = vsel %vm326, %v310, 0
        %v343 = vsel %vm326, %v311, 0
        %v346 = vsel %vm326, %v312, 0
        %v349 = vsel %vm326, %v313, 0
        %v352 = vsel %vm326, %v314, 0
        %v355 = vsel %vm326, %v315, 0
        %v358 = vsel %vm326, %v316, 0
        %v361 = vsel %vm326, %v317, 0
        %v364 = vsel %vm326, %v318, 0
        %v367 = vsel %vm326, %v319, 0
        %v370 = vsel %vm326, %v320, 0
        %v373 = vsel %vm326, %v321, 0
        %v376 = vsel %vm326, %v322, 0
        %v379 = vsel %vm326, %v323, 0
        %vm381 = vcmask 1043456
        %v383 = vsel %vm381, %v325, 0
        %385 = vmatpush.bf16.msra.mxu0 0
        %386 = vmatpush.bf16.msra.mxu0 0
        %387 = vmatpush.bf16.msra.mxu0 0
        %388 = vmatpush.bf16.msra.mxu0 0
        %389 = vmatpush.bf16.msra.mxu0 0
        %390 = vmatpush.bf16.msra.mxu0 0
        %391 = vmatpush.bf16.msra.mxu0 0
        %392 = vmatpush.bf16.msra.mxu0 %v383
        %393 = vmatmul.bf16.gmra.mxu0 %v328
        %v394 = vpop.f32.mrf.mxu0
        %v395 = vadd.f32 0.0, %v394
        %v396 = vpop.f32.mrf.mxu0
        %v397 = vadd.f32 0.0, %v396
        %398 = vmatmul.bf16.gmra.mxu0 %v331
        %v399 = vpop.f32.mrf.mxu0
        %v400 = vadd.f32 0.0, %v399
        %v401 = vpop.f32.mrf.mxu0
        %v402 = vadd.f32 0.0, %v401
        %403 = vmatmul.bf16.gmra.mxu0 %v334
        %v404 = vpop.f32.mrf.mxu0
        %v405 = vadd.f32 0.0, %v404
        %v406 = vpop.f32.mrf.mxu0
        %v407 = vadd.f32 0.0, %v406
        %408 = vmatmul.bf16.gmra.mxu0 %v337
        %v409 = vpop.f32.mrf.mxu0
        %v410 = vadd.f32 0.0, %v409
        %v411 = vpop.f32.mrf.mxu0
        %v412 = vadd.f32 0.0, %v411
        %413 = vmatmul.bf16.gmra.mxu0 %v340
        %v414 = vpop.f32.mrf.mxu0
        %v415 = vadd.f32 0.0, %v414
        %v416 = vpop.f32.mrf.mxu0
        %v417 = vadd.f32 0.0, %v416
        %418 = vmatmul.bf16.gmra.mxu0 %v343
        %v419 = vpop.f32.mrf.mxu0
        %v420 = vadd.f32 0.0, %v419
        %v421 = vpop.f32.mrf.mxu0
        %v422 = vadd.f32 0.0, %v421
        %423 = vmatmul.bf16.gmra.mxu0 %v346
        %v424 = vpop.f32.mrf.mxu0
        %v425 = vadd.f32 0.0, %v424
        %v426 = vpop.f32.mrf.mxu0
        %v427 = vadd.f32 0.0, %v426
        %428 = vmatmul.bf16.gmra.mxu0 %v349
        %v429 = vpop.f32.mrf.mxu0
        %v430 = vadd.f32 0.0, %v429
        %v431 = vpop.f32.mrf.mxu0
        %v432 = vadd.f32 0.0, %v431
        %433 = vmatmul.bf16.gmra.mxu0 %v352
        %v434 = vpop.f32.mrf.mxu0
        %v435 = vadd.f32 0.0, %v434
        %v436 = vpop.f32.mrf.mxu0
        %v437 = vadd.f32 0.0, %v436
        %438 = vmatmul.bf16.gmra.mxu0 %v355
        %v439 = vpop.f32.mrf.mxu0
        %v440 = vadd.f32 0.0, %v439
        %v441 = vpop.f32.mrf.mxu0
        %v442 = vadd.f32 0.0, %v441
        %443 = vmatmul.bf16.gmra.mxu0 %v358
        %v444 = vpop.f32.mrf.mxu0
        %v445 = vadd.f32 0.0, %v444
        %v446 = vpop.f32.mrf.mxu0
        %v447 = vadd.f32 0.0, %v446
        %448 = vmatmul.bf16.gmra.mxu0 %v361
        %v449 = vpop.f32.mrf.mxu0
        %v450 = vadd.f32 0.0, %v449
        %v451 = vpop.f32.mrf.mxu0
        %v452 = vadd.f32 0.0, %v451
        %453 = vmatmul.bf16.gmra.mxu0 %v364
        %v454 = vpop.f32.mrf.mxu0
        %v455 = vadd.f32 0.0, %v454
        %v456 = vpop.f32.mrf.mxu0
        %v457 = vadd.f32 0.0, %v456
        %458 = vmatmul.bf16.gmra.mxu0 %v367
        %v459 = vpop.f32.mrf.mxu0
        %v460 = vadd.f32 0.0, %v459
        %v461 = vpop.f32.mrf.mxu0
        %v462 = vadd.f32 0.0, %v461
        %463 = vmatmul.bf16.gmra.mxu0 %v370
        %v464 = vpop.f32.mrf.mxu0
        %v465 = vadd.f32 0.0, %v464
        %v466 = vpop.f32.mrf.mxu0
        %v467 = vadd.f32 0.0, %v466
        %468 = vmatmul.bf16.gmra.mxu0 %v373
        %v469 = vpop.f32.mrf.mxu0
        %v470 = vadd.f32 0.0, %v469
        %v471 = vpop.f32.mrf.mxu0
        %v472 = vadd.f32 0.0, %v471
        %473 = vmatmul.bf16.gmra.mxu0 %v376
        %v474 = vpop.f32.mrf.mxu0
        %v475 = vadd.f32 0.0, %v474
        %v476 = vpop.f32.mrf.mxu0
        %v477 = vadd.f32 0.0, %v476
        %478 = vmatmul.bf16.gmra.mxu0 %v379
        %v479 = vpop.f32.mrf.mxu0
        %v480 = vadd.f32 0.0, %v479
        %v481 = vpop.f32.mrf.mxu0
        %v482 = vadd.f32 0.0, %v481
        %483 = vdwg.mxu0
        %v485 = vsel %vm326, %v251, 0
        %v488 = vsel %vm326, %v252, 0
        %v491 = vsel %vm326, %v253, 0
        %v494 = vsel %vm326, %v254, 0
        %v497 = vsel %vm326, %v255, 0
        %v500 = vsel %vm326, %v256, 0
        %v503 = vsel %vm326, %v257, 0
        %v506 = vsel %vm326, %v258, 0
        %v509 = vsel %vm326, %v259, 0
        %v512 = vsel %vm326, %v260, 0
        %v515 = vsel %vm326, %v261, 0
        %v518 = vsel %vm326, %v262, 0
        %v521 = vsel %vm326, %v263, 0
        %v524 = vsel %vm326, %v264, 0
        %v527 = vsel %vm326, %v265, 0
        %v530 = vsel %vm326, %v266, 0
        %v533 = vsel %vm326, %v267, 0
        %v536 = vsel %vm326, %v268, 0
        %v539 = vsel %vm381, %v269, 0
        %541 = vmatpush.bf16.msra.mxu0 0
        %542 = vmatpush.bf16.msra.mxu0 0
        %543 = vmatpush.bf16.msra.mxu0 0
        %544 = vmatpush.bf16.msra.mxu0 0
        %545 = vmatpush.bf16.msra.mxu0 0
        %546 = vmatpush.bf16.msra.mxu0 0
        %547 = vmatpush.bf16.msra.mxu0 0
        %548 = vmatpush.bf16.msra.mxu0 %v539
        %549 = vmatmul.bf16.gmra.mxu0 %v485
        %v550 = vpop.f32.mrf.mxu0
        %v551 = vadd.f32 %v395, %v550
        %v552 = vpop.f32.mrf.mxu0
        %v553 = vadd.f32 %v397, %v552
        %554 = vmatmul.bf16.gmra.mxu0 %v488
        %v555 = vpop.f32.mrf.mxu0
        %v556 = vadd.f32 %v400, %v555
        %v557 = vpop.f32.mrf.mxu0
        %v558 = vadd.f32 %v402, %v557
        %559 = vmatmul.bf16.gmra.mxu0 %v491
        %v560 = vpop.f32.mrf.mxu0
        %v561 = vadd.f32 %v405, %v560
        %v562 = vpop.f32.mrf.mxu0
        %v563 = vadd.f32 %v407, %v562
        %564 = vmatmul.bf16.gmra.mxu0 %v494
        %v565 = vpop.f32.mrf.mxu0
        %v566 = vadd.f32 %v410, %v565
        %v567 = vpop.f32.mrf.mxu0
        %v568 = vadd.f32 %v412, %v567
        %569 = vmatmul.bf16.gmra.mxu0 %v497
        %v570 = vpop.f32.mrf.mxu0
        %v571 = vadd.f32 %v415, %v570
        %v572 = vpop.f32.mrf.mxu0
        %v573 = vadd.f32 %v417, %v572
        %574 = vmatmul.bf16.gmra.mxu0 %v500
        %v575 = vpop.f32.mrf.mxu0
        %v576 = vadd.f32 %v420, %v575
        %v577 = vpop.f32.mrf.mxu0
        %v578 = vadd.f32 %v422, %v577
        %579 = vmatmul.bf16.gmra.mxu0 %v503
        %v580 = vpop.f32.mrf.mxu0
        %v581 = vadd.f32 %v425, %v580
        %v582 = vpop.f32.mrf.mxu0
        %v583 = vadd.f32 %v427, %v582
        %584 = vmatmul.bf16.gmra.mxu0 %v506
        %v585 = vpop.f32.mrf.mxu0
        %v586 = vadd.f32 %v430, %v585
        %v587 = vpop.f32.mrf.mxu0
        %v588 = vadd.f32 %v432, %v587
        %589 = vmatmul.bf16.gmra.mxu0 %v509
        %v590 = vpop.f32.mrf.mxu0
        %v591 = vadd.f32 %v435, %v590
        %v592 = vpop.f32.mrf.mxu0
        %v593 = vadd.f32 %v437, %v592
        %594 = vmatmul.bf16.gmra.mxu0 %v512
        %v595 = vpop.f32.mrf.mxu0
        %v596 = vadd.f32 %v440, %v595
        %v597 = vpop.f32.mrf.mxu0
        %v598 = vadd.f32 %v442, %v597
        %599 = vmatmul.bf16.gmra.mxu0 %v515
        %v600 = vpop.f32.mrf.mxu0
        %v601 = vadd.f32 %v445, %v600
        %v602 = vpop.f32.mrf.mxu0
        %v603 = vadd.f32 %v447, %v602
        %604 = vmatmul.bf16.gmra.mxu0 %v518
        %v605 = vpop.f32.mrf.mxu0
        %v606 = vadd.f32 %v450, %v605
        %v607 = vpop.f32.mrf.mxu0
        %v608 = vadd.f32 %v452, %v607
        %609 = vmatmul.bf16.gmra.mxu0 %v521
        %v610 = vpop.f32.mrf.mxu0
        %v611 = vadd.f32 %v455, %v610
        %v612 = vpop.f32.mrf.mxu0
        %v613 = vadd.f32 %v457, %v612
        %614 = vmatmul.bf16.gmra.mxu0 %v524
        %v615 = vpop.f32.mrf.mxu0
        %v616 = vadd.f32 %v460, %v615
        %v617 = vpop.f32.mrf.mxu0
        %v618 = vadd.f32 %v462, %v617
        %619 = vmatmul.bf16.gmra.mxu0 %v527
        %v620 = vpop.f32.mrf.mxu0
        %v621 = vadd.f32 %v465, %v620
        %v622 = vpop.f32.mrf.mxu0
        %v623 = vadd.f32 %v467, %v622
        %624 = vmatmul.bf16.gmra.mxu0 %v530
        %v625 = vpop.f32.mrf.mxu0
        %v626 = vadd.f32 %v470, %v625
        %v627 = vpop.f32.mrf.mxu0
        %v628 = vadd.f32 %v472, %v627
        %629 = vmatmul.bf16.gmra.mxu0 %v533
        %v630 = vpop.f32.mrf.mxu0
        %v631 = vadd.f32 %v475, %v630
        %v632 = vpop.f32.mrf.mxu0
        %v633 = vadd.f32 %v477, %v632
        %634 = vmatmul.bf16.gmra.mxu0 %v536
        %v635 = vpop.f32.mrf.mxu0
        %v636 = vadd.f32 %v480, %v635
        %v637 = vpop.f32.mrf.mxu0
        %v638 = vadd.f32 %v482, %v637
        %639 = vdwg.mxu0
        %v640 = vld [vmem:[%s213 + $0x2] sm:$0xff]
        %v641 = vld [vmem:[%s213 + $0xa] sm:$0xff]
        %v642 = vld [vmem:[%s213 + $0x12] sm:$0xff]
        %v643 = vld [vmem:[%s213 + $0x1a] sm:$0xff]
        %v644 = vld [vmem:[%s213 + $0x22] sm:$0xff]
        %v645 = vld [vmem:[%s213 + $0x2a] sm:$0xff]
        %v646 = vld [vmem:[%s213 + $0x32] sm:$0xff]
        %v647 = vld [vmem:[%s213 + $0x3a] sm:$0xff]
        %v648 = vld [vmem:[%s213 + $0x42] sm:$0xff]
        %v649 = vld [vmem:[%s213 + $0x4a] sm:$0xff]
        %v650 = vld [vmem:[%s213 + $0x52] sm:$0xff]
        %v651 = vld [vmem:[%s213 + $0x5a] sm:$0xff]
        %v652 = vld [vmem:[%s213 + $0x62] sm:$0xff]
        %v653 = vld [vmem:[%s213 + $0x6a] sm:$0xff]
        %v654 = vld [vmem:[%s213 + $0x72] sm:$0xff]
        %v655 = vld [vmem:[%s213 + $0x7a] sm:$0xff]
        %v656 = vld [vmem:[%s213 + $0x82] sm:$0xff]
        %v657 = vld [vmem:[%s213 + $0x8a] sm:$0xff]
        %v658 = vld [vmem:[%s213 + $0x92] sm:$0xff]
        %v659 = vld [vmem:[%s213 + $0x9a] sm:$0xff]
        %v660 = vld [vmem:[%s213 + $0xa2] sm:$0xff]
        %v661 = vld [vmem:[%s213 + $0xaa] sm:$0xff]
        %v662 = vld [vmem:[%s213 + $0xb2] sm:$0xff]
        %v663 = vld [vmem:[%s213 + $0xba] sm:$0xff]
        %v664 = vld [vmem:[%s213 + $0xc2] sm:$0xff]
        %v665 = vld [vmem:[%s213 + $0xca] sm:$0xff]
        %v666 = vld [vmem:[%s213 + $0xd2] sm:$0xff]
        %v667 = vld [vmem:[%s213 + $0xda] sm:$0xff]
        %v668 = vld [vmem:[%s213 + $0xe2] sm:$0xff]
        %v669 = vld [vmem:[%s213 + $0xea] sm:$0xff]
        %v670 = vld [vmem:[%s213 + $0xf2] sm:$0xff]
        %v671 = vld [vmem:[%s213 + $0xfa] sm:$0xff]
        %v672 = vld [vmem:[%s213 + $0x102] sm:$0xff]
        %v673 = vld [vmem:[%s213 + $0x10a] sm:$0xff]
        %v674 = vld [vmem:[%s213 + $0x112] sm:$0xff]
        %v675 = vld [vmem:[%s213 + $0x11a] sm:$0xff]
        %v676 = vpack.c.bf16 %v641, %v640
        %v677 = vpack.c.bf16 %v643, %v642
        %v678 = vpack.c.bf16 %v645, %v644
        %v679 = vpack.c.bf16 %v647, %v646
        %v680 = vpack.c.bf16 %v649, %v648
        %v681 = vpack.c.bf16 %v651, %v650
        %v682 = vpack.c.bf16 %v653, %v652
        %v683 = vpack.c.bf16 %v655, %v654
        %v684 = vpack.c.bf16 %v657, %v656
        %v685 = vpack.c.bf16 %v659, %v658
        %v686 = vpack.c.bf16 %v661, %v660
        %v687 = vpack.c.bf16 %v663, %v662
        %v688 = vpack.c.bf16 %v665, %v664
        %v689 = vpack.c.bf16 %v667, %v666
        %v690 = vpack.c.bf16 %v669, %v668
        %v691 = vpack.c.bf16 %v671, %v670
        %v692 = vpack.c.bf16 %v673, %v672
        %v693 = vpack.c.bf16 %v675, %v674
        %s694 = scalar_lea.vmem %s1, 8
        %v695 = vld [vmem:[%s694] sm:$0xf]
        %v697 = vsel %vm326, %v676, 0
        %v700 = vsel %vm326, %v677, 0
        %v703 = vsel %vm326, %v678, 0
        %v706 = vsel %vm326, %v679, 0
        %v709 = vsel %vm326, %v680, 0
        %v712 = vsel %vm326, %v681, 0
        %v715 = vsel %vm326, %v682, 0
        %v718 = vsel %vm326, %v683, 0
        %v721 = vsel %vm326, %v684, 0
        %v724 = vsel %vm326, %v685, 0
        %v727 = vsel %vm326, %v686, 0
        %v730 = vsel %vm326, %v687, 0
        %v733 = vsel %vm326, %v688, 0
        %v736 = vsel %vm326, %v689, 0
        %v739 = vsel %vm326, %v690, 0
        %v742 = vsel %vm326, %v691, 0
        %v745 = vsel %vm326, %v692, 0
        %v748 = vsel %vm326, %v693, 0
        %v751 = vsel %vm381, %v695, 0
        %753 = vmatpush.bf16.msra.mxu0 0
        %754 = vmatpush.bf16.msra.mxu0 0
        %755 = vmatpush.bf16.msra.mxu0 0
        %756 = vmatpush.bf16.msra.mxu0 0
        %757 = vmatpush.bf16.msra.mxu0 0
        %758 = vmatpush.bf16.msra.mxu0 0
        %759 = vmatpush.bf16.msra.mxu0 0
        %760 = vmatpush.bf16.msra.mxu0 %v751
        %761 = vmatmul.bf16.gmra.mxu0 %v697
        %v762 = vpop.f32.mrf.mxu0
        %v763 = vadd.f32 0.0, %v762
        %v764 = vpop.f32.mrf.mxu0
        %v765 = vadd.f32 0.0, %v764
        %766 = vmatmul.bf16.gmra.mxu0 %v700
        %v767 = vpop.f32.mrf.mxu0
        %v768 = vadd.f32 0.0, %v767
        %v769 = vpop.f32.mrf.mxu0
        %v770 = vadd.f32 0.0, %v769
        %771 = vmatmul.bf16.gmra.mxu0 %v703
        %v772 = vpop.f32.mrf.mxu0
        %v773 = vadd.f32 0.0, %v772
        %v774 = vpop.f32.mrf.mxu0
        %v775 = vadd.f32 0.0, %v774
        %776 = vmatmul.bf16.gmra.mxu0 %v706
        %v777 = vpop.f32.mrf.mxu0
        %v778 = vadd.f32 0.0, %v777
        %v779 = vpop.f32.mrf.mxu0
        %v780 = vadd.f32 0.0, %v779
        %781 = vmatmul.bf16.gmra.mxu0 %v709
        %v782 = vpop.f32.mrf.mxu0
        %v783 = vadd.f32 0.0, %v782
        %v784 = vpop.f32.mrf.mxu0
        %v785 = vadd.f32 0.0, %v784
        %786 = vmatmul.bf16.gmra.mxu0 %v712
        %v787 = vpop.f32.mrf.mxu0
        %v788 = vadd.f32 0.0, %v787
        %v789 = vpop.f32.mrf.mxu0
        %v790 = vadd.f32 0.0, %v789
        %791 = vmatmul.bf16.gmra.mxu0 %v715
        %v792 = vpop.f32.mrf.mxu0
        %v793 = vadd.f32 0.0, %v792
        %v794 = vpop.f32.mrf.mxu0
        %v795 = vadd.f32 0.0, %v794
        %796 = vmatmul.bf16.gmra.mxu0 %v718
        %v797 = vpop.f32.mrf.mxu0
        %v798 = vadd.f32 0.0, %v797
        %v799 = vpop.f32.mrf.mxu0
        %v800 = vadd.f32 0.0, %v799
        %801 = vmatmul.bf16.gmra.mxu0 %v721
        %v802 = vpop.f32.mrf.mxu0
        %v803 = vadd.f32 0.0, %v802
        %v804 = vpop.f32.mrf.mxu0
        %v805 = vadd.f32 0.0, %v804
        %806 = vmatmul.bf16.gmra.mxu0 %v724
        %v807 = vpop.f32.mrf.mxu0
        %v808 = vadd.f32 0.0, %v807
        %v809 = vpop.f32.mrf.mxu0
        %v810 = vadd.f32 0.0, %v809
        %811 = vmatmul.bf16.gmra.mxu0 %v727
        %v812 = vpop.f32.mrf.mxu0
        %v813 = vadd.f32 0.0, %v812
        %v814 = vpop.f32.mrf.mxu0
        %v815 = vadd.f32 0.0, %v814
        %816 = vmatmul.bf16.gmra.mxu0 %v730
        %v817 = vpop.f32.mrf.mxu0
        %v818 = vadd.f32 0.0, %v817
        %v819 = vpop.f32.mrf.mxu0
        %v820 = vadd.f32 0.0, %v819
        %821 = vmatmul.bf16.gmra.mxu0 %v733
        %v822 = vpop.f32.mrf.mxu0
        %v823 = vadd.f32 0.0, %v822
        %v824 = vpop.f32.mrf.mxu0
        %v825 = vadd.f32 0.0, %v824
        %826 = vmatmul.bf16.gmra.mxu0 %v736
        %v827 = vpop.f32.mrf.mxu0
        %v828 = vadd.f32 0.0, %v827
        %v829 = vpop.f32.mrf.mxu0
        %v830 = vadd.f32 0.0, %v829
        %831 = vmatmul.bf16.gmra.mxu0 %v739
        %v832 = vpop.f32.mrf.mxu0
        %v833 = vadd.f32 0.0, %v832
        %v834 = vpop.f32.mrf.mxu0
        %v835 = vadd.f32 0.0, %v834
        %836 = vmatmul.bf16.gmra.mxu0 %v742
        %v837 = vpop.f32.mrf.mxu0
        %v838 = vadd.f32 0.0, %v837
        %v839 = vpop.f32.mrf.mxu0
        %v840 = vadd.f32 0.0, %v839
        %841 = vmatmul.bf16.gmra.mxu0 %v745
        %v842 = vpop.f32.mrf.mxu0
        %v843 = vadd.f32 0.0, %v842
        %v844 = vpop.f32.mrf.mxu0
        %v845 = vadd.f32 0.0, %v844
        %846 = vmatmul.bf16.gmra.mxu0 %v748
        %v847 = vpop.f32.mrf.mxu0
        %v848 = vadd.f32 0.0, %v847
        %v849 = vpop.f32.mrf.mxu0
        %v850 = vadd.f32 0.0, %v849
        %851 = vdwg.mxu0
        %v852 = vadd.f32 %v551, %v763
        %v853 = vadd.f32 %v553, %v765
        %v854 = vadd.f32 %v556, %v768
        %v855 = vadd.f32 %v558, %v770
        %v856 = vadd.f32 %v561, %v773
        %v857 = vadd.f32 %v563, %v775
        %v858 = vadd.f32 %v566, %v778
        %v859 = vadd.f32 %v568, %v780
        %v860 = vadd.f32 %v571, %v783
        %v861 = vadd.f32 %v573, %v785
        %v862 = vadd.f32 %v576, %v788
        %v863 = vadd.f32 %v578, %v790
        %v864 = vadd.f32 %v581, %v793
        %v865 = vadd.f32 %v583, %v795
        %v866 = vadd.f32 %v586, %v798
        %v867 = vadd.f32 %v588, %v800
        %v868 = vadd.f32 %v591, %v803
        %v869 = vadd.f32 %v593, %v805
        %v870 = vadd.f32 %v596, %v808
        %v871 = vadd.f32 %v598, %v810
        %v872 = vadd.f32 %v601, %v813
        %v873 = vadd.f32 %v603, %v815
        %v874 = vadd.f32 %v606, %v818
        %v875 = vadd.f32 %v608, %v820
        %v876 = vadd.f32 %v611, %v823
        %v877 = vadd.f32 %v613, %v825
        %v878 = vadd.f32 %v616, %v828
        %v879 = vadd.f32 %v618, %v830
        %v880 = vadd.f32 %v621, %v833
        %v881 = vadd.f32 %v623, %v835
        %v882 = vadd.f32 %v626, %v838
        %v883 = vadd.f32 %v628, %v840
        %v884 = vadd.f32 %v631, %v843
        %v885 = vadd.f32 %v633, %v845
        %v886 = vadd.f32 %v636, %v848
        %v887 = vadd.f32 %v638, %v850
        %v888 = vld [vmem:[%s213 + $0x12] sm:$0xff]
        %v889 = vld [vmem:[%s213 + $0x1a] sm:$0xff]
        %v890 = vld [vmem:[%s213 + $0x22] sm:$0xff]
        %v891 = vld [vmem:[%s213 + $0x2a] sm:$0xff]
        %v892 = vld [vmem:[%s213 + $0x32] sm:$0xff]
        %v893 = vld [vmem:[%s213 + $0x3a] sm:$0xff]
        %v894 = vld [vmem:[%s213 + $0x42] sm:$0xff]
        %v895 = vld [vmem:[%s213 + $0x4a] sm:$0xff]
        %v896 = vld [vmem:[%s213 + $0x52] sm:$0xff]
        %v897 = vld [vmem:[%s213 + $0x5a] sm:$0xff]
        %v898 = vld [vmem:[%s213 + $0x62] sm:$0xff]
        %v899 = vld [vmem:[%s213 + $0x6a] sm:$0xff]
        %v900 = vld [vmem:[%s213 + $0x72] sm:$0xff]
        %v901 = vld [vmem:[%s213 + $0x7a] sm:$0xff]
        %v902 = vld [vmem:[%s213 + $0x82] sm:$0xff]
        %v903 = vld [vmem:[%s213 + $0x8a] sm:$0xff]
        %v904 = vld [vmem:[%s213 + $0x92] sm:$0xff]
        %v905 = vld [vmem:[%s213 + $0x9a] sm:$0xff]
        %v906 = vld [vmem:[%s213 + $0xa2] sm:$0xff]
        %v907 = vld [vmem:[%s213 + $0xaa] sm:$0xff]
        %v908 = vld [vmem:[%s213 + $0xb2] sm:$0xff]
        %v909 = vld [vmem:[%s213 + $0xba] sm:$0xff]
        %v910 = vld [vmem:[%s213 + $0xc2] sm:$0xff]
        %v911 = vld [vmem:[%s213 + $0xca] sm:$0xff]
        %v912 = vld [vmem:[%s213 + $0xd2] sm:$0xff]
        %v913 = vld [vmem:[%s213 + $0xda] sm:$0xff]
        %v914 = vld [vmem:[%s213 + $0xe2] sm:$0xff]
        %v915 = vld [vmem:[%s213 + $0xea] sm:$0xff]
        %v916 = vld [vmem:[%s213 + $0xf2] sm:$0xff]
        %v917 = vld [vmem:[%s213 + $0xfa] sm:$0xff]
        %v918 = vld [vmem:[%s213 + $0x102] sm:$0xff]
        %v919 = vld [vmem:[%s213 + $0x10a] sm:$0xff]
        %v920 = vld [vmem:[%s213 + $0x112] sm:$0xff]
        %v921 = vld [vmem:[%s213 + $0x11a] sm:$0xff]
        %v922 = vld [vmem:[%s213 + $0x122] sm:$0xff]
        %v923 = vld [vmem:[%s213 + $0x12a] sm:$0xff]
        %v924 = vpack.c.bf16 %v889, %v888
        %v925 = vpack.c.bf16 %v891, %v890
        %v926 = vpack.c.bf16 %v893, %v892
        %v927 = vpack.c.bf16 %v895, %v894
        %v928 = vpack.c.bf16 %v897, %v896
        %v929 = vpack.c.bf16 %v899, %v898
        %v930 = vpack.c.bf16 %v901, %v900
        %v931 = vpack.c.bf16 %v903, %v902
        %v932 = vpack.c.bf16 %v905, %v904
        %v933 = vpack.c.bf16 %v907, %v906
        %v934 = vpack.c.bf16 %v909, %v908
        %v935 = vpack.c.bf16 %v911, %v910
        %v936 = vpack.c.bf16 %v913, %v912
        %v937 = vpack.c.bf16 %v915, %v914
        %v938 = vpack.c.bf16 %v917, %v916
        %v939 = vpack.c.bf16 %v919, %v918
        %v940 = vpack.c.bf16 %v921, %v920
        %v941 = vpack.c.bf16 %v923, %v922
        %s942 = scalar_lea.vmem %s1, 12
        %v943 = vld [vmem:[%s942] sm:$0xf]
        %v945 = vsel %vm326, %v924, 0
        %v948 = vsel %vm326, %v925, 0
        %v951 = vsel %vm326, %v926, 0
        %v954 = vsel %vm326, %v927, 0
        %v957 = vsel %vm326, %v928, 0
        %v960 = vsel %vm326, %v929, 0
        %v963 = vsel %vm326, %v930, 0
        %v966 = vsel %vm326, %v931, 0
        %v969 = vsel %vm326, %v932, 0
        %v972 = vsel %vm326, %v933, 0
        %v975 = vsel %vm326, %v934, 0
        %v978 = vsel %vm326, %v935, 0
        %v981 = vsel %vm326, %v936, 0
        %v984 = vsel %vm326, %v937, 0
        %v987 = vsel %vm326, %v938, 0
        %v990 = vsel %vm326, %v939, 0
        %v993 = vsel %vm326, %v940, 0
        %v996 = vsel %vm326, %v941, 0
        %v999 = vsel %vm381, %v943, 0
        %1001 = vmatpush.bf16.msra.mxu0 0
        %1002 = vmatpush.bf16.msra.mxu0 0
        %1003 = vmatpush.bf16.msra.mxu0 0
        %1004 = vmatpush.bf16.msra.mxu0 0
        %1005 = vmatpush.bf16.msra.mxu0 0
        %1006 = vmatpush.bf16.msra.mxu0 0
        %1007 = vmatpush.bf16.msra.mxu0 0
        %1008 = vmatpush.bf16.msra.mxu0 %v999
        %1009 = vmatmul.bf16.gmra.mxu0 %v945
        %v1010 = vpop.f32.mrf.mxu0
        %v1011 = vadd.f32 0.0, %v1010
        %v1012 = vpop.f32.mrf.mxu0
        %v1013 = vadd.f32 0.0, %v1012
        %1014 = vmatmul.bf16.gmra.mxu0 %v948
        %v1015 = vpop.f32.mrf.mxu0
        %v1016 = vadd.f32 0.0, %v1015
        %v1017 = vpop.f32.mrf.mxu0
        %v1018 = vadd.f32 0.0, %v1017
        %1019 = vmatmul.bf16.gmra.mxu0 %v951
        %v1020 = vpop.f32.mrf.mxu0
        %v1021 = vadd.f32 0.0, %v1020
        %v1022 = vpop.f32.mrf.mxu0
        %v1023 = vadd.f32 0.0, %v1022
        %1024 = vmatmul.bf16.gmra.mxu0 %v954
        %v1025 = vpop.f32.mrf.mxu0
        %v1026 = vadd.f32 0.0, %v1025
        %v1027 = vpop.f32.mrf.mxu0
        %v1028 = vadd.f32 0.0, %v1027
        %1029 = vmatmul.bf16.gmra.mxu0 %v957
        %v1030 = vpop.f32.mrf.mxu0
        %v1031 = vadd.f32 0.0, %v1030
        %v1032 = vpop.f32.mrf.mxu0
        %v1033 = vadd.f32 0.0, %v1032
        %1034 = vmatmul.bf16.gmra.mxu0 %v960
        %v1035 = vpop.f32.mrf.mxu0
        %v1036 = vadd.f32 0.0, %v1035
        %v1037 = vpop.f32.mrf.mxu0
        %v1038 = vadd.f32 0.0, %v1037
        %1039 = vmatmul.bf16.gmra.mxu0 %v963
        %v1040 = vpop.f32.mrf.mxu0
        %v1041 = vadd.f32 0.0, %v1040
        %v1042 = vpop.f32.mrf.mxu0
        %v1043 = vadd.f32 0.0, %v1042
        %1044 = vmatmul.bf16.gmra.mxu0 %v966
        %v1045 = vpop.f32.mrf.mxu0
        %v1046 = vadd.f32 0.0, %v1045
        %v1047 = vpop.f32.mrf.mxu0
        %v1048 = vadd.f32 0.0, %v1047
        %1049 = vmatmul.bf16.gmra.mxu0 %v969
        %v1050 = vpop.f32.mrf.mxu0
        %v1051 = vadd.f32 0.0, %v1050
        %v1052 = vpop.f32.mrf.mxu0
        %v1053 = vadd.f32 0.0, %v1052
        %1054 = vmatmul.bf16.gmra.mxu0 %v972
        %v1055 = vpop.f32.mrf.mxu0
        %v1056 = vadd.f32 0.0, %v1055
        %v1057 = vpop.f32.mrf.mxu0
        %v1058 = vadd.f32 0.0, %v1057
        %1059 = vmatmul.bf16.gmra.mxu0 %v975
        %v1060 = vpop.f32.mrf.mxu0
        %v1061 = vadd.f32 0.0, %v1060
        %v1062 = vpop.f32.mrf.mxu0
        %v1063 = vadd.f32 0.0, %v1062
        %1064 = vmatmul.bf16.gmra.mxu0 %v978
        %v1065 = vpop.f32.mrf.mxu0
        %v1066 = vadd.f32 0.0, %v1065
        %v1067 = vpop.f32.mrf.mxu0
        %v1068 = vadd.f32 0.0, %v1067
        %1069 = vmatmul.bf16.gmra.mxu0 %v981
        %v1070 = vpop.f32.mrf.mxu0
        %v1071 = vadd.f32 0.0, %v1070
        %v1072 = vpop.f32.mrf.mxu0
        %v1073 = vadd.f32 0.0, %v1072
        %1074 = vmatmul.bf16.gmra.mxu0 %v984
        %v1075 = vpop.f32.mrf.mxu0
        %v1076 = vadd.f32 0.0, %v1075
        %v1077 = vpop.f32.mrf.mxu0
        %v1078 = vadd.f32 0.0, %v1077
        %1079 = vmatmul.bf16.gmra.mxu0 %v987
        %v1080 = vpop.f32.mrf.mxu0
        %v1081 = vadd.f32 0.0, %v1080
        %v1082 = vpop.f32.mrf.mxu0
        %v1083 = vadd.f32 0.0, %v1082
        %1084 = vmatmul.bf16.gmra.mxu0 %v990
        %v1085 = vpop.f32.mrf.mxu0
        %v1086 = vadd.f32 0.0, %v1085
        %v1087 = vpop.f32.mrf.mxu0
        %v1088 = vadd.f32 0.0, %v1087
        %1089 = vmatmul.bf16.gmra.mxu0 %v993
        %v1090 = vpop.f32.mrf.mxu0
        %v1091 = vadd.f32 0.0, %v1090
        %v1092 = vpop.f32.mrf.mxu0
        %v1093 = vadd.f32 0.0, %v1092
        %1094 = vmatmul.bf16.gmra.mxu0 %v996
        %v1095 = vpop.f32.mrf.mxu0
        %v1096 = vadd.f32 0.0, %v1095
        %v1097 = vpop.f32.mrf.mxu0
        %v1098 = vadd.f32 0.0, %v1097
        %1099 = vdwg.mxu0
        %v1100 = vadd.f32 %v852, %v1011
        %v1101 = vadd.f32 %v853, %v1013
        %v1102 = vadd.f32 %v854, %v1016
        %v1103 = vadd.f32 %v855, %v1018
        %v1104 = vadd.f32 %v856, %v1021
        %v1105 = vadd.f32 %v857, %v1023
        %v1106 = vadd.f32 %v858, %v1026
        %v1107 = vadd.f32 %v859, %v1028
        %v1108 = vadd.f32 %v860, %v1031
        %v1109 = vadd.f32 %v861, %v1033
        %v1110 = vadd.f32 %v862, %v1036
        %v1111 = vadd.f32 %v863, %v1038
        %v1112 = vadd.f32 %v864, %v1041
        %v1113 = vadd.f32 %v865, %v1043
        %v1114 = vadd.f32 %v866, %v1046
        %v1115 = vadd.f32 %v867, %v1048
        %v1116 = vadd.f32 %v868, %v1051
        %v1117 = vadd.f32 %v869, %v1053
        %v1118 = vadd.f32 %v870, %v1056
        %v1119 = vadd.f32 %v871, %v1058
        %v1120 = vadd.f32 %v872, %v1061
        %v1121 = vadd.f32 %v873, %v1063
        %v1122 = vadd.f32 %v874, %v1066
        %v1123 = vadd.f32 %v875, %v1068
        %v1124 = vadd.f32 %v876, %v1071
        %v1125 = vadd.f32 %v877, %v1073
        %v1126 = vadd.f32 %v878, %v1076
        %v1127 = vadd.f32 %v879, %v1078
        %v1128 = vadd.f32 %v880, %v1081
        %v1129 = vadd.f32 %v881, %v1083
        %v1130 = vadd.f32 %v882, %v1086
        %v1131 = vadd.f32 %v883, %v1088
        %v1132 = vadd.f32 %v884, %v1091
        %v1133 = vadd.f32 %v885, %v1093
        %v1134 = vadd.f32 %v886, %v1096
        %v1135 = vadd.f32 %v887, %v1098
        %v1136 = vld [vmem:[%s213 + $0x13] sm:$0xff]
        %v1137 = vld [vmem:[%s213 + $0x1b] sm:$0xff]
        %v1138 = vld [vmem:[%s213 + $0x23] sm:$0xff]
        %v1139 = vld [vmem:[%s213 + $0x2b] sm:$0xff]
        %v1140 = vld [vmem:[%s213 + $0x33] sm:$0xff]
        %v1141 = vld [vmem:[%s213 + $0x3b] sm:$0xff]
        %v1142 = vld [vmem:[%s213 + $0x43] sm:$0xff]
        %v1143 = vld [vmem:[%s213 + $0x4b] sm:$0xff]
        %v1144 = vld [vmem:[%s213 + $0x53] sm:$0xff]
        %v1145 = vld [vmem:[%s213 + $0x5b] sm:$0xff]
        %v1146 = vld [vmem:[%s213 + $0x63] sm:$0xff]
        %v1147 = vld [vmem:[%s213 + $0x6b] sm:$0xff]
        %v1148 = vld [vmem:[%s213 + $0x73] sm:$0xff]
        %v1149 = vld [vmem:[%s213 + $0x7b] sm:$0xff]
        %v1150 = vld [vmem:[%s213 + $0x83] sm:$0xff]
        %v1151 = vld [vmem:[%s213 + $0x8b] sm:$0xff]
        %v1152 = vld [vmem:[%s213 + $0x93] sm:$0xff]
        %v1153 = vld [vmem:[%s213 + $0x9b] sm:$0xff]
        %v1154 = vld [vmem:[%s213 + $0xa3] sm:$0xff]
        %v1155 = vld [vmem:[%s213 + $0xab] sm:$0xff]
        %v1156 = vld [vmem:[%s213 + $0xb3] sm:$0xff]
        %v1157 = vld [vmem:[%s213 + $0xbb] sm:$0xff]
        %v1158 = vld [vmem:[%s213 + $0xc3] sm:$0xff]
        %v1159 = vld [vmem:[%s213 + $0xcb] sm:$0xff]
        %v1160 = vld [vmem:[%s213 + $0xd3] sm:$0xff]
        %v1161 = vld [vmem:[%s213 + $0xdb] sm:$0xff]
        %v1162 = vld [vmem:[%s213 + $0xe3] sm:$0xff]
        %v1163 = vld [vmem:[%s213 + $0xeb] sm:$0xff]
        %v1164 = vld [vmem:[%s213 + $0xf3] sm:$0xff]
        %v1165 = vld [vmem:[%s213 + $0xfb] sm:$0xff]
        %v1166 = vld [vmem:[%s213 + $0x103] sm:$0xff]
        %v1167 = vld [vmem:[%s213 + $0x10b] sm:$0xff]
        %v1168 = vld [vmem:[%s213 + $0x113] sm:$0xff]
        %v1169 = vld [vmem:[%s213 + $0x11b] sm:$0xff]
        %v1170 = vld [vmem:[%s213 + $0x123] sm:$0xff]
        %v1171 = vld [vmem:[%s213 + $0x12b] sm:$0xff]
        %v1172 = vpack.c.bf16 %v1137, %v1136
        %v1173 = vpack.c.bf16 %v1139, %v1138
        %v1174 = vpack.c.bf16 %v1141, %v1140
        %v1175 = vpack.c.bf16 %v1143, %v1142
        %v1176 = vpack.c.bf16 %v1145, %v1144
        %v1177 = vpack.c.bf16 %v1147, %v1146
        %v1178 = vpack.c.bf16 %v1149, %v1148
        %v1179 = vpack.c.bf16 %v1151, %v1150
        %v1180 = vpack.c.bf16 %v1153, %v1152
        %v1181 = vpack.c.bf16 %v1155, %v1154
        %v1182 = vpack.c.bf16 %v1157, %v1156
        %v1183 = vpack.c.bf16 %v1159, %v1158
        %v1184 = vpack.c.bf16 %v1161, %v1160
        %v1185 = vpack.c.bf16 %v1163, %v1162
        %v1186 = vpack.c.bf16 %v1165, %v1164
        %v1187 = vpack.c.bf16 %v1167, %v1166
        %v1188 = vpack.c.bf16 %v1169, %v1168
        %v1189 = vpack.c.bf16 %v1171, %v1170
        %s1190 = scalar_lea.vmem %s1, 16
        %v1191 = vld [vmem:[%s1190] sm:$0xf]
        %v1193 = vsel %vm326, %v1172, 0
        %v1196 = vsel %vm326, %v1173, 0
        %v1199 = vsel %vm326, %v1174, 0
        %v1202 = vsel %vm326, %v1175, 0
        %v1205 = vsel %vm326, %v1176, 0
        %v1208 = vsel %vm326, %v1177, 0
        %v1211 = vsel %vm326, %v1178, 0
        %v1214 = vsel %vm326, %v1179, 0
        %v1217 = vsel %vm326, %v1180, 0
        %v1220 = vsel %vm326, %v1181, 0
        %v1223 = vsel %vm326, %v1182, 0
        %v1226 = vsel %vm326, %v1183, 0
        %v1229 = vsel %vm326, %v1184, 0
        %v1232 = vsel %vm326, %v1185, 0
        %v1235 = vsel %vm326, %v1186, 0
        %v1238 = vsel %vm326, %v1187, 0
        %v1241 = vsel %vm326, %v1188, 0
        %v1244 = vsel %vm326, %v1189, 0
        %v1247 = vsel %vm381, %v1191, 0
        %1249 = vmatpush.bf16.msra.mxu0 0
        %1250 = vmatpush.bf16.msra.mxu0 0
        %1251 = vmatpush.bf16.msra.mxu0 0
        %1252 = vmatpush.bf16.msra.mxu0 0
        %1253 = vmatpush.bf16.msra.mxu0 0
        %1254 = vmatpush.bf16.msra.mxu0 0
        %1255 = vmatpush.bf16.msra.mxu0 0
        %1256 = vmatpush.bf16.msra.mxu0 %v1247
        %1257 = vmatmul.bf16.gmra.mxu0 %v1193
        %v1258 = vpop.f32.mrf.mxu0
        %v1259 = vadd.f32 0.0, %v1258
        %v1260 = vpop.f32.mrf.mxu0
        %v1261 = vadd.f32 0.0, %v1260
        %1262 = vmatmul.bf16.gmra.mxu0 %v1196
        %v1263 = vpop.f32.mrf.mxu0
        %v1264 = vadd.f32 0.0, %v1263
        %v1265 = vpop.f32.mrf.mxu0
        %v1266 = vadd.f32 0.0, %v1265
        %1267 = vmatmul.bf16.gmra.mxu0 %v1199
        %v1268 = vpop.f32.mrf.mxu0
        %v1269 = vadd.f32 0.0, %v1268
        %v1270 = vpop.f32.mrf.mxu0
        %v1271 = vadd.f32 0.0, %v1270
        %1272 = vmatmul.bf16.gmra.mxu0 %v1202
        %v1273 = vpop.f32.mrf.mxu0
        %v1274 = vadd.f32 0.0, %v1273
        %v1275 = vpop.f32.mrf.mxu0
        %v1276 = vadd.f32 0.0, %v1275
        %1277 = vmatmul.bf16.gmra.mxu0 %v1205
        %v1278 = vpop.f32.mrf.mxu0
        %v1279 = vadd.f32 0.0, %v1278
        %v1280 = vpop.f32.mrf.mxu0
        %v1281 = vadd.f32 0.0, %v1280
        %1282 = vmatmul.bf16.gmra.mxu0 %v1208
        %v1283 = vpop.f32.mrf.mxu0
        %v1284 = vadd.f32 0.0, %v1283
        %v1285 = vpop.f32.mrf.mxu0
        %v1286 = vadd.f32 0.0, %v1285
        %1287 = vmatmul.bf16.gmra.mxu0 %v1211
        %v1288 = vpop.f32.mrf.mxu0
        %v1289 = vadd.f32 0.0, %v1288
        %v1290 = vpop.f32.mrf.mxu0
        %v1291 = vadd.f32 0.0, %v1290
        %1292 = vmatmul.bf16.gmra.mxu0 %v1214
        %v1293 = vpop.f32.mrf.mxu0
        %v1294 = vadd.f32 0.0, %v1293
        %v1295 = vpop.f32.mrf.mxu0
        %v1296 = vadd.f32 0.0, %v1295
        %1297 = vmatmul.bf16.gmra.mxu0 %v1217
        %v1298 = vpop.f32.mrf.mxu0
        %v1299 = vadd.f32 0.0, %v1298
        %v1300 = vpop.f32.mrf.mxu0
        %v1301 = vadd.f32 0.0, %v1300
        %1302 = vmatmul.bf16.gmra.mxu0 %v1220
        %v1303 = vpop.f32.mrf.mxu0
        %v1304 = vadd.f32 0.0, %v1303
        %v1305 = vpop.f32.mrf.mxu0
        %v1306 = vadd.f32 0.0, %v1305
        %1307 = vmatmul.bf16.gmra.mxu0 %v1223
        %v1308 = vpop.f32.mrf.mxu0
        %v1309 = vadd.f32 0.0, %v1308
        %v1310 = vpop.f32.mrf.mxu0
        %v1311 = vadd.f32 0.0, %v1310
        %1312 = vmatmul.bf16.gmra.mxu0 %v1226
        %v1313 = vpop.f32.mrf.mxu0
        %v1314 = vadd.f32 0.0, %v1313
        %v1315 = vpop.f32.mrf.mxu0
        %v1316 = vadd.f32 0.0, %v1315
        %1317 = vmatmul.bf16.gmra.mxu0 %v1229
        %v1318 = vpop.f32.mrf.mxu0
        %v1319 = vadd.f32 0.0, %v1318
        %v1320 = vpop.f32.mrf.mxu0
        %v1321 = vadd.f32 0.0, %v1320
        %1322 = vmatmul.bf16.gmra.mxu0 %v1232
        %v1323 = vpop.f32.mrf.mxu0
        %v1324 = vadd.f32 0.0, %v1323
        %v1325 = vpop.f32.mrf.mxu0
        %v1326 = vadd.f32 0.0, %v1325
        %1327 = vmatmul.bf16.gmra.mxu0 %v1235
        %v1328 = vpop.f32.mrf.mxu0
        %v1329 = vadd.f32 0.0, %v1328
        %v1330 = vpop.f32.mrf.mxu0
        %v1331 = vadd.f32 0.0, %v1330
        %1332 = vmatmul.bf16.gmra.mxu0 %v1238
        %v1333 = vpop.f32.mrf.mxu0
        %v1334 = vadd.f32 0.0, %v1333
        %v1335 = vpop.f32.mrf.mxu0
        %v1336 = vadd.f32 0.0, %v1335
        %1337 = vmatmul.bf16.gmra.mxu0 %v1241
        %v1338 = vpop.f32.mrf.mxu0
        %v1339 = vadd.f32 0.0, %v1338
        %v1340 = vpop.f32.mrf.mxu0
        %v1341 = vadd.f32 0.0, %v1340
        %1342 = vmatmul.bf16.gmra.mxu0 %v1244
        %v1343 = vpop.f32.mrf.mxu0
        %v1344 = vadd.f32 0.0, %v1343
        %v1345 = vpop.f32.mrf.mxu0
        %v1346 = vadd.f32 0.0, %v1345
        %1347 = vdwg.mxu0
        %v1348 = vadd.f32 %v1100, %v1259
        %v1349 = vadd.f32 %v1101, %v1261
        %v1350 = vadd.f32 %v1102, %v1264
        %v1351 = vadd.f32 %v1103, %v1266
        %v1352 = vadd.f32 %v1104, %v1269
        %v1353 = vadd.f32 %v1105, %v1271
        %v1354 = vadd.f32 %v1106, %v1274
        %v1355 = vadd.f32 %v1107, %v1276
        %v1356 = vadd.f32 %v1108, %v1279
        %v1357 = vadd.f32 %v1109, %v1281
        %v1358 = vadd.f32 %v1110, %v1284
        %v1359 = vadd.f32 %v1111, %v1286
        %v1360 = vadd.f32 %v1112, %v1289
        %v1361 = vadd.f32 %v1113, %v1291
        %v1362 = vadd.f32 %v1114, %v1294
        %v1363 = vadd.f32 %v1115, %v1296
        %v1364 = vadd.f32 %v1116, %v1299
        %v1365 = vadd.f32 %v1117, %v1301
        %v1366 = vadd.f32 %v1118, %v1304
        %v1367 = vadd.f32 %v1119, %v1306
        %v1368 = vadd.f32 %v1120, %v1309
        %v1369 = vadd.f32 %v1121, %v1311
        %v1370 = vadd.f32 %v1122, %v1314
        %v1371 = vadd.f32 %v1123, %v1316
        %v1372 = vadd.f32 %v1124, %v1319
        %v1373 = vadd.f32 %v1125, %v1321
        %v1374 = vadd.f32 %v1126, %v1324
        %v1375 = vadd.f32 %v1127, %v1326
        %v1376 = vadd.f32 %v1128, %v1329
        %v1377 = vadd.f32 %v1129, %v1331
        %v1378 = vadd.f32 %v1130, %v1334
        %v1379 = vadd.f32 %v1131, %v1336
        %v1380 = vadd.f32 %v1132, %v1339
        %v1381 = vadd.f32 %v1133, %v1341
        %v1382 = vadd.f32 %v1134, %v1344
        %v1383 = vadd.f32 %v1135, %v1346
        %v1384 = vld [vmem:[%s213 + $0x14] sm:$0xff]
        %v1385 = vld [vmem:[%s213 + $0x1c] sm:$0xff]
        %v1386 = vld [vmem:[%s213 + $0x24] sm:$0xff]
        %v1387 = vld [vmem:[%s213 + $0x2c] sm:$0xff]
        %v1388 = vld [vmem:[%s213 + $0x34] sm:$0xff]
        %v1389 = vld [vmem:[%s213 + $0x3c] sm:$0xff]
        %v1390 = vld [vmem:[%s213 + $0x44] sm:$0xff]
        %v1391 = vld [vmem:[%s213 + $0x4c] sm:$0xff]
        %v1392 = vld [vmem:[%s213 + $0x54] sm:$0xff]
        %v1393 = vld [vmem:[%s213 + $0x5c] sm:$0xff]
        %v1394 = vld [vmem:[%s213 + $0x64] sm:$0xff]
        %v1395 = vld [vmem:[%s213 + $0x6c] sm:$0xff]
        %v1396 = vld [vmem:[%s213 + $0x74] sm:$0xff]
        %v1397 = vld [vmem:[%s213 + $0x7c] sm:$0xff]
        %v1398 = vld [vmem:[%s213 + $0x84] sm:$0xff]
        %v1399 = vld [vmem:[%s213 + $0x8c] sm:$0xff]
        %v1400 = vld [vmem:[%s213 + $0x94] sm:$0xff]
        %v1401 = vld [vmem:[%s213 + $0x9c] sm:$0xff]
        %v1402 = vld [vmem:[%s213 + $0xa4] sm:$0xff]
        %v1403 = vld [vmem:[%s213 + $0xac] sm:$0xff]
        %v1404 = vld [vmem:[%s213 + $0xb4] sm:$0xff]
        %v1405 = vld [vmem:[%s213 + $0xbc] sm:$0xff]
        %v1406 = vld [vmem:[%s213 + $0xc4] sm:$0xff]
        %v1407 = vld [vmem:[%s213 + $0xcc] sm:$0xff]
        %v1408 = vld [vmem:[%s213 + $0xd4] sm:$0xff]
        %v1409 = vld [vmem:[%s213 + $0xdc] sm:$0xff]
        %v1410 = vld [vmem:[%s213 + $0xe4] sm:$0xff]
        %v1411 = vld [vmem:[%s213 + $0xec] sm:$0xff]
        %v1412 = vld [vmem:[%s213 + $0xf4] sm:$0xff]
        %v1413 = vld [vmem:[%s213 + $0xfc] sm:$0xff]
        %v1414 = vld [vmem:[%s213 + $0x104] sm:$0xff]
        %v1415 = vld [vmem:[%s213 + $0x10c] sm:$0xff]
        %v1416 = vld [vmem:[%s213 + $0x114] sm:$0xff]
        %v1417 = vld [vmem:[%s213 + $0x11c] sm:$0xff]
        %v1418 = vld [vmem:[%s213 + $0x124] sm:$0xff]
        %v1419 = vld [vmem:[%s213 + $0x12c] sm:$0xff]
        %v1420 = vpack.c.bf16 %v1385, %v1384
        %v1421 = vpack.c.bf16 %v1387, %v1386
        %v1422 = vpack.c.bf16 %v1389, %v1388
        %v1423 = vpack.c.bf16 %v1391, %v1390
        %v1424 = vpack.c.bf16 %v1393, %v1392
        %v1425 = vpack.c.bf16 %v1395, %v1394
        %v1426 = vpack.c.bf16 %v1397, %v1396
        %v1427 = vpack.c.bf16 %v1399, %v1398
        %v1428 = vpack.c.bf16 %v1401, %v1400
        %v1429 = vpack.c.bf16 %v1403, %v1402
        %v1430 = vpack.c.bf16 %v1405, %v1404
        %v1431 = vpack.c.bf16 %v1407, %v1406
        %v1432 = vpack.c.bf16 %v1409, %v1408
        %v1433 = vpack.c.bf16 %v1411, %v1410
        %v1434 = vpack.c.bf16 %v1413, %v1412
        %v1435 = vpack.c.bf16 %v1415, %v1414
        %v1436 = vpack.c.bf16 %v1417, %v1416
        %v1437 = vpack.c.bf16 %v1419, %v1418
        %s1438 = scalar_lea.vmem %s1, 20
        %v1439 = vld [vmem:[%s1438] sm:$0xf]
        %v1441 = vsel %vm326, %v1420, 0
        %v1444 = vsel %vm326, %v1421, 0
        %v1447 = vsel %vm326, %v1422, 0
        %v1450 = vsel %vm326, %v1423, 0
        %v1453 = vsel %vm326, %v1424, 0
        %v1456 = vsel %vm326, %v1425, 0
        %v1459 = vsel %vm326, %v1426, 0
        %v1462 = vsel %vm326, %v1427, 0
        %v1465 = vsel %vm326, %v1428, 0
        %v1468 = vsel %vm326, %v1429, 0
        %v1471 = vsel %vm326, %v1430, 0
        %v1474 = vsel %vm326, %v1431, 0
        %v1477 = vsel %vm326, %v1432, 0
        %v1480 = vsel %vm326, %v1433, 0
        %v1483 = vsel %vm326, %v1434, 0
        %v1486 = vsel %vm326, %v1435, 0
        %v1489 = vsel %vm326, %v1436, 0
        %v1492 = vsel %vm326, %v1437, 0
        %v1495 = vsel %vm381, %v1439, 0
        %1497 = vmatpush.bf16.msra.mxu0 0
        %1498 = vmatpush.bf16.msra.mxu0 0
        %1499 = vmatpush.bf16.msra.mxu0 0
        %1500 = vmatpush.bf16.msra.mxu0 0
        %1501 = vmatpush.bf16.msra.mxu0 0
        %1502 = vmatpush.bf16.msra.mxu0 0
        %1503 = vmatpush.bf16.msra.mxu0 0
        %1504 = vmatpush.bf16.msra.mxu0 %v1495
        %1505 = vmatmul.bf16.gmra.mxu0 %v1441
        %v1506 = vpop.f32.mrf.mxu0
        %v1507 = vadd.f32 0.0, %v1506
        %v1508 = vpop.f32.mrf.mxu0
        %v1509 = vadd.f32 0.0, %v1508
        %1510 = vmatmul.bf16.gmra.mxu0 %v1444
        %v1511 = vpop.f32.mrf.mxu0
        %v1512 = vadd.f32 0.0, %v1511
        %v1513 = vpop.f32.mrf.mxu0
        %v1514 = vadd.f32 0.0, %v1513
        %1515 = vmatmul.bf16.gmra.mxu0 %v1447
        %v1516 = vpop.f32.mrf.mxu0
        %v1517 = vadd.f32 0.0, %v1516
        %v1518 = vpop.f32.mrf.mxu0
        %v1519 = vadd.f32 0.0, %v1518
        %1520 = vmatmul.bf16.gmra.mxu0 %v1450
        %v1521 = vpop.f32.mrf.mxu0
        %v1522 = vadd.f32 0.0, %v1521
        %v1523 = vpop.f32.mrf.mxu0
        %v1524 = vadd.f32 0.0, %v1523
        %1525 = vmatmul.bf16.gmra.mxu0 %v1453
        %v1526 = vpop.f32.mrf.mxu0
        %v1527 = vadd.f32 0.0, %v1526
        %v1528 = vpop.f32.mrf.mxu0
        %v1529 = vadd.f32 0.0, %v1528
        %1530 = vmatmul.bf16.gmra.mxu0 %v1456
        %v1531 = vpop.f32.mrf.mxu0
        %v1532 = vadd.f32 0.0, %v1531
        %v1533 = vpop.f32.mrf.mxu0
        %v1534 = vadd.f32 0.0, %v1533
        %1535 = vmatmul.bf16.gmra.mxu0 %v1459
        %v1536 = vpop.f32.mrf.mxu0
        %v1537 = vadd.f32 0.0, %v1536
        %v1538 = vpop.f32.mrf.mxu0
        %v1539 = vadd.f32 0.0, %v1538
        %1540 = vmatmul.bf16.gmra.mxu0 %v1462
        %v1541 = vpop.f32.mrf.mxu0
        %v1542 = vadd.f32 0.0, %v1541
        %v1543 = vpop.f32.mrf.mxu0
        %v1544 = vadd.f32 0.0, %v1543
        %1545 = vmatmul.bf16.gmra.mxu0 %v1465
        %v1546 = vpop.f32.mrf.mxu0
        %v1547 = vadd.f32 0.0, %v1546
        %v1548 = vpop.f32.mrf.mxu0
        %v1549 = vadd.f32 0.0, %v1548
        %1550 = vmatmul.bf16.gmra.mxu0 %v1468
        %v1551 = vpop.f32.mrf.mxu0
        %v1552 = vadd.f32 0.0, %v1551
        %v1553 = vpop.f32.mrf.mxu0
        %v1554 = vadd.f32 0.0, %v1553
        %1555 = vmatmul.bf16.gmra.mxu0 %v1471
        %v1556 = vpop.f32.mrf.mxu0
        %v1557 = vadd.f32 0.0, %v1556
        %v1558 = vpop.f32.mrf.mxu0
        %v1559 = vadd.f32 0.0, %v1558
        %1560 = vmatmul.bf16.gmra.mxu0 %v1474
        %v1561 = vpop.f32.mrf.mxu0
        %v1562 = vadd.f32 0.0, %v1561
        %v1563 = vpop.f32.mrf.mxu0
        %v1564 = vadd.f32 0.0, %v1563
        %1565 = vmatmul.bf16.gmra.mxu0 %v1477
        %v1566 = vpop.f32.mrf.mxu0
        %v1567 = vadd.f32 0.0, %v1566
        %v1568 = vpop.f32.mrf.mxu0
        %v1569 = vadd.f32 0.0, %v1568
        %1570 = vmatmul.bf16.gmra.mxu0 %v1480
        %v1571 = vpop.f32.mrf.mxu0
        %v1572 = vadd.f32 0.0, %v1571
        %v1573 = vpop.f32.mrf.mxu0
        %v1574 = vadd.f32 0.0, %v1573
        %1575 = vmatmul.bf16.gmra.mxu0 %v1483
        %v1576 = vpop.f32.mrf.mxu0
        %v1577 = vadd.f32 0.0, %v1576
        %v1578 = vpop.f32.mrf.mxu0
        %v1579 = vadd.f32 0.0, %v1578
        %1580 = vmatmul.bf16.gmra.mxu0 %v1486
        %v1581 = vpop.f32.mrf.mxu0
        %v1582 = vadd.f32 0.0, %v1581
        %v1583 = vpop.f32.mrf.mxu0
        %v1584 = vadd.f32 0.0, %v1583
        %1585 = vmatmul.bf16.gmra.mxu0 %v1489
        %v1586 = vpop.f32.mrf.mxu0
        %v1587 = vadd.f32 0.0, %v1586
        %v1588 = vpop.f32.mrf.mxu0
        %v1589 = vadd.f32 0.0, %v1588
        %1590 = vmatmul.bf16.gmra.mxu0 %v1492
        %v1591 = vpop.f32.mrf.mxu0
        %v1592 = vadd.f32 0.0, %v1591
        %v1593 = vpop.f32.mrf.mxu0
        %v1594 = vadd.f32 0.0, %v1593
        %1595 = vdwg.mxu0
        %v1596 = vadd.f32 %v1348, %v1507
        %v1597 = vadd.f32 %v1349, %v1509
        %v1598 = vadd.f32 %v1350, %v1512
        %v1599 = vadd.f32 %v1351, %v1514
        %v1600 = vadd.f32 %v1352, %v1517
        %v1601 = vadd.f32 %v1353, %v1519
        %v1602 = vadd.f32 %v1354, %v1522
        %v1603 = vadd.f32 %v1355, %v1524
        %v1604 = vadd.f32 %v1356, %v1527
        %v1605 = vadd.f32 %v1357, %v1529
        %v1606 = vadd.f32 %v1358, %v1532
        %v1607 = vadd.f32 %v1359, %v1534
        %v1608 = vadd.f32 %v1360, %v1537
        %v1609 = vadd.f32 %v1361, %v1539
        %v1610 = vadd.f32 %v1362, %v1542
        %v1611 = vadd.f32 %v1363, %v1544
        %v1612 = vadd.f32 %v1364, %v1547
        %v1613 = vadd.f32 %v1365, %v1549
        %v1614 = vadd.f32 %v1366, %v1552
        %v1615 = vadd.f32 %v1367, %v1554
        %v1616 = vadd.f32 %v1368, %v1557
        %v1617 = vadd.f32 %v1369, %v1559
        %v1618 = vadd.f32 %v1370, %v1562
        %v1619 = vadd.f32 %v1371, %v1564
        %v1620 = vadd.f32 %v1372, %v1567
        %v1621 = vadd.f32 %v1373, %v1569
        %v1622 = vadd.f32 %v1374, %v1572
        %v1623 = vadd.f32 %v1375, %v1574
        %v1624 = vadd.f32 %v1376, %v1577
        %v1625 = vadd.f32 %v1377, %v1579
        %v1626 = vadd.f32 %v1378, %v1582
        %v1627 = vadd.f32 %v1379, %v1584
        %v1628 = vadd.f32 %v1380, %v1587
        %v1629 = vadd.f32 %v1381, %v1589
        %v1630 = vadd.f32 %v1382, %v1592
        %v1631 = vadd.f32 %v1383, %v1594
        %v1632 = vld [vmem:[%s213 + $0x24] sm:$0xff]
        %v1633 = vld [vmem:[%s213 + $0x2c] sm:$0xff]
        %v1634 = vld [vmem:[%s213 + $0x34] sm:$0xff]
        %v1635 = vld [vmem:[%s213 + $0x3c] sm:$0xff]
        %v1636 = vld [vmem:[%s213 + $0x44] sm:$0xff]
        %v1637 = vld [vmem:[%s213 + $0x4c] sm:$0xff]
        %v1638 = vld [vmem:[%s213 + $0x54] sm:$0xff]
        %v1639 = vld [vmem:[%s213 + $0x5c] sm:$0xff]
        %v1640 = vld [vmem:[%s213 + $0x64] sm:$0xff]
        %v1641 = vld [vmem:[%s213 + $0x6c] sm:$0xff]
        %v1642 = vld [vmem:[%s213 + $0x74] sm:$0xff]
        %v1643 = vld [vmem:[%s213 + $0x7c] sm:$0xff]
        %v1644 = vld [vmem:[%s213 + $0x84] sm:$0xff]
        %v1645 = vld [vmem:[%s213 + $0x8c] sm:$0xff]
        %v1646 = vld [vmem:[%s213 + $0x94] sm:$0xff]
        %v1647 = vld [vmem:[%s213 + $0x9c] sm:$0xff]
        %v1648 = vld [vmem:[%s213 + $0xa4] sm:$0xff]
        %v1649 = vld [vmem:[%s213 + $0xac] sm:$0xff]
        %v1650 = vld [vmem:[%s213 + $0xb4] sm:$0xff]
        %v1651 = vld [vmem:[%s213 + $0xbc] sm:$0xff]
        %v1652 = vld [vmem:[%s213 + $0xc4] sm:$0xff]
        %v1653 = vld [vmem:[%s213 + $0xcc] sm:$0xff]
        %v1654 = vld [vmem:[%s213 + $0xd4] sm:$0xff]
        %v1655 = vld [vmem:[%s213 + $0xdc] sm:$0xff]
        %v1656 = vld [vmem:[%s213 + $0xe4] sm:$0xff]
        %v1657 = vld [vmem:[%s213 + $0xec] sm:$0xff]
        %v1658 = vld [vmem:[%s213 + $0xf4] sm:$0xff]
        %v1659 = vld [vmem:[%s213 + $0xfc] sm:$0xff]
        %v1660 = vld [vmem:[%s213 + $0x104] sm:$0xff]
        %v1661 = vld [vmem:[%s213 + $0x10c] sm:$0xff]
        %v1662 = vld [vmem:[%s213 + $0x114] sm:$0xff]
        %v1663 = vld [vmem:[%s213 + $0x11c] sm:$0xff]
        %v1664 = vld [vmem:[%s213 + $0x124] sm:$0xff]
        %v1665 = vld [vmem:[%s213 + $0x12c] sm:$0xff]
        %v1666 = vld [vmem:[%s213 + $0x134] sm:$0xff]
        %v1667 = vld [vmem:[%s213 + $0x13c] sm:$0xff]
        %v1668 = vpack.c.bf16 %v1633, %v1632
        %v1669 = vpack.c.bf16 %v1635, %v1634
        %v1670 = vpack.c.bf16 %v1637, %v1636
        %v1671 = vpack.c.bf16 %v1639, %v1638
        %v1672 = vpack.c.bf16 %v1641, %v1640
        %v1673 = vpack.c.bf16 %v1643, %v1642
        %v1674 = vpack.c.bf16 %v1645, %v1644
        %v1675 = vpack.c.bf16 %v1647, %v1646
        %v1676 = vpack.c.bf16 %v1649, %v1648
        %v1677 = vpack.c.bf16 %v1651, %v1650
        %v1678 = vpack.c.bf16 %v1653, %v1652
        %v1679 = vpack.c.bf16 %v1655, %v1654
        %v1680 = vpack.c.bf16 %v1657, %v1656
        %v1681 = vpack.c.bf16 %v1659, %v1658
        %v1682 = vpack.c.bf16 %v1661, %v1660
        %v1683 = vpack.c.bf16 %v1663, %v1662
        %v1684 = vpack.c.bf16 %v1665, %v1664
        %v1685 = vpack.c.bf16 %v1667, %v1666
        %s1686 = scalar_lea.vmem %s1, 24
        %v1687 = vld [vmem:[%s1686] sm:$0xf]
        %v1689 = vsel %vm326, %v1668, 0
        %v1692 = vsel %vm326, %v1669, 0
        %v1695 = vsel %vm326, %v1670, 0
        %v1698 = vsel %vm326, %v1671, 0
        %v1701 = vsel %vm326, %v1672, 0
        %v1704 = vsel %vm326, %v1673, 0
        %v1707 = vsel %vm326, %v1674, 0
        %v1710 = vsel %vm326, %v1675, 0
        %v1713 = vsel %vm326, %v1676, 0
        %v1716 = vsel %vm326, %v1677, 0
        %v1719 = vsel %vm326, %v1678, 0
        %v1722 = vsel %vm326, %v1679, 0
        %v1725 = vsel %vm326, %v1680, 0
        %v1728 = vsel %vm326, %v1681, 0
        %v1731 = vsel %vm326, %v1682, 0
        %v1734 = vsel %vm326, %v1683, 0
        %v1737 = vsel %vm326, %v1684, 0
        %v1740 = vsel %vm326, %v1685, 0
        %v1743 = vsel %vm381, %v1687, 0
        %1745 = vmatpush.bf16.msra.mxu0 0
        %1746 = vmatpush.bf16.msra.mxu0 0
        %1747 = vmatpush.bf16.msra.mxu0 0
        %1748 = vmatpush.bf16.msra.mxu0 0
        %1749 = vmatpush.bf16.msra.mxu0 0
        %1750 = vmatpush.bf16.msra.mxu0 0
        %1751 = vmatpush.bf16.msra.mxu0 0
        %1752 = vmatpush.bf16.msra.mxu0 %v1743
        %1753 = vmatmul.bf16.gmra.mxu0 %v1689
        %v1754 = vpop.f32.mrf.mxu0
        %v1755 = vadd.f32 0.0, %v1754
        %v1756 = vpop.f32.mrf.mxu0
        %v1757 = vadd.f32 0.0, %v1756
        %1758 = vmatmul.bf16.gmra.mxu0 %v1692
        %v1759 = vpop.f32.mrf.mxu0
        %v1760 = vadd.f32 0.0, %v1759
        %v1761 = vpop.f32.mrf.mxu0
        %v1762 = vadd.f32 0.0, %v1761
        %1763 = vmatmul.bf16.gmra.mxu0 %v1695
        %v1764 = vpop.f32.mrf.mxu0
        %v1765 = vadd.f32 0.0, %v1764
        %v1766 = vpop.f32.mrf.mxu0
        %v1767 = vadd.f32 0.0, %v1766
        %1768 = vmatmul.bf16.gmra.mxu0 %v1698
        %v1769 = vpop.f32.mrf.mxu0
        %v1770 = vadd.f32 0.0, %v1769
        %v1771 = vpop.f32.mrf.mxu0
        %v1772 = vadd.f32 0.0, %v1771
        %1773 = vmatmul.bf16.gmra.mxu0 %v1701
        %v1774 = vpop.f32.mrf.mxu0
        %v1775 = vadd.f32 0.0, %v1774
        %v1776 = vpop.f32.mrf.mxu0
        %v1777 = vadd.f32 0.0, %v1776
        %1778 = vmatmul.bf16.gmra.mxu0 %v1704
        %v1779 = vpop.f32.mrf.mxu0
        %v1780 = vadd.f32 0.0, %v1779
        %v1781 = vpop.f32.mrf.mxu0
        %v1782 = vadd.f32 0.0, %v1781
        %1783 = vmatmul.bf16.gmra.mxu0 %v1707
        %v1784 = vpop.f32.mrf.mxu0
        %v1785 = vadd.f32 0.0, %v1784
        %v1786 = vpop.f32.mrf.mxu0
        %v1787 = vadd.f32 0.0, %v1786
        %1788 = vmatmul.bf16.gmra.mxu0 %v1710
        %v1789 = vpop.f32.mrf.mxu0
        %v1790 = vadd.f32 0.0, %v1789
        %v1791 = vpop.f32.mrf.mxu0
        %v1792 = vadd.f32 0.0, %v1791
        %1793 = vmatmul.bf16.gmra.mxu0 %v1713
        %v1794 = vpop.f32.mrf.mxu0
        %v1795 = vadd.f32 0.0, %v1794
        %v1796 = vpop.f32.mrf.mxu0
        %v1797 = vadd.f32 0.0, %v1796
        %1798 = vmatmul.bf16.gmra.mxu0 %v1716
        %v1799 = vpop.f32.mrf.mxu0
        %v1800 = vadd.f32 0.0, %v1799
        %v1801 = vpop.f32.mrf.mxu0
        %v1802 = vadd.f32 0.0, %v1801
        %1803 = vmatmul.bf16.gmra.mxu0 %v1719
        %v1804 = vpop.f32.mrf.mxu0
        %v1805 = vadd.f32 0.0, %v1804
        %v1806 = vpop.f32.mrf.mxu0
        %v1807 = vadd.f32 0.0, %v1806
        %1808 = vmatmul.bf16.gmra.mxu0 %v1722
        %v1809 = vpop.f32.mrf.mxu0
        %v1810 = vadd.f32 0.0, %v1809
        %v1811 = vpop.f32.mrf.mxu0
        %v1812 = vadd.f32 0.0, %v1811
        %1813 = vmatmul.bf16.gmra.mxu0 %v1725
        %v1814 = vpop.f32.mrf.mxu0
        %v1815 = vadd.f32 0.0, %v1814
        %v1816 = vpop.f32.mrf.mxu0
        %v1817 = vadd.f32 0.0, %v1816
        %1818 = vmatmul.bf16.gmra.mxu0 %v1728
        %v1819 = vpop.f32.mrf.mxu0
        %v1820 = vadd.f32 0.0, %v1819
        %v1821 = vpop.f32.mrf.mxu0
        %v1822 = vadd.f32 0.0, %v1821
        %1823 = vmatmul.bf16.gmra.mxu0 %v1731
        %v1824 = vpop.f32.mrf.mxu0
        %v1825 = vadd.f32 0.0, %v1824
        %v1826 = vpop.f32.mrf.mxu0
        %v1827 = vadd.f32 0.0, %v1826
        %1828 = vmatmul.bf16.gmra.mxu0 %v1734
        %v1829 = vpop.f32.mrf.mxu0
        %v1830 = vadd.f32 0.0, %v1829
        %v1831 = vpop.f32.mrf.mxu0
        %v1832 = vadd.f32 0.0, %v1831
        %1833 = vmatmul.bf16.gmra.mxu0 %v1737
        %v1834 = vpop.f32.mrf.mxu0
        %v1835 = vadd.f32 0.0, %v1834
        %v1836 = vpop.f32.mrf.mxu0
        %v1837 = vadd.f32 0.0, %v1836
        %1838 = vmatmul.bf16.gmra.mxu0 %v1740
        %v1839 = vpop.f32.mrf.mxu0
        %v1840 = vadd.f32 0.0, %v1839
        %v1841 = vpop.f32.mrf.mxu0
        %v1842 = vadd.f32 0.0, %v1841
        %1843 = vdwg.mxu0
        %v1844 = vadd.f32 %v1596, %v1755
        %v1845 = vadd.f32 %v1597, %v1757
        %v1846 = vadd.f32 %v1598, %v1760
        %v1847 = vadd.f32 %v1599, %v1762
        %v1848 = vadd.f32 %v1600, %v1765
        %v1849 = vadd.f32 %v1601, %v1767
        %v1850 = vadd.f32 %v1602, %v1770
        %v1851 = vadd.f32 %v1603, %v1772
        %v1852 = vadd.f32 %v1604, %v1775
        %v1853 = vadd.f32 %v1605, %v1777
        %v1854 = vadd.f32 %v1606, %v1780
        %v1855 = vadd.f32 %v1607, %v1782
        %v1856 = vadd.f32 %v1608, %v1785
        %v1857 = vadd.f32 %v1609, %v1787
        %v1858 = vadd.f32 %v1610, %v1790
        %v1859 = vadd.f32 %v1611, %v1792
        %v1860 = vadd.f32 %v1612, %v1795
        %v1861 = vadd.f32 %v1613, %v1797
        %v1862 = vadd.f32 %v1614, %v1800
        %v1863 = vadd.f32 %v1615, %v1802
        %v1864 = vadd.f32 %v1616, %v1805
        %v1865 = vadd.f32 %v1617, %v1807
        %v1866 = vadd.f32 %v1618, %v1810
        %v1867 = vadd.f32 %v1619, %v1812
        %v1868 = vadd.f32 %v1620, %v1815
        %v1869 = vadd.f32 %v1621, %v1817
        %v1870 = vadd.f32 %v1622, %v1820
        %v1871 = vadd.f32 %v1623, %v1822
        %v1872 = vadd.f32 %v1624, %v1825
        %v1873 = vadd.f32 %v1625, %v1827
        %v1874 = vadd.f32 %v1626, %v1830
        %v1875 = vadd.f32 %v1627, %v1832
        %v1876 = vadd.f32 %v1628, %v1835
        %v1877 = vadd.f32 %v1629, %v1837
        %v1878 = vadd.f32 %v1630, %v1840
        %v1879 = vadd.f32 %v1631, %v1842
        %v1880 = vld [vmem:[%s213 + $0x25] sm:$0xff]
        %v1881 = vld [vmem:[%s213 + $0x2d] sm:$0xff]
        %v1882 = vld [vmem:[%s213 + $0x35] sm:$0xff]
        %v1883 = vld [vmem:[%s213 + $0x3d] sm:$0xff]
        %v1884 = vld [vmem:[%s213 + $0x45] sm:$0xff]
        %v1885 = vld [vmem:[%s213 + $0x4d] sm:$0xff]
        %v1886 = vld [vmem:[%s213 + $0x55] sm:$0xff]
        %v1887 = vld [vmem:[%s213 + $0x5d] sm:$0xff]
        %v1888 = vld [vmem:[%s213 + $0x65] sm:$0xff]
        %v1889 = vld [vmem:[%s213 + $0x6d] sm:$0xff]
        %v1890 = vld [vmem:[%s213 + $0x75] sm:$0xff]
        %v1891 = vld [vmem:[%s213 + $0x7d] sm:$0xff]
        %v1892 = vld [vmem:[%s213 + $0x85] sm:$0xff]
        %v1893 = vld [vmem:[%s213 + $0x8d] sm:$0xff]
        %v1894 = vld [vmem:[%s213 + $0x95] sm:$0xff]
        %v1895 = vld [vmem:[%s213 + $0x9d] sm:$0xff]
        %v1896 = vld [vmem:[%s213 + $0xa5] sm:$0xff]
        %v1897 = vld [vmem:[%s213 + $0xad] sm:$0xff]
        %v1898 = vld [vmem:[%s213 + $0xb5] sm:$0xff]
        %v1899 = vld [vmem:[%s213 + $0xbd] sm:$0xff]
        %v1900 = vld [vmem:[%s213 + $0xc5] sm:$0xff]
        %v1901 = vld [vmem:[%s213 + $0xcd] sm:$0xff]
        %v1902 = vld [vmem:[%s213 + $0xd5] sm:$0xff]
        %v1903 = vld [vmem:[%s213 + $0xdd] sm:$0xff]
        %v1904 = vld [vmem:[%s213 + $0xe5] sm:$0xff]
        %v1905 = vld [vmem:[%s213 + $0xed] sm:$0xff]
        %v1906 = vld [vmem:[%s213 + $0xf5] sm:$0xff]
        %v1907 = vld [vmem:[%s213 + $0xfd] sm:$0xff]
        %v1908 = vld [vmem:[%s213 + $0x105] sm:$0xff]
        %v1909 = vld [vmem:[%s213 + $0x10d] sm:$0xff]
        %v1910 = vld [vmem:[%s213 + $0x115] sm:$0xff]
        %v1911 = vld [vmem:[%s213 + $0x11d] sm:$0xff]
        %v1912 = vld [vmem:[%s213 + $0x125] sm:$0xff]
        %v1913 = vld [vmem:[%s213 + $0x12d] sm:$0xff]
        %v1914 = vld [vmem:[%s213 + $0x135] sm:$0xff]
        %v1915 = vld [vmem:[%s213 + $0x13d] sm:$0xff]
        %v1916 = vpack.c.bf16 %v1881, %v1880
        %v1917 = vpack.c.bf16 %v1883, %v1882
        %v1918 = vpack.c.bf16 %v1885, %v1884
        %v1919 = vpack.c.bf16 %v1887, %v1886
        %v1920 = vpack.c.bf16 %v1889, %v1888
        %v1921 = vpack.c.bf16 %v1891, %v1890
        %v1922 = vpack.c.bf16 %v1893, %v1892
        %v1923 = vpack.c.bf16 %v1895, %v1894
        %v1924 = vpack.c.bf16 %v1897, %v1896
        %v1925 = vpack.c.bf16 %v1899, %v1898
        %v1926 = vpack.c.bf16 %v1901, %v1900
        %v1927 = vpack.c.bf16 %v1903, %v1902
        %v1928 = vpack.c.bf16 %v1905, %v1904
        %v1929 = vpack.c.bf16 %v1907, %v1906
        %v1930 = vpack.c.bf16 %v1909, %v1908
        %v1931 = vpack.c.bf16 %v1911, %v1910
        %v1932 = vpack.c.bf16 %v1913, %v1912
        %v1933 = vpack.c.bf16 %v1915, %v1914
        %s1934 = scalar_lea.vmem %s1, 28
        %v1935 = vld [vmem:[%s1934] sm:$0xf]
        %v1937 = vsel %vm326, %v1916, 0
        %v1940 = vsel %vm326, %v1917, 0
        %v1943 = vsel %vm326, %v1918, 0
        %v1946 = vsel %vm326, %v1919, 0
        %v1949 = vsel %vm326, %v1920, 0
        %v1952 = vsel %vm326, %v1921, 0
        %v1955 = vsel %vm326, %v1922, 0
        %v1958 = vsel %vm326, %v1923, 0
        %v1961 = vsel %vm326, %v1924, 0
        %v1964 = vsel %vm326, %v1925, 0
        %v1967 = vsel %vm326, %v1926, 0
        %v1970 = vsel %vm326, %v1927, 0
        %v1973 = vsel %vm326, %v1928, 0
        %v1976 = vsel %vm326, %v1929, 0
        %v1979 = vsel %vm326, %v1930, 0
        %v1982 = vsel %vm326, %v1931, 0
        %v1985 = vsel %vm326, %v1932, 0
        %v1988 = vsel %vm326, %v1933, 0
        %v1991 = vsel %vm381, %v1935, 0
        %1993 = vmatpush.bf16.msra.mxu0 0
        %1994 = vmatpush.bf16.msra.mxu0 0
        %1995 = vmatpush.bf16.msra.mxu0 0
        %1996 = vmatpush.bf16.msra.mxu0 0
        %1997 = vmatpush.bf16.msra.mxu0 0
        %1998 = vmatpush.bf16.msra.mxu0 0
        %1999 = vmatpush.bf16.msra.mxu0 0
        %2000 = vmatpush.bf16.msra.mxu0 %v1991
        %2001 = vmatmul.bf16.gmra.mxu0 %v1937
        %v2002 = vpop.f32.mrf.mxu0
        %v2003 = vadd.f32 0.0, %v2002
        %v2004 = vpop.f32.mrf.mxu0
        %v2005 = vadd.f32 0.0, %v2004
        %2006 = vmatmul.bf16.gmra.mxu0 %v1940
        %v2007 = vpop.f32.mrf.mxu0
        %v2008 = vadd.f32 0.0, %v2007
        %v2009 = vpop.f32.mrf.mxu0
        %v2010 = vadd.f32 0.0, %v2009
        %2011 = vmatmul.bf16.gmra.mxu0 %v1943
        %v2012 = vpop.f32.mrf.mxu0
        %v2013 = vadd.f32 0.0, %v2012
        %v2014 = vpop.f32.mrf.mxu0
        %v2015 = vadd.f32 0.0, %v2014
        %2016 = vmatmul.bf16.gmra.mxu0 %v1946
        %v2017 = vpop.f32.mrf.mxu0
        %v2018 = vadd.f32 0.0, %v2017
        %v2019 = vpop.f32.mrf.mxu0
        %v2020 = vadd.f32 0.0, %v2019
        %2021 = vmatmul.bf16.gmra.mxu0 %v1949
        %v2022 = vpop.f32.mrf.mxu0
        %v2023 = vadd.f32 0.0, %v2022
        %v2024 = vpop.f32.mrf.mxu0
        %v2025 = vadd.f32 0.0, %v2024
        %2026 = vmatmul.bf16.gmra.mxu0 %v1952
        %v2027 = vpop.f32.mrf.mxu0
        %v2028 = vadd.f32 0.0, %v2027
        %v2029 = vpop.f32.mrf.mxu0
        %v2030 = vadd.f32 0.0, %v2029
        %2031 = vmatmul.bf16.gmra.mxu0 %v1955
        %v2032 = vpop.f32.mrf.mxu0
        %v2033 = vadd.f32 0.0, %v2032
        %v2034 = vpop.f32.mrf.mxu0
        %v2035 = vadd.f32 0.0, %v2034
        %2036 = vmatmul.bf16.gmra.mxu0 %v1958
        %v2037 = vpop.f32.mrf.mxu0
        %v2038 = vadd.f32 0.0, %v2037
        %v2039 = vpop.f32.mrf.mxu0
        %v2040 = vadd.f32 0.0, %v2039
        %2041 = vmatmul.bf16.gmra.mxu0 %v1961
        %v2042 = vpop.f32.mrf.mxu0
        %v2043 = vadd.f32 0.0, %v2042
        %v2044 = vpop.f32.mrf.mxu0
        %v2045 = vadd.f32 0.0, %v2044
        %2046 = vmatmul.bf16.gmra.mxu0 %v1964
        %v2047 = vpop.f32.mrf.mxu0
        %v2048 = vadd.f32 0.0, %v2047
        %v2049 = vpop.f32.mrf.mxu0
        %v2050 = vadd.f32 0.0, %v2049
        %2051 = vmatmul.bf16.gmra.mxu0 %v1967
        %v2052 = vpop.f32.mrf.mxu0
        %v2053 = vadd.f32 0.0, %v2052
        %v2054 = vpop.f32.mrf.mxu0
        %v2055 = vadd.f32 0.0, %v2054
        %2056 = vmatmul.bf16.gmra.mxu0 %v1970
        %v2057 = vpop.f32.mrf.mxu0
        %v2058 = vadd.f32 0.0, %v2057
        %v2059 = vpop.f32.mrf.mxu0
        %v2060 = vadd.f32 0.0, %v2059
        %2061 = vmatmul.bf16.gmra.mxu0 %v1973
        %v2062 = vpop.f32.mrf.mxu0
        %v2063 = vadd.f32 0.0, %v2062
        %v2064 = vpop.f32.mrf.mxu0
        %v2065 = vadd.f32 0.0, %v2064
        %2066 = vmatmul.bf16.gmra.mxu0 %v1976
        %v2067 = vpop.f32.mrf.mxu0
        %v2068 = vadd.f32 0.0, %v2067
        %v2069 = vpop.f32.mrf.mxu0
        %v2070 = vadd.f32 0.0, %v2069
        %2071 = vmatmul.bf16.gmra.mxu0 %v1979
        %v2072 = vpop.f32.mrf.mxu0
        %v2073 = vadd.f32 0.0, %v2072
        %v2074 = vpop.f32.mrf.mxu0
        %v2075 = vadd.f32 0.0, %v2074
        %2076 = vmatmul.bf16.gmra.mxu0 %v1982
        %v2077 = vpop.f32.mrf.mxu0
        %v2078 = vadd.f32 0.0, %v2077
        %v2079 = vpop.f32.mrf.mxu0
        %v2080 = vadd.f32 0.0, %v2079
        %2081 = vmatmul.bf16.gmra.mxu0 %v1985
        %v2082 = vpop.f32.mrf.mxu0
        %v2083 = vadd.f32 0.0, %v2082
        %v2084 = vpop.f32.mrf.mxu0
        %v2085 = vadd.f32 0.0, %v2084
        %2086 = vmatmul.bf16.gmra.mxu0 %v1988
        %v2087 = vpop.f32.mrf.mxu0
        %v2088 = vadd.f32 0.0, %v2087
        %v2089 = vpop.f32.mrf.mxu0
        %v2090 = vadd.f32 0.0, %v2089
        %2091 = vdwg.mxu0
        %v2092 = vadd.f32 %v1844, %v2003
        %v2093 = vadd.f32 %v1845, %v2005
        %v2094 = vadd.f32 %v1846, %v2008
        %v2095 = vadd.f32 %v1847, %v2010
        %v2096 = vadd.f32 %v1848, %v2013
        %v2097 = vadd.f32 %v1849, %v2015
        %v2098 = vadd.f32 %v1850, %v2018
        %v2099 = vadd.f32 %v1851, %v2020
        %v2100 = vadd.f32 %v1852, %v2023
        %v2101 = vadd.f32 %v1853, %v2025
        %v2102 = vadd.f32 %v1854, %v2028
        %v2103 = vadd.f32 %v1855, %v2030
        %v2104 = vadd.f32 %v1856, %v2033
        %v2105 = vadd.f32 %v1857, %v2035
        %v2106 = vadd.f32 %v1858, %v2038
        %v2107 = vadd.f32 %v1859, %v2040
        %v2108 = vadd.f32 %v1860, %v2043
        %v2109 = vadd.f32 %v1861, %v2045
        %v2110 = vadd.f32 %v1862, %v2048
        %v2111 = vadd.f32 %v1863, %v2050
        %v2112 = vadd.f32 %v1864, %v2053
        %v2113 = vadd.f32 %v1865, %v2055
        %v2114 = vadd.f32 %v1866, %v2058
        %v2115 = vadd.f32 %v1867, %v2060
        %v2116 = vadd.f32 %v1868, %v2063
        %v2117 = vadd.f32 %v1869, %v2065
        %v2118 = vadd.f32 %v1870, %v2068
        %v2119 = vadd.f32 %v1871, %v2070
        %v2120 = vadd.f32 %v1872, %v2073
        %v2121 = vadd.f32 %v1873, %v2075
        %v2122 = vadd.f32 %v1874, %v2078
        %v2123 = vadd.f32 %v1875, %v2080
        %v2124 = vadd.f32 %v1876, %v2083
        %v2125 = vadd.f32 %v1877, %v2085
        %v2126 = vadd.f32 %v1878, %v2088
        %v2127 = vadd.f32 %v1879, %v2090
        %v2128 = vld [vmem:[%s213 + $0x26] sm:$0xff]
        %v2129 = vld [vmem:[%s213 + $0x2e] sm:$0xff]
        %v2130 = vld [vmem:[%s213 + $0x36] sm:$0xff]
        %v2131 = vld [vmem:[%s213 + $0x3e] sm:$0xff]
        %v2132 = vld [vmem:[%s213 + $0x46] sm:$0xff]
        %v2133 = vld [vmem:[%s213 + $0x4e] sm:$0xff]
        %v2134 = vld [vmem:[%s213 + $0x56] sm:$0xff]
        %v2135 = vld [vmem:[%s213 + $0x5e] sm:$0xff]
        %v2136 = vld [vmem:[%s213 + $0x66] sm:$0xff]
        %v2137 = vld [vmem:[%s213 + $0x6e] sm:$0xff]
        %v2138 = vld [vmem:[%s213 + $0x76] sm:$0xff]
        %v2139 = vld [vmem:[%s213 + $0x7e] sm:$0xff]
        %v2140 = vld [vmem:[%s213 + $0x86] sm:$0xff]
        %v2141 = vld [vmem:[%s213 + $0x8e] sm:$0xff]
        %v2142 = vld [vmem:[%s213 + $0x96] sm:$0xff]
        %v2143 = vld [vmem:[%s213 + $0x9e] sm:$0xff]
        %v2144 = vld [vmem:[%s213 + $0xa6] sm:$0xff]
        %v2145 = vld [vmem:[%s213 + $0xae] sm:$0xff]
        %v2146 = vld [vmem:[%s213 + $0xb6] sm:$0xff]
        %v2147 = vld [vmem:[%s213 + $0xbe] sm:$0xff]
        %v2148 = vld [vmem:[%s213 + $0xc6] sm:$0xff]
        %v2149 = vld [vmem:[%s213 + $0xce] sm:$0xff]
        %v2150 = vld [vmem:[%s213 + $0xd6] sm:$0xff]
        %v2151 = vld [vmem:[%s213 + $0xde] sm:$0xff]
        %v2152 = vld [vmem:[%s213 + $0xe6] sm:$0xff]
        %v2153 = vld [vmem:[%s213 + $0xee] sm:$0xff]
        %v2154 = vld [vmem:[%s213 + $0xf6] sm:$0xff]
        %v2155 = vld [vmem:[%s213 + $0xfe] sm:$0xff]
        %v2156 = vld [vmem:[%s213 + $0x106] sm:$0xff]
        %v2157 = vld [vmem:[%s213 + $0x10e] sm:$0xff]
        %v2158 = vld [vmem:[%s213 + $0x116] sm:$0xff]
        %v2159 = vld [vmem:[%s213 + $0x11e] sm:$0xff]
        %v2160 = vld [vmem:[%s213 + $0x126] sm:$0xff]
        %v2161 = vld [vmem:[%s213 + $0x12e] sm:$0xff]
        %v2162 = vld [vmem:[%s213 + $0x136] sm:$0xff]
        %v2163 = vld [vmem:[%s213 + $0x13e] sm:$0xff]
        %v2164 = vpack.c.bf16 %v2129, %v2128
        %v2165 = vpack.c.bf16 %v2131, %v2130
        %v2166 = vpack.c.bf16 %v2133, %v2132
        %v2167 = vpack.c.bf16 %v2135, %v2134
        %v2168 = vpack.c.bf16 %v2137, %v2136
        %v2169 = vpack.c.bf16 %v2139, %v2138
        %v2170 = vpack.c.bf16 %v2141, %v2140
        %v2171 = vpack.c.bf16 %v2143, %v2142
        %v2172 = vpack.c.bf16 %v2145, %v2144
        %v2173 = vpack.c.bf16 %v2147, %v2146
        %v2174 = vpack.c.bf16 %v2149, %v2148
        %v2175 = vpack.c.bf16 %v2151, %v2150
        %v2176 = vpack.c.bf16 %v2153, %v2152
        %v2177 = vpack.c.bf16 %v2155, %v2154
        %v2178 = vpack.c.bf16 %v2157, %v2156
        %v2179 = vpack.c.bf16 %v2159, %v2158
        %v2180 = vpack.c.bf16 %v2161, %v2160
        %v2181 = vpack.c.bf16 %v2163, %v2162
        %s2182 = scalar_lea.vmem %s1, 32
        %v2183 = vld [vmem:[%s2182] sm:$0xf]
        %v2185 = vsel %vm326, %v2164, 0
        %v2188 = vsel %vm326, %v2165, 0
        %v2191 = vsel %vm326, %v2166, 0
        %v2194 = vsel %vm326, %v2167, 0
        %v2197 = vsel %vm326, %v2168, 0
        %v2200 = vsel %vm326, %v2169, 0
        %v2203 = vsel %vm326, %v2170, 0
        %v2206 = vsel %vm326, %v2171, 0
        %v2209 = vsel %vm326, %v2172, 0
        %v2212 = vsel %vm326, %v2173, 0
        %v2215 = vsel %vm326, %v2174, 0
        %v2218 = vsel %vm326, %v2175, 0
        %v2221 = vsel %vm326, %v2176, 0
        %v2224 = vsel %vm326, %v2177, 0
        %v2227 = vsel %vm326, %v2178, 0
        %v2230 = vsel %vm326, %v2179, 0
        %v2233 = vsel %vm326, %v2180, 0
        %v2236 = vsel %vm326, %v2181, 0
        %v2239 = vsel %vm381, %v2183, 0
        %2241 = vmatpush.bf16.msra.mxu0 0
        %2242 = vmatpush.bf16.msra.mxu0 0
        %2243 = vmatpush.bf16.msra.mxu0 0
        %2244 = vmatpush.bf16.msra.mxu0 0
        %2245 = vmatpush.bf16.msra.mxu0 0
        %2246 = vmatpush.bf16.msra.mxu0 0
        %2247 = vmatpush.bf16.msra.mxu0 0
        %2248 = vmatpush.bf16.msra.mxu0 %v2239
        %2249 = vmatmul.bf16.gmra.mxu0 %v2185
        %v2250 = vpop.f32.mrf.mxu0
        %v2251 = vadd.f32 0.0, %v2250
        %v2252 = vpop.f32.mrf.mxu0
        %v2253 = vadd.f32 0.0, %v2252
        %2254 = vmatmul.bf16.gmra.mxu0 %v2188
        %v2255 = vpop.f32.mrf.mxu0
        %v2256 = vadd.f32 0.0, %v2255
        %v2257 = vpop.f32.mrf.mxu0
        %v2258 = vadd.f32 0.0, %v2257
        %2259 = vmatmul.bf16.gmra.mxu0 %v2191
        %v2260 = vpop.f32.mrf.mxu0
        %v2261 = vadd.f32 0.0, %v2260
        %v2262 = vpop.f32.mrf.mxu0
        %v2263 = vadd.f32 0.0, %v2262
        %2264 = vmatmul.bf16.gmra.mxu0 %v2194
        %v2265 = vpop.f32.mrf.mxu0
        %v2266 = vadd.f32 0.0, %v2265
        %v2267 = vpop.f32.mrf.mxu0
        %v2268 = vadd.f32 0.0, %v2267
        %2269 = vmatmul.bf16.gmra.mxu0 %v2197
        %v2270 = vpop.f32.mrf.mxu0
        %v2271 = vadd.f32 0.0, %v2270
        %v2272 = vpop.f32.mrf.mxu0
        %v2273 = vadd.f32 0.0, %v2272
        %2274 = vmatmul.bf16.gmra.mxu0 %v2200
        %v2275 = vpop.f32.mrf.mxu0
        %v2276 = vadd.f32 0.0, %v2275
        %v2277 = vpop.f32.mrf.mxu0
        %v2278 = vadd.f32 0.0, %v2277
        %2279 = vmatmul.bf16.gmra.mxu0 %v2203
        %v2280 = vpop.f32.mrf.mxu0
        %v2281 = vadd.f32 0.0, %v2280
        %v2282 = vpop.f32.mrf.mxu0
        %v2283 = vadd.f32 0.0, %v2282
        %2284 = vmatmul.bf16.gmra.mxu0 %v2206
        %v2285 = vpop.f32.mrf.mxu0
        %v2286 = vadd.f32 0.0, %v2285
        %v2287 = vpop.f32.mrf.mxu0
        %v2288 = vadd.f32 0.0, %v2287
        %2289 = vmatmul.bf16.gmra.mxu0 %v2209
        %v2290 = vpop.f32.mrf.mxu0
        %v2291 = vadd.f32 0.0, %v2290
        %v2292 = vpop.f32.mrf.mxu0
        %v2293 = vadd.f32 0.0, %v2292
        %2294 = vmatmul.bf16.gmra.mxu0 %v2212
        %v2295 = vpop.f32.mrf.mxu0
        %v2296 = vadd.f32 0.0, %v2295
        %v2297 = vpop.f32.mrf.mxu0
        %v2298 = vadd.f32 0.0, %v2297
        %2299 = vmatmul.bf16.gmra.mxu0 %v2215
        %v2300 = vpop.f32.mrf.mxu0
        %v2301 = vadd.f32 0.0, %v2300
        %v2302 = vpop.f32.mrf.mxu0
        %v2303 = vadd.f32 0.0, %v2302
        %2304 = vmatmul.bf16.gmra.mxu0 %v2218
        %v2305 = vpop.f32.mrf.mxu0
        %v2306 = vadd.f32 0.0, %v2305
        %v2307 = vpop.f32.mrf.mxu0
        %v2308 = vadd.f32 0.0, %v2307
        %2309 = vmatmul.bf16.gmra.mxu0 %v2221
        %v2310 = vpop.f32.mrf.mxu0
        %v2311 = vadd.f32 0.0, %v2310
        %v2312 = vpop.f32.mrf.mxu0
        %v2313 = vadd.f32 0.0, %v2312
        %2314 = vmatmul.bf16.gmra.mxu0 %v2224
        %v2315 = vpop.f32.mrf.mxu0
        %v2316 = vadd.f32 0.0, %v2315
        %v2317 = vpop.f32.mrf.mxu0
        %v2318 = vadd.f32 0.0, %v2317
        %2319 = vmatmul.bf16.gmra.mxu0 %v2227
        %v2320 = vpop.f32.mrf.mxu0
        %v2321 = vadd.f32 0.0, %v2320
        %v2322 = vpop.f32.mrf.mxu0
        %v2323 = vadd.f32 0.0, %v2322
        %2324 = vmatmul.bf16.gmra.mxu0 %v2230
        %v2325 = vpop.f32.mrf.mxu0
        %v2326 = vadd.f32 0.0, %v2325
        %v2327 = vpop.f32.mrf.mxu0
        %v2328 = vadd.f32 0.0, %v2327
        %2329 = vmatmul.bf16.gmra.mxu0 %v2233
        %v2330 = vpop.f32.mrf.mxu0
        %v2331 = vadd.f32 0.0, %v2330
        %v2332 = vpop.f32.mrf.mxu0
        %v2333 = vadd.f32 0.0, %v2332
        %2334 = vmatmul.bf16.gmra.mxu0 %v2236
        %v2335 = vpop.f32.mrf.mxu0
        %v2336 = vadd.f32 0.0, %v2335
        %v2337 = vpop.f32.mrf.mxu0
        %v2338 = vadd.f32 0.0, %v2337
        %2339 = vdwg.mxu0
        %v2340 = vadd.f32 %v2092, %v2251
        %v2341 = vadd.f32 %v2093, %v2253
        %v2342 = vadd.f32 %v2094, %v2256
        %v2343 = vadd.f32 %v2095, %v2258
        %v2344 = vadd.f32 %v2096, %v2261
        %v2345 = vadd.f32 %v2097, %v2263
        %v2346 = vadd.f32 %v2098, %v2266
        %v2347 = vadd.f32 %v2099, %v2268
        %v2348 = vadd.f32 %v2100, %v2271
        %v2349 = vadd.f32 %v2101, %v2273
        %v2350 = vadd.f32 %v2102, %v2276
        %v2351 = vadd.f32 %v2103, %v2278
        %v2352 = vadd.f32 %v2104, %v2281
        %v2353 = vadd.f32 %v2105, %v2283
        %v2354 = vadd.f32 %v2106, %v2286
        %v2355 = vadd.f32 %v2107, %v2288
        %v2356 = vadd.f32 %v2108, %v2291
        %v2357 = vadd.f32 %v2109, %v2293
        %v2358 = vadd.f32 %v2110, %v2296
        %v2359 = vadd.f32 %v2111, %v2298
        %v2360 = vadd.f32 %v2112, %v2301
        %v2361 = vadd.f32 %v2113, %v2303
        %v2362 = vadd.f32 %v2114, %v2306
        %v2363 = vadd.f32 %v2115, %v2308
        %v2364 = vadd.f32 %v2116, %v2311
        %v2365 = vadd.f32 %v2117, %v2313
        %v2366 = vadd.f32 %v2118, %v2316
        %v2367 = vadd.f32 %v2119, %v2318
        %v2368 = vadd.f32 %v2120, %v2321
        %v2369 = vadd.f32 %v2121, %v2323
        %v2370 = vadd.f32 %v2122, %v2326
        %v2371 = vadd.f32 %v2123, %v2328
        %v2372 = vadd.f32 %v2124, %v2331
        %v2373 = vadd.f32 %v2125, %v2333
        %v2374 = vadd.f32 %v2126, %v2336
        %v2375 = vadd.f32 %v2127, %v2338
        %2376 = vst [vmem:[%s194] sm:$0xff] %v2340
        %2377 = vst [vmem:[%s194 + $0x8] sm:$0xff] %v2341
        %2378 = vst [vmem:[%s194 + $0x10] sm:$0xff] %v2342
        %2379 = vst [vmem:[%s194 + $0x18] sm:$0xff] %v2343
        %2380 = vst [vmem:[%s194 + $0x20] sm:$0xff] %v2344
        %2381 = vst [vmem:[%s194 + $0x28] sm:$0xff] %v2345
        %2382 = vst [vmem:[%s194 + $0x30] sm:$0xff] %v2346
        %2383 = vst [vmem:[%s194 + $0x38] sm:$0xff] %v2347
        %2384 = vst [vmem:[%s194 + $0x40] sm:$0xff] %v2348
        %2385 = vst [vmem:[%s194 + $0x48] sm:$0xff] %v2349
        %2386 = vst [vmem:[%s194 + $0x50] sm:$0xff] %v2350
        %2387 = vst [vmem:[%s194 + $0x58] sm:$0xff] %v2351
        %2388 = vst [vmem:[%s194 + $0x60] sm:$0xff] %v2352
        %2389 = vst [vmem:[%s194 + $0x68] sm:$0xff] %v2353
        %2390 = vst [vmem:[%s194 + $0x70] sm:$0xff] %v2354
        %2391 = vst [vmem:[%s194 + $0x78] sm:$0xff] %v2355
        %2392 = vst [vmem:[%s194 + $0x80] sm:$0xff] %v2356
        %2393 = vst [vmem:[%s194 + $0x88] sm:$0xff] %v2357
        %2394 = vst [vmem:[%s194 + $0x90] sm:$0xff] %v2358
        %2395 = vst [vmem:[%s194 + $0x98] sm:$0xff] %v2359
        %2396 = vst [vmem:[%s194 + $0xa0] sm:$0xff] %v2360
        %2397 = vst [vmem:[%s194 + $0xa8] sm:$0xff] %v2361
        %2398 = vst [vmem:[%s194 + $0xb0] sm:$0xff] %v2362
        %2399 = vst [vmem:[%s194 + $0xb8] sm:$0xff] %v2363
        %2400 = vst [vmem:[%s194 + $0xc0] sm:$0xff] %v2364
        %2401 = vst [vmem:[%s194 + $0xc8] sm:$0xff] %v2365
        %2402 = vst [vmem:[%s194 + $0xd0] sm:$0xff] %v2366
        %2403 = vst [vmem:[%s194 + $0xd8] sm:$0xff] %v2367
        %2404 = vst [vmem:[%s194 + $0xe0] sm:$0xff] %v2368
        %2405 = vst [vmem:[%s194 + $0xe8] sm:$0xff] %v2369
        %2406 = vst [vmem:[%s194 + $0xf0] sm:$0xff] %v2370
        %2407 = vst [vmem:[%s194 + $0xf8] sm:$0xff] %v2371
        %2408 = vst [vmem:[%s194 + $0x100] sm:$0xff] %v2372
        %2409 = vst [vmem:[%s194 + $0x108] sm:$0xff] %v2373
        %2410 = vst [vmem:[%s194 + $0x110] sm:$0xff] %v2374
        %2411 = vst [vmem:[%s194 + $0x118] sm:$0xff] %v2375
        %v2412 = vlaneseq
        %v2413 = vshrl.u32 %v2412, 7
        %v2414 = vadd.s32 %v2413, 8
        %v2415 = vadd.s32 %v2413, 16
        %v2416 = vadd.s32 %v2413, 24
        %v2417 = vadd.s32 %v2413, 32
        %v2418 = vadd.s32 %v2413, 40
        %v2419 = vadd.s32 %v2413, 48
        %v2420 = vadd.s32 %v2413, 56
        %v2421 = vadd.s32 %v2413, 64
        %v2422 = vadd.s32 %v2413, 72
        %v2423 = vadd.s32 %v2413, 80
        %v2424 = vadd.s32 %v2413, 88
        %v2425 = vadd.s32 %v2413, 96
        %v2426 = vadd.s32 %v2413, 104
        %v2427 = vadd.s32 %v2413, 112
        %v2428 = vadd.s32 %v2413, 120
        %v2429 = vadd.s32 %v2413, 128
        %v2430 = vadd.s32 %v2413, 136
        %v2431 = vadd.s32 %v2413, 144
        %v2432 = vadd.s32 %v2413, 152
        %v2433 = vadd.s32 %v2413, 160
        %v2434 = vadd.s32 %v2413, 168
        %v2435 = vadd.s32 %v2413, 176
        %v2436 = vadd.s32 %v2413, 184
        %v2437 = vadd.s32 %v2413, 192
        %v2438 = vadd.s32 %v2413, 200
        %v2439 = vadd.s32 %v2413, 208
        %v2440 = vadd.s32 %v2413, 216
        %v2441 = vadd.s32 %v2413, 224
        %v2442 = vadd.s32 %v2413, 232
        %v2443 = vadd.s32 %v2413, 240
        %v2444 = vadd.s32 %v2413, 248
        %v2445 = vadd.s32 %v2413, 256
        %v2446 = vadd.s32 %v2413, 264
        %v2447 = vadd.s32 %v2413, 272
        %v2448 = vadd.s32 %v2413, 280
        %vm2449 = vcmp.lt.s32.totalorder %v2413, 0
        %v2450 = vsub.s32 0, %v2413
        %v2451 = vsel %vm2449, %v2450, %v2413
        %v2452 = vand.u32 %v2451, 65535
        %v2453 = vshrl.u32 %v2451, 16
        %v2455 = vmul.u32 %v2452, 14564
        %v2456 = vmul.u32 %v2452, 58254
        %v2457 = vmul.u32 %v2453, 14564
        %v2458 = vmul.u32 %v2453, 58254
        %v2459 = vshll.u32 %v2456, 16
        %v2460 = vshrl.u32 %v2456, 16
        %v2461 = vshll.u32 %v2457, 16
        %v2462 = vshrl.u32 %v2457, 16
        %vm2463 = vc.u32 %v2455, %v2459
        %v2464 = vsel %vm2463, 1, 0
        %v2465 = vadd.s32 %v2455, %v2459
        %v2466 = vadd.s32 %v2458, %v2464
        %vm2467 = vc.u32 %v2465, %v2461
        %v2468 = vsel %vm2467, 1, 0
        %v2469 = vadd.s32 %v2465, %v2461
        %v2470 = vadd.s32 %v2466, %v2468
        %v2471 = vadd.s32 %v2470, %v2460
        %v2472 = vadd.s32 %v2471, %v2462
        %v2473 = vshrl.u32 %v2472, 4
        %v2474 = vmul.u32 %v2473, 18
        %v2475 = vsub.s32 %v2451, %v2474
        %v2476 = vsub.s32 0, %v2475
        %v2477 = vsel %vm2449, %v2476, %v2475
        %vm2478 = vcmp.lt.s32.totalorder %v2414, 0
        %v2479 = vsub.s32 0, %v2414
        %v2480 = vsel %vm2478, %v2479, %v2414
        %v2481 = vand.u32 %v2480, 65535
        %v2482 = vshrl.u32 %v2480, 16
        %v2484 = vmul.u32 %v2481, 14564
        %v2485 = vmul.u32 %v2481, 58254
        %v2486 = vmul.u32 %v2482, 14564
        %v2487 = vmul.u32 %v2482, 58254
        %v2488 = vshll.u32 %v2485, 16
        %v2489 = vshrl.u32 %v2485, 16
        %v2490 = vshll.u32 %v2486, 16
        %v2491 = vshrl.u32 %v2486, 16
        %vm2492 = vc.u32 %v2484, %v2488
        %v2493 = vsel %vm2492, 1, 0
        %v2494 = vadd.s32 %v2484, %v2488
        %v2495 = vadd.s32 %v2487, %v2493
        %vm2496 = vc.u32 %v2494, %v2490
        %v2497 = vsel %vm2496, 1, 0
        %v2498 = vadd.s32 %v2494, %v2490
        %v2499 = vadd.s32 %v2495, %v2497
        %v2500 = vadd.s32 %v2499, %v2489
        %v2501 = vadd.s32 %v2500, %v2491
        %v2502 = vshrl.u32 %v2501, 4
        %v2503 = vmul.u32 %v2502, 18
        %v2504 = vsub.s32 %v2480, %v2503
        %v2505 = vsub.s32 0, %v2504
        %v2506 = vsel %vm2478, %v2505, %v2504
        %vm2507 = vcmp.lt.s32.totalorder %v2415, 0
        %v2508 = vsub.s32 0, %v2415
        %v2509 = vsel %vm2507, %v2508, %v2415
        %v2510 = vand.u32 %v2509, 65535
        %v2511 = vshrl.u32 %v2509, 16
        %v2513 = vmul.u32 %v2510, 14564
        %v2514 = vmul.u32 %v2510, 58254
        %v2515 = vmul.u32 %v2511, 14564
        %v2516 = vmul.u32 %v2511, 58254
        %v2517 = vshll.u32 %v2514, 16
        %v2518 = vshrl.u32 %v2514, 16
        %v2519 = vshll.u32 %v2515, 16
        %v2520 = vshrl.u32 %v2515, 16
        %vm2521 = vc.u32 %v2513, %v2517
        %v2522 = vsel %vm2521, 1, 0
        %v2523 = vadd.s32 %v2513, %v2517
        %v2524 = vadd.s32 %v2516, %v2522
        %vm2525 = vc.u32 %v2523, %v2519
        %v2526 = vsel %vm2525, 1, 0
        %v2527 = vadd.s32 %v2523, %v2519
        %v2528 = vadd.s32 %v2524, %v2526
        %v2529 = vadd.s32 %v2528, %v2518
        %v2530 = vadd.s32 %v2529, %v2520
        %v2531 = vshrl.u32 %v2530, 4
        %v2532 = vmul.u32 %v2531, 18
        %v2533 = vsub.s32 %v2509, %v2532
        %v2534 = vsub.s32 0, %v2533
        %v2535 = vsel %vm2507, %v2534, %v2533
        %vm2536 = vcmp.lt.s32.totalorder %v2416, 0
        %v2537 = vsub.s32 0, %v2416
        %v2538 = vsel %vm2536, %v2537, %v2416
        %v2539 = vand.u32 %v2538, 65535
        %v2540 = vshrl.u32 %v2538, 16
        %v2542 = vmul.u32 %v2539, 14564
        %v2543 = vmul.u32 %v2539, 58254
        %v2544 = vmul.u32 %v2540, 14564
        %v2545 = vmul.u32 %v2540, 58254
        %v2546 = vshll.u32 %v2543, 16
        %v2547 = vshrl.u32 %v2543, 16
        %v2548 = vshll.u32 %v2544, 16
        %v2549 = vshrl.u32 %v2544, 16
        %vm2550 = vc.u32 %v2542, %v2546
        %v2551 = vsel %vm2550, 1, 0
        %v2552 = vadd.s32 %v2542, %v2546
        %v2553 = vadd.s32 %v2545, %v2551
        %vm2554 = vc.u32 %v2552, %v2548
        %v2555 = vsel %vm2554, 1, 0
        %v2556 = vadd.s32 %v2552, %v2548
        %v2557 = vadd.s32 %v2553, %v2555
        %v2558 = vadd.s32 %v2557, %v2547
        %v2559 = vadd.s32 %v2558, %v2549
        %v2560 = vshrl.u32 %v2559, 4
        %v2561 = vmul.u32 %v2560, 18
        %v2562 = vsub.s32 %v2538, %v2561
        %v2563 = vsub.s32 0, %v2562
        %v2564 = vsel %vm2536, %v2563, %v2562
        %vm2565 = vcmp.lt.s32.totalorder %v2417, 0
        %v2566 = vsub.s32 0, %v2417
        %v2567 = vsel %vm2565, %v2566, %v2417
        %v2568 = vand.u32 %v2567, 65535
        %v2569 = vshrl.u32 %v2567, 16
        %v2571 = vmul.u32 %v2568, 14564
        %v2572 = vmul.u32 %v2568, 58254
        %v2573 = vmul.u32 %v2569, 14564
        %v2574 = vmul.u32 %v2569, 58254
        %v2575 = vshll.u32 %v2572, 16
        %v2576 = vshrl.u32 %v2572, 16
        %v2577 = vshll.u32 %v2573, 16
        %v2578 = vshrl.u32 %v2573, 16
        %vm2579 = vc.u32 %v2571, %v2575
        %v2580 = vsel %vm2579, 1, 0
        %v2581 = vadd.s32 %v2571, %v2575
        %v2582 = vadd.s32 %v2574, %v2580
        %vm2583 = vc.u32 %v2581, %v2577
        %v2584 = vsel %vm2583, 1, 0
        %v2585 = vadd.s32 %v2581, %v2577
        %v2586 = vadd.s32 %v2582, %v2584
        %v2587 = vadd.s32 %v2586, %v2576
        %v2588 = vadd.s32 %v2587, %v2578
        %v2589 = vshrl.u32 %v2588, 4
        %v2590 = vmul.u32 %v2589, 18
        %v2591 = vsub.s32 %v2567, %v2590
        %v2592 = vsub.s32 0, %v2591
        %v2593 = vsel %vm2565, %v2592, %v2591
        %vm2594 = vcmp.lt.s32.totalorder %v2418, 0
        %v2595 = vsub.s32 0, %v2418
        %v2596 = vsel %vm2594, %v2595, %v2418
        %v2597 = vand.u32 %v2596, 65535
        %v2598 = vshrl.u32 %v2596, 16
        %v2600 = vmul.u32 %v2597, 14564
        %v2601 = vmul.u32 %v2597, 58254
        %v2602 = vmul.u32 %v2598, 14564
        %v2603 = vmul.u32 %v2598, 58254
        %v2604 = vshll.u32 %v2601, 16
        %v2605 = vshrl.u32 %v2601, 16
        %v2606 = vshll.u32 %v2602, 16
        %v2607 = vshrl.u32 %v2602, 16
        %vm2608 = vc.u32 %v2600, %v2604
        %v2609 = vsel %vm2608, 1, 0
        %v2610 = vadd.s32 %v2600, %v2604
        %v2611 = vadd.s32 %v2603, %v2609
        %vm2612 = vc.u32 %v2610, %v2606
        %v2613 = vsel %vm2612, 1, 0
        %v2614 = vadd.s32 %v2610, %v2606
        %v2615 = vadd.s32 %v2611, %v2613
        %v2616 = vadd.s32 %v2615, %v2605
        %v2617 = vadd.s32 %v2616, %v2607
        %v2618 = vshrl.u32 %v2617, 4
        %v2619 = vmul.u32 %v2618, 18
        %v2620 = vsub.s32 %v2596, %v2619
        %v2621 = vsub.s32 0, %v2620
        %v2622 = vsel %vm2594, %v2621, %v2620
        %vm2623 = vcmp.lt.s32.totalorder %v2419, 0
        %v2624 = vsub.s32 0, %v2419
        %v2625 = vsel %vm2623, %v2624, %v2419
        %v2626 = vand.u32 %v2625, 65535
        %v2627 = vshrl.u32 %v2625, 16
        %v2629 = vmul.u32 %v2626, 14564
        %v2630 = vmul.u32 %v2626, 58254
        %v2631 = vmul.u32 %v2627, 14564
        %v2632 = vmul.u32 %v2627, 58254
        %v2633 = vshll.u32 %v2630, 16
        %v2634 = vshrl.u32 %v2630, 16
        %v2635 = vshll.u32 %v2631, 16
        %v2636 = vshrl.u32 %v2631, 16
        %vm2637 = vc.u32 %v2629, %v2633
        %v2638 = vsel %vm2637, 1, 0
        %v2639 = vadd.s32 %v2629, %v2633
        %v2640 = vadd.s32 %v2632, %v2638
        %vm2641 = vc.u32 %v2639, %v2635
        %v2642 = vsel %vm2641, 1, 0
        %v2643 = vadd.s32 %v2639, %v2635
        %v2644 = vadd.s32 %v2640, %v2642
        %v2645 = vadd.s32 %v2644, %v2634
        %v2646 = vadd.s32 %v2645, %v2636
        %v2647 = vshrl.u32 %v2646, 4
        %v2648 = vmul.u32 %v2647, 18
        %v2649 = vsub.s32 %v2625, %v2648
        %v2650 = vsub.s32 0, %v2649
        %v2651 = vsel %vm2623, %v2650, %v2649
        %vm2652 = vcmp.lt.s32.totalorder %v2420, 0
        %v2653 = vsub.s32 0, %v2420
        %v2654 = vsel %vm2652, %v2653, %v2420
        %v2655 = vand.u32 %v2654, 65535
        %v2656 = vshrl.u32 %v2654, 16
        %v2658 = vmul.u32 %v2655, 14564
        %v2659 = vmul.u32 %v2655, 58254
        %v2660 = vmul.u32 %v2656, 14564
        %v2661 = vmul.u32 %v2656, 58254
        %v2662 = vshll.u32 %v2659, 16
        %v2663 = vshrl.u32 %v2659, 16
        %v2664 = vshll.u32 %v2660, 16
        %v2665 = vshrl.u32 %v2660, 16
        %vm2666 = vc.u32 %v2658, %v2662
        %v2667 = vsel %vm2666, 1, 0
        %v2668 = vadd.s32 %v2658, %v2662
        %v2669 = vadd.s32 %v2661, %v2667
        %vm2670 = vc.u32 %v2668, %v2664
        %v2671 = vsel %vm2670, 1, 0
        %v2672 = vadd.s32 %v2668, %v2664
        %v2673 = vadd.s32 %v2669, %v2671
        %v2674 = vadd.s32 %v2673, %v2663
        %v2675 = vadd.s32 %v2674, %v2665
        %v2676 = vshrl.u32 %v2675, 4
        %v2677 = vmul.u32 %v2676, 18
        %v2678 = vsub.s32 %v2654, %v2677
        %v2679 = vsub.s32 0, %v2678
        %v2680 = vsel %vm2652, %v2679, %v2678
        %vm2681 = vcmp.lt.s32.totalorder %v2421, 0
        %v2682 = vsub.s32 0, %v2421
        %v2683 = vsel %vm2681, %v2682, %v2421
        %v2684 = vand.u32 %v2683, 65535
        %v2685 = vshrl.u32 %v2683, 16
        %v2687 = vmul.u32 %v2684, 14564
        %v2688 = vmul.u32 %v2684, 58254
        %v2689 = vmul.u32 %v2685, 14564
        %v2690 = vmul.u32 %v2685, 58254
        %v2691 = vshll.u32 %v2688, 16
        %v2692 = vshrl.u32 %v2688, 16
        %v2693 = vshll.u32 %v2689, 16
        %v2694 = vshrl.u32 %v2689, 16
        %vm2695 = vc.u32 %v2687, %v2691
        %v2696 = vsel %vm2695, 1, 0
        %v2697 = vadd.s32 %v2687, %v2691
        %v2698 = vadd.s32 %v2690, %v2696
        %vm2699 = vc.u32 %v2697, %v2693
        %v2700 = vsel %vm2699, 1, 0
        %v2701 = vadd.s32 %v2697, %v2693
        %v2702 = vadd.s32 %v2698, %v2700
        %v2703 = vadd.s32 %v2702, %v2692
        %v2704 = vadd.s32 %v2703, %v2694
        %v2705 = vshrl.u32 %v2704, 4
        %v2706 = vmul.u32 %v2705, 18
        %v2707 = vsub.s32 %v2683, %v2706
        %v2708 = vsub.s32 0, %v2707
        %v2709 = vsel %vm2681, %v2708, %v2707
        %vm2710 = vcmp.lt.s32.totalorder %v2422, 0
        %v2711 = vsub.s32 0, %v2422
        %v2712 = vsel %vm2710, %v2711, %v2422
        %v2713 = vand.u32 %v2712, 65535
        %v2714 = vshrl.u32 %v2712, 16
        %v2716 = vmul.u32 %v2713, 14564
        %v2717 = vmul.u32 %v2713, 58254
        %v2718 = vmul.u32 %v2714, 14564
        %v2719 = vmul.u32 %v2714, 58254
        %v2720 = vshll.u32 %v2717, 16
        %v2721 = vshrl.u32 %v2717, 16
        %v2722 = vshll.u32 %v2718, 16
        %v2723 = vshrl.u32 %v2718, 16
        %vm2724 = vc.u32 %v2716, %v2720
        %v2725 = vsel %vm2724, 1, 0
        %v2726 = vadd.s32 %v2716, %v2720
        %v2727 = vadd.s32 %v2719, %v2725
        %vm2728 = vc.u32 %v2726, %v2722
        %v2729 = vsel %vm2728, 1, 0
        %v2730 = vadd.s32 %v2726, %v2722
        %v2731 = vadd.s32 %v2727, %v2729
        %v2732 = vadd.s32 %v2731, %v2721
        %v2733 = vadd.s32 %v2732, %v2723
        %v2734 = vshrl.u32 %v2733, 4
        %v2735 = vmul.u32 %v2734, 18
        %v2736 = vsub.s32 %v2712, %v2735
        %v2737 = vsub.s32 0, %v2736
        %v2738 = vsel %vm2710, %v2737, %v2736
        %vm2739 = vcmp.lt.s32.totalorder %v2423, 0
        %v2740 = vsub.s32 0, %v2423
        %v2741 = vsel %vm2739, %v2740, %v2423
        %v2742 = vand.u32 %v2741, 65535
        %v2743 = vshrl.u32 %v2741, 16
        %v2745 = vmul.u32 %v2742, 14564
        %v2746 = vmul.u32 %v2742, 58254
        %v2747 = vmul.u32 %v2743, 14564
        %v2748 = vmul.u32 %v2743, 58254
        %v2749 = vshll.u32 %v2746, 16
        %v2750 = vshrl.u32 %v2746, 16
        %v2751 = vshll.u32 %v2747, 16
        %v2752 = vshrl.u32 %v2747, 16
        %vm2753 = vc.u32 %v2745, %v2749
        %v2754 = vsel %vm2753, 1, 0
        %v2755 = vadd.s32 %v2745, %v2749
        %v2756 = vadd.s32 %v2748, %v2754
        %vm2757 = vc.u32 %v2755, %v2751
        %v2758 = vsel %vm2757, 1, 0
        %v2759 = vadd.s32 %v2755, %v2751
        %v2760 = vadd.s32 %v2756, %v2758
        %v2761 = vadd.s32 %v2760, %v2750
        %v2762 = vadd.s32 %v2761, %v2752
        %v2763 = vshrl.u32 %v2762, 4
        %v2764 = vmul.u32 %v2763, 18
        %v2765 = vsub.s32 %v2741, %v2764
        %v2766 = vsub.s32 0, %v2765
        %v2767 = vsel %vm2739, %v2766, %v2765
        %vm2768 = vcmp.lt.s32.totalorder %v2424, 0
        %v2769 = vsub.s32 0, %v2424
        %v2770 = vsel %vm2768, %v2769, %v2424
        %v2771 = vand.u32 %v2770, 65535
        %v2772 = vshrl.u32 %v2770, 16
        %v2774 = vmul.u32 %v2771, 14564
        %v2775 = vmul.u32 %v2771, 58254
        %v2776 = vmul.u32 %v2772, 14564
        %v2777 = vmul.u32 %v2772, 58254
        %v2778 = vshll.u32 %v2775, 16
        %v2779 = vshrl.u32 %v2775, 16
        %v2780 = vshll.u32 %v2776, 16
        %v2781 = vshrl.u32 %v2776, 16
        %vm2782 = vc.u32 %v2774, %v2778
        %v2783 = vsel %vm2782, 1, 0
        %v2784 = vadd.s32 %v2774, %v2778
        %v2785 = vadd.s32 %v2777, %v2783
        %vm2786 = vc.u32 %v2784, %v2780
        %v2787 = vsel %vm2786, 1, 0
        %v2788 = vadd.s32 %v2784, %v2780
        %v2789 = vadd.s32 %v2785, %v2787
        %v2790 = vadd.s32 %v2789, %v2779
        %v2791 = vadd.s32 %v2790, %v2781
        %v2792 = vshrl.u32 %v2791, 4
        %v2793 = vmul.u32 %v2792, 18
        %v2794 = vsub.s32 %v2770, %v2793
        %v2795 = vsub.s32 0, %v2794
        %v2796 = vsel %vm2768, %v2795, %v2794
        %vm2797 = vcmp.lt.s32.totalorder %v2425, 0
        %v2798 = vsub.s32 0, %v2425
        %v2799 = vsel %vm2797, %v2798, %v2425
        %v2800 = vand.u32 %v2799, 65535
        %v2801 = vshrl.u32 %v2799, 16
        %v2803 = vmul.u32 %v2800, 14564
        %v2804 = vmul.u32 %v2800, 58254
        %v2805 = vmul.u32 %v2801, 14564
        %v2806 = vmul.u32 %v2801, 58254
        %v2807 = vshll.u32 %v2804, 16
        %v2808 = vshrl.u32 %v2804, 16
        %v2809 = vshll.u32 %v2805, 16
        %v2810 = vshrl.u32 %v2805, 16
        %vm2811 = vc.u32 %v2803, %v2807
        %v2812 = vsel %vm2811, 1, 0
        %v2813 = vadd.s32 %v2803, %v2807
        %v2814 = vadd.s32 %v2806, %v2812
        %vm2815 = vc.u32 %v2813, %v2809
        %v2816 = vsel %vm2815, 1, 0
        %v2817 = vadd.s32 %v2813, %v2809
        %v2818 = vadd.s32 %v2814, %v2816
        %v2819 = vadd.s32 %v2818, %v2808
        %v2820 = vadd.s32 %v2819, %v2810
        %v2821 = vshrl.u32 %v2820, 4
        %v2822 = vmul.u32 %v2821, 18
        %v2823 = vsub.s32 %v2799, %v2822
        %v2824 = vsub.s32 0, %v2823
        %v2825 = vsel %vm2797, %v2824, %v2823
        %vm2826 = vcmp.lt.s32.totalorder %v2426, 0
        %v2827 = vsub.s32 0, %v2426
        %v2828 = vsel %vm2826, %v2827, %v2426
        %v2829 = vand.u32 %v2828, 65535
        %v2830 = vshrl.u32 %v2828, 16
        %v2832 = vmul.u32 %v2829, 14564
        %v2833 = vmul.u32 %v2829, 58254
        %v2834 = vmul.u32 %v2830, 14564
        %v2835 = vmul.u32 %v2830, 58254
        %v2836 = vshll.u32 %v2833, 16
        %v2837 = vshrl.u32 %v2833, 16
        %v2838 = vshll.u32 %v2834, 16
        %v2839 = vshrl.u32 %v2834, 16
        %vm2840 = vc.u32 %v2832, %v2836
        %v2841 = vsel %vm2840, 1, 0
        %v2842 = vadd.s32 %v2832, %v2836
        %v2843 = vadd.s32 %v2835, %v2841
        %vm2844 = vc.u32 %v2842, %v2838
        %v2845 = vsel %vm2844, 1, 0
        %v2846 = vadd.s32 %v2842, %v2838
        %v2847 = vadd.s32 %v2843, %v2845
        %v2848 = vadd.s32 %v2847, %v2837
        %v2849 = vadd.s32 %v2848, %v2839
        %v2850 = vshrl.u32 %v2849, 4
        %v2851 = vmul.u32 %v2850, 18
        %v2852 = vsub.s32 %v2828, %v2851
        %v2853 = vsub.s32 0, %v2852
        %v2854 = vsel %vm2826, %v2853, %v2852
        %vm2855 = vcmp.lt.s32.totalorder %v2427, 0
        %v2856 = vsub.s32 0, %v2427
        %v2857 = vsel %vm2855, %v2856, %v2427
        %v2858 = vand.u32 %v2857, 65535
        %v2859 = vshrl.u32 %v2857, 16
        %v2861 = vmul.u32 %v2858, 14564
        %v2862 = vmul.u32 %v2858, 58254
        %v2863 = vmul.u32 %v2859, 14564
        %v2864 = vmul.u32 %v2859, 58254
        %v2865 = vshll.u32 %v2862, 16
        %v2866 = vshrl.u32 %v2862, 16
        %v2867 = vshll.u32 %v2863, 16
        %v2868 = vshrl.u32 %v2863, 16
        %vm2869 = vc.u32 %v2861, %v2865
        %v2870 = vsel %vm2869, 1, 0
        %v2871 = vadd.s32 %v2861, %v2865
        %v2872 = vadd.s32 %v2864, %v2870
        %vm2873 = vc.u32 %v2871, %v2867
        %v2874 = vsel %vm2873, 1, 0
        %v2875 = vadd.s32 %v2871, %v2867
        %v2876 = vadd.s32 %v2872, %v2874
        %v2877 = vadd.s32 %v2876, %v2866
        %v2878 = vadd.s32 %v2877, %v2868
        %v2879 = vshrl.u32 %v2878, 4
        %v2880 = vmul.u32 %v2879, 18
        %v2881 = vsub.s32 %v2857, %v2880
        %v2882 = vsub.s32 0, %v2881
        %v2883 = vsel %vm2855, %v2882, %v2881
        %vm2884 = vcmp.lt.s32.totalorder %v2428, 0
        %v2885 = vsub.s32 0, %v2428
        %v2886 = vsel %vm2884, %v2885, %v2428
        %v2887 = vand.u32 %v2886, 65535
        %v2888 = vshrl.u32 %v2886, 16
        %v2890 = vmul.u32 %v2887, 14564
        %v2891 = vmul.u32 %v2887, 58254
        %v2892 = vmul.u32 %v2888, 14564
        %v2893 = vmul.u32 %v2888, 58254
        %v2894 = vshll.u32 %v2891, 16
        %v2895 = vshrl.u32 %v2891, 16
        %v2896 = vshll.u32 %v2892, 16
        %v2897 = vshrl.u32 %v2892, 16
        %vm2898 = vc.u32 %v2890, %v2894
        %v2899 = vsel %vm2898, 1, 0
        %v2900 = vadd.s32 %v2890, %v2894
        %v2901 = vadd.s32 %v2893, %v2899
        %vm2902 = vc.u32 %v2900, %v2896
        %v2903 = vsel %vm2902, 1, 0
        %v2904 = vadd.s32 %v2900, %v2896
        %v2905 = vadd.s32 %v2901, %v2903
        %v2906 = vadd.s32 %v2905, %v2895
        %v2907 = vadd.s32 %v2906, %v2897
        %v2908 = vshrl.u32 %v2907, 4
        %v2909 = vmul.u32 %v2908, 18
        %v2910 = vsub.s32 %v2886, %v2909
        %v2911 = vsub.s32 0, %v2910
        %v2912 = vsel %vm2884, %v2911, %v2910
        %vm2913 = vcmp.lt.s32.totalorder %v2429, 0
        %v2914 = vsub.s32 0, %v2429
        %v2915 = vsel %vm2913, %v2914, %v2429
        %v2916 = vand.u32 %v2915, 65535
        %v2917 = vshrl.u32 %v2915, 16
        %v2919 = vmul.u32 %v2916, 14564
        %v2920 = vmul.u32 %v2916, 58254
        %v2921 = vmul.u32 %v2917, 14564
        %v2922 = vmul.u32 %v2917, 58254
        %v2923 = vshll.u32 %v2920, 16
        %v2924 = vshrl.u32 %v2920, 16
        %v2925 = vshll.u32 %v2921, 16
        %v2926 = vshrl.u32 %v2921, 16
        %vm2927 = vc.u32 %v2919, %v2923
        %v2928 = vsel %vm2927, 1, 0
        %v2929 = vadd.s32 %v2919, %v2923
        %v2930 = vadd.s32 %v2922, %v2928
        %vm2931 = vc.u32 %v2929, %v2925
        %v2932 = vsel %vm2931, 1, 0
        %v2933 = vadd.s32 %v2929, %v2925
        %v2934 = vadd.s32 %v2930, %v2932
        %v2935 = vadd.s32 %v2934, %v2924
        %v2936 = vadd.s32 %v2935, %v2926
        %v2937 = vshrl.u32 %v2936, 4
        %v2938 = vmul.u32 %v2937, 18
        %v2939 = vsub.s32 %v2915, %v2938
        %v2940 = vsub.s32 0, %v2939
        %v2941 = vsel %vm2913, %v2940, %v2939
        %vm2942 = vcmp.lt.s32.totalorder %v2430, 0
        %v2943 = vsub.s32 0, %v2430
        %v2944 = vsel %vm2942, %v2943, %v2430
        %v2945 = vand.u32 %v2944, 65535
        %v2946 = vshrl.u32 %v2944, 16
        %v2948 = vmul.u32 %v2945, 14564
        %v2949 = vmul.u32 %v2945, 58254
        %v2950 = vmul.u32 %v2946, 14564
        %v2951 = vmul.u32 %v2946, 58254
        %v2952 = vshll.u32 %v2949, 16
        %v2953 = vshrl.u32 %v2949, 16
        %v2954 = vshll.u32 %v2950, 16
        %v2955 = vshrl.u32 %v2950, 16
        %vm2956 = vc.u32 %v2948, %v2952
        %v2957 = vsel %vm2956, 1, 0
        %v2958 = vadd.s32 %v2948, %v2952
        %v2959 = vadd.s32 %v2951, %v2957
        %vm2960 = vc.u32 %v2958, %v2954
        %v2961 = vsel %vm2960, 1, 0
        %v2962 = vadd.s32 %v2958, %v2954
        %v2963 = vadd.s32 %v2959, %v2961
        %v2964 = vadd.s32 %v2963, %v2953
        %v2965 = vadd.s32 %v2964, %v2955
        %v2966 = vshrl.u32 %v2965, 4
        %v2967 = vmul.u32 %v2966, 18
        %v2968 = vsub.s32 %v2944, %v2967
        %v2969 = vsub.s32 0, %v2968
        %v2970 = vsel %vm2942, %v2969, %v2968
        %vm2971 = vcmp.lt.s32.totalorder %v2431, 0
        %v2972 = vsub.s32 0, %v2431
        %v2973 = vsel %vm2971, %v2972, %v2431
        %v2974 = vand.u32 %v2973, 65535
        %v2975 = vshrl.u32 %v2973, 16
        %v2977 = vmul.u32 %v2974, 14564
        %v2978 = vmul.u32 %v2974, 58254
        %v2979 = vmul.u32 %v2975, 14564
        %v2980 = vmul.u32 %v2975, 58254
        %v2981 = vshll.u32 %v2978, 16
        %v2982 = vshrl.u32 %v2978, 16
        %v2983 = vshll.u32 %v2979, 16
        %v2984 = vshrl.u32 %v2979, 16
        %vm2985 = vc.u32 %v2977, %v2981
        %v2986 = vsel %vm2985, 1, 0
        %v2987 = vadd.s32 %v2977, %v2981
        %v2988 = vadd.s32 %v2980, %v2986
        %vm2989 = vc.u32 %v2987, %v2983
        %v2990 = vsel %vm2989, 1, 0
        %v2991 = vadd.s32 %v2987, %v2983
        %v2992 = vadd.s32 %v2988, %v2990
        %v2993 = vadd.s32 %v2992, %v2982
        %v2994 = vadd.s32 %v2993, %v2984
        %v2995 = vshrl.u32 %v2994, 4
        %v2996 = vmul.u32 %v2995, 18
        %v2997 = vsub.s32 %v2973, %v2996
        %v2998 = vsub.s32 0, %v2997
        %v2999 = vsel %vm2971, %v2998, %v2997
        %vm3000 = vcmp.lt.s32.totalorder %v2432, 0
        %v3001 = vsub.s32 0, %v2432
        %v3002 = vsel %vm3000, %v3001, %v2432
        %v3003 = vand.u32 %v3002, 65535
        %v3004 = vshrl.u32 %v3002, 16
        %v3006 = vmul.u32 %v3003, 14564
        %v3007 = vmul.u32 %v3003, 58254
        %v3008 = vmul.u32 %v3004, 14564
        %v3009 = vmul.u32 %v3004, 58254
        %v3010 = vshll.u32 %v3007, 16
        %v3011 = vshrl.u32 %v3007, 16
        %v3012 = vshll.u32 %v3008, 16
        %v3013 = vshrl.u32 %v3008, 16
        %vm3014 = vc.u32 %v3006, %v3010
        %v3015 = vsel %vm3014, 1, 0
        %v3016 = vadd.s32 %v3006, %v3010
        %v3017 = vadd.s32 %v3009, %v3015
        %vm3018 = vc.u32 %v3016, %v3012
        %v3019 = vsel %vm3018, 1, 0
        %v3020 = vadd.s32 %v3016, %v3012
        %v3021 = vadd.s32 %v3017, %v3019
        %v3022 = vadd.s32 %v3021, %v3011
        %v3023 = vadd.s32 %v3022, %v3013
        %v3024 = vshrl.u32 %v3023, 4
        %v3025 = vmul.u32 %v3024, 18
        %v3026 = vsub.s32 %v3002, %v3025
        %v3027 = vsub.s32 0, %v3026
        %v3028 = vsel %vm3000, %v3027, %v3026
        %vm3029 = vcmp.lt.s32.totalorder %v2433, 0
        %v3030 = vsub.s32 0, %v2433
        %v3031 = vsel %vm3029, %v3030, %v2433
        %v3032 = vand.u32 %v3031, 65535
        %v3033 = vshrl.u32 %v3031, 16
        %v3035 = vmul.u32 %v3032, 14564
        %v3036 = vmul.u32 %v3032, 58254
        %v3037 = vmul.u32 %v3033, 14564
        %v3038 = vmul.u32 %v3033, 58254
        %v3039 = vshll.u32 %v3036, 16
        %v3040 = vshrl.u32 %v3036, 16
        %v3041 = vshll.u32 %v3037, 16
        %v3042 = vshrl.u32 %v3037, 16
        %vm3043 = vc.u32 %v3035, %v3039
        %v3044 = vsel %vm3043, 1, 0
        %v3045 = vadd.s32 %v3035, %v3039
        %v3046 = vadd.s32 %v3038, %v3044
        %vm3047 = vc.u32 %v3045, %v3041
        %v3048 = vsel %vm3047, 1, 0
        %v3049 = vadd.s32 %v3045, %v3041
        %v3050 = vadd.s32 %v3046, %v3048
        %v3051 = vadd.s32 %v3050, %v3040
        %v3052 = vadd.s32 %v3051, %v3042
        %v3053 = vshrl.u32 %v3052, 4
        %v3054 = vmul.u32 %v3053, 18
        %v3055 = vsub.s32 %v3031, %v3054
        %v3056 = vsub.s32 0, %v3055
        %v3057 = vsel %vm3029, %v3056, %v3055
        %vm3058 = vcmp.lt.s32.totalorder %v2434, 0
        %v3059 = vsub.s32 0, %v2434
        %v3060 = vsel %vm3058, %v3059, %v2434
        %v3061 = vand.u32 %v3060, 65535
        %v3062 = vshrl.u32 %v3060, 16
        %v3064 = vmul.u32 %v3061, 14564
        %v3065 = vmul.u32 %v3061, 58254
        %v3066 = vmul.u32 %v3062, 14564
        %v3067 = vmul.u32 %v3062, 58254
        %v3068 = vshll.u32 %v3065, 16
        %v3069 = vshrl.u32 %v3065, 16
        %v3070 = vshll.u32 %v3066, 16
        %v3071 = vshrl.u32 %v3066, 16
        %vm3072 = vc.u32 %v3064, %v3068
        %v3073 = vsel %vm3072, 1, 0
        %v3074 = vadd.s32 %v3064, %v3068
        %v3075 = vadd.s32 %v3067, %v3073
        %vm3076 = vc.u32 %v3074, %v3070
        %v3077 = vsel %vm3076, 1, 0
        %v3078 = vadd.s32 %v3074, %v3070
        %v3079 = vadd.s32 %v3075, %v3077
        %v3080 = vadd.s32 %v3079, %v3069
        %v3081 = vadd.s32 %v3080, %v3071
        %v3082 = vshrl.u32 %v3081, 4
        %v3083 = vmul.u32 %v3082, 18
        %v3084 = vsub.s32 %v3060, %v3083
        %v3085 = vsub.s32 0, %v3084
        %v3086 = vsel %vm3058, %v3085, %v3084
        %vm3087 = vcmp.lt.s32.totalorder %v2435, 0
        %v3088 = vsub.s32 0, %v2435
        %v3089 = vsel %vm3087, %v3088, %v2435
        %v3090 = vand.u32 %v3089, 65535
        %v3091 = vshrl.u32 %v3089, 16
        %v3093 = vmul.u32 %v3090, 14564
        %v3094 = vmul.u32 %v3090, 58254
        %v3095 = vmul.u32 %v3091, 14564
        %v3096 = vmul.u32 %v3091, 58254
        %v3097 = vshll.u32 %v3094, 16
        %v3098 = vshrl.u32 %v3094, 16
        %v3099 = vshll.u32 %v3095, 16
        %v3100 = vshrl.u32 %v3095, 16
        %vm3101 = vc.u32 %v3093, %v3097
        %v3102 = vsel %vm3101, 1, 0
        %v3103 = vadd.s32 %v3093, %v3097
        %v3104 = vadd.s32 %v3096, %v3102
        %vm3105 = vc.u32 %v3103, %v3099
        %v3106 = vsel %vm3105, 1, 0
        %v3107 = vadd.s32 %v3103, %v3099
        %v3108 = vadd.s32 %v3104, %v3106
        %v3109 = vadd.s32 %v3108, %v3098
        %v3110 = vadd.s32 %v3109, %v3100
        %v3111 = vshrl.u32 %v3110, 4
        %v3112 = vmul.u32 %v3111, 18
        %v3113 = vsub.s32 %v3089, %v3112
        %v3114 = vsub.s32 0, %v3113
        %v3115 = vsel %vm3087, %v3114, %v3113
        %vm3116 = vcmp.lt.s32.totalorder %v2436, 0
        %v3117 = vsub.s32 0, %v2436
        %v3118 = vsel %vm3116, %v3117, %v2436
        %v3119 = vand.u32 %v3118, 65535
        %v3120 = vshrl.u32 %v3118, 16
        %v3122 = vmul.u32 %v3119, 14564
        %v3123 = vmul.u32 %v3119, 58254
        %v3124 = vmul.u32 %v3120, 14564
        %v3125 = vmul.u32 %v3120, 58254
        %v3126 = vshll.u32 %v3123, 16
        %v3127 = vshrl.u32 %v3123, 16
        %v3128 = vshll.u32 %v3124, 16
        %v3129 = vshrl.u32 %v3124, 16
        %vm3130 = vc.u32 %v3122, %v3126
        %v3131 = vsel %vm3130, 1, 0
        %v3132 = vadd.s32 %v3122, %v3126
        %v3133 = vadd.s32 %v3125, %v3131
        %vm3134 = vc.u32 %v3132, %v3128
        %v3135 = vsel %vm3134, 1, 0
        %v3136 = vadd.s32 %v3132, %v3128
        %v3137 = vadd.s32 %v3133, %v3135
        %v3138 = vadd.s32 %v3137, %v3127
        %v3139 = vadd.s32 %v3138, %v3129
        %v3140 = vshrl.u32 %v3139, 4
        %v3141 = vmul.u32 %v3140, 18
        %v3142 = vsub.s32 %v3118, %v3141
        %v3143 = vsub.s32 0, %v3142
        %v3144 = vsel %vm3116, %v3143, %v3142
        %vm3145 = vcmp.lt.s32.totalorder %v2437, 0
        %v3146 = vsub.s32 0, %v2437
        %v3147 = vsel %vm3145, %v3146, %v2437
        %v3148 = vand.u32 %v3147, 65535
        %v3149 = vshrl.u32 %v3147, 16
        %v3151 = vmul.u32 %v3148, 14564
        %v3152 = vmul.u32 %v3148, 58254
        %v3153 = vmul.u32 %v3149, 14564
        %v3154 = vmul.u32 %v3149, 58254
        %v3155 = vshll.u32 %v3152, 16
        %v3156 = vshrl.u32 %v3152, 16
        %v3157 = vshll.u32 %v3153, 16
        %v3158 = vshrl.u32 %v3153, 16
        %vm3159 = vc.u32 %v3151, %v3155
        %v3160 = vsel %vm3159, 1, 0
        %v3161 = vadd.s32 %v3151, %v3155
        %v3162 = vadd.s32 %v3154, %v3160
        %vm3163 = vc.u32 %v3161, %v3157
        %v3164 = vsel %vm3163, 1, 0
        %v3165 = vadd.s32 %v3161, %v3157
        %v3166 = vadd.s32 %v3162, %v3164
        %v3167 = vadd.s32 %v3166, %v3156
        %v3168 = vadd.s32 %v3167, %v3158
        %v3169 = vshrl.u32 %v3168, 4
        %v3170 = vmul.u32 %v3169, 18
        %v3171 = vsub.s32 %v3147, %v3170
        %v3172 = vsub.s32 0, %v3171
        %v3173 = vsel %vm3145, %v3172, %v3171
        %vm3174 = vcmp.lt.s32.totalorder %v2438, 0
        %v3175 = vsub.s32 0, %v2438
        %v3176 = vsel %vm3174, %v3175, %v2438
        %v3177 = vand.u32 %v3176, 65535
        %v3178 = vshrl.u32 %v3176, 16
        %v3180 = vmul.u32 %v3177, 14564
        %v3181 = vmul.u32 %v3177, 58254
        %v3182 = vmul.u32 %v3178, 14564
        %v3183 = vmul.u32 %v3178, 58254
        %v3184 = vshll.u32 %v3181, 16
        %v3185 = vshrl.u32 %v3181, 16
        %v3186 = vshll.u32 %v3182, 16
        %v3187 = vshrl.u32 %v3182, 16
        %vm3188 = vc.u32 %v3180, %v3184
        %v3189 = vsel %vm3188, 1, 0
        %v3190 = vadd.s32 %v3180, %v3184
        %v3191 = vadd.s32 %v3183, %v3189
        %vm3192 = vc.u32 %v3190, %v3186
        %v3193 = vsel %vm3192, 1, 0
        %v3194 = vadd.s32 %v3190, %v3186
        %v3195 = vadd.s32 %v3191, %v3193
        %v3196 = vadd.s32 %v3195, %v3185
        %v3197 = vadd.s32 %v3196, %v3187
        %v3198 = vshrl.u32 %v3197, 4
        %v3199 = vmul.u32 %v3198, 18
        %v3200 = vsub.s32 %v3176, %v3199
        %v3201 = vsub.s32 0, %v3200
        %v3202 = vsel %vm3174, %v3201, %v3200
        %vm3203 = vcmp.lt.s32.totalorder %v2439, 0
        %v3204 = vsub.s32 0, %v2439
        %v3205 = vsel %vm3203, %v3204, %v2439
        %v3206 = vand.u32 %v3205, 65535
        %v3207 = vshrl.u32 %v3205, 16
        %v3209 = vmul.u32 %v3206, 14564
        %v3210 = vmul.u32 %v3206, 58254
        %v3211 = vmul.u32 %v3207, 14564
        %v3212 = vmul.u32 %v3207, 58254
        %v3213 = vshll.u32 %v3210, 16
        %v3214 = vshrl.u32 %v3210, 16
        %v3215 = vshll.u32 %v3211, 16
        %v3216 = vshrl.u32 %v3211, 16
        %vm3217 = vc.u32 %v3209, %v3213
        %v3218 = vsel %vm3217, 1, 0
        %v3219 = vadd.s32 %v3209, %v3213
        %v3220 = vadd.s32 %v3212, %v3218
        %vm3221 = vc.u32 %v3219, %v3215
        %v3222 = vsel %vm3221, 1, 0
        %v3223 = vadd.s32 %v3219, %v3215
        %v3224 = vadd.s32 %v3220, %v3222
        %v3225 = vadd.s32 %v3224, %v3214
        %v3226 = vadd.s32 %v3225, %v3216
        %v3227 = vshrl.u32 %v3226, 4
        %v3228 = vmul.u32 %v3227, 18
        %v3229 = vsub.s32 %v3205, %v3228
        %v3230 = vsub.s32 0, %v3229
        %v3231 = vsel %vm3203, %v3230, %v3229
        %vm3232 = vcmp.lt.s32.totalorder %v2440, 0
        %v3233 = vsub.s32 0, %v2440
        %v3234 = vsel %vm3232, %v3233, %v2440
        %v3235 = vand.u32 %v3234, 65535
        %v3236 = vshrl.u32 %v3234, 16
        %v3238 = vmul.u32 %v3235, 14564
        %v3239 = vmul.u32 %v3235, 58254
        %v3240 = vmul.u32 %v3236, 14564
        %v3241 = vmul.u32 %v3236, 58254
        %v3242 = vshll.u32 %v3239, 16
        %v3243 = vshrl.u32 %v3239, 16
        %v3244 = vshll.u32 %v3240, 16
        %v3245 = vshrl.u32 %v3240, 16
        %vm3246 = vc.u32 %v3238, %v3242
        %v3247 = vsel %vm3246, 1, 0
        %v3248 = vadd.s32 %v3238, %v3242
        %v3249 = vadd.s32 %v3241, %v3247
        %vm3250 = vc.u32 %v3248, %v3244
        %v3251 = vsel %vm3250, 1, 0
        %v3252 = vadd.s32 %v3248, %v3244
        %v3253 = vadd.s32 %v3249, %v3251
        %v3254 = vadd.s32 %v3253, %v3243
        %v3255 = vadd.s32 %v3254, %v3245
        %v3256 = vshrl.u32 %v3255, 4
        %v3257 = vmul.u32 %v3256, 18
        %v3258 = vsub.s32 %v3234, %v3257
        %v3259 = vsub.s32 0, %v3258
        %v3260 = vsel %vm3232, %v3259, %v3258
        %vm3261 = vcmp.lt.s32.totalorder %v2441, 0
        %v3262 = vsub.s32 0, %v2441
        %v3263 = vsel %vm3261, %v3262, %v2441
        %v3264 = vand.u32 %v3263, 65535
        %v3265 = vshrl.u32 %v3263, 16
        %v3267 = vmul.u32 %v3264, 14564
        %v3268 = vmul.u32 %v3264, 58254
        %v3269 = vmul.u32 %v3265, 14564
        %v3270 = vmul.u32 %v3265, 58254
        %v3271 = vshll.u32 %v3268, 16
        %v3272 = vshrl.u32 %v3268, 16
        %v3273 = vshll.u32 %v3269, 16
        %v3274 = vshrl.u32 %v3269, 16
        %vm3275 = vc.u32 %v3267, %v3271
        %v3276 = vsel %vm3275, 1, 0
        %v3277 = vadd.s32 %v3267, %v3271
        %v3278 = vadd.s32 %v3270, %v3276
        %vm3279 = vc.u32 %v3277, %v3273
        %v3280 = vsel %vm3279, 1, 0
        %v3281 = vadd.s32 %v3277, %v3273
        %v3282 = vadd.s32 %v3278, %v3280
        %v3283 = vadd.s32 %v3282, %v3272
        %v3284 = vadd.s32 %v3283, %v3274
        %v3285 = vshrl.u32 %v3284, 4
        %v3286 = vmul.u32 %v3285, 18
        %v3287 = vsub.s32 %v3263, %v3286
        %v3288 = vsub.s32 0, %v3287
        %v3289 = vsel %vm3261, %v3288, %v3287
        %vm3290 = vcmp.lt.s32.totalorder %v2442, 0
        %v3291 = vsub.s32 0, %v2442
        %v3292 = vsel %vm3290, %v3291, %v2442
        %v3293 = vand.u32 %v3292, 65535
        %v3294 = vshrl.u32 %v3292, 16
        %v3296 = vmul.u32 %v3293, 14564
        %v3297 = vmul.u32 %v3293, 58254
        %v3298 = vmul.u32 %v3294, 14564
        %v3299 = vmul.u32 %v3294, 58254
        %v3300 = vshll.u32 %v3297, 16
        %v3301 = vshrl.u32 %v3297, 16
        %v3302 = vshll.u32 %v3298, 16
        %v3303 = vshrl.u32 %v3298, 16
        %vm3304 = vc.u32 %v3296, %v3300
        %v3305 = vsel %vm3304, 1, 0
        %v3306 = vadd.s32 %v3296, %v3300
        %v3307 = vadd.s32 %v3299, %v3305
        %vm3308 = vc.u32 %v3306, %v3302
        %v3309 = vsel %vm3308, 1, 0
        %v3310 = vadd.s32 %v3306, %v3302
        %v3311 = vadd.s32 %v3307, %v3309
        %v3312 = vadd.s32 %v3311, %v3301
        %v3313 = vadd.s32 %v3312, %v3303
        %v3314 = vshrl.u32 %v3313, 4
        %v3315 = vmul.u32 %v3314, 18
        %v3316 = vsub.s32 %v3292, %v3315
        %v3317 = vsub.s32 0, %v3316
        %v3318 = vsel %vm3290, %v3317, %v3316
        %vm3319 = vcmp.lt.s32.totalorder %v2443, 0
        %v3320 = vsub.s32 0, %v2443
        %v3321 = vsel %vm3319, %v3320, %v2443
        %v3322 = vand.u32 %v3321, 65535
        %v3323 = vshrl.u32 %v3321, 16
        %v3325 = vmul.u32 %v3322, 14564
        %v3326 = vmul.u32 %v3322, 58254
        %v3327 = vmul.u32 %v3323, 14564
        %v3328 = vmul.u32 %v3323, 58254
        %v3329 = vshll.u32 %v3326, 16
        %v3330 = vshrl.u32 %v3326, 16
        %v3331 = vshll.u32 %v3327, 16
        %v3332 = vshrl.u32 %v3327, 16
        %vm3333 = vc.u32 %v3325, %v3329
        %v3334 = vsel %vm3333, 1, 0
        %v3335 = vadd.s32 %v3325, %v3329
        %v3336 = vadd.s32 %v3328, %v3334
        %vm3337 = vc.u32 %v3335, %v3331
        %v3338 = vsel %vm3337, 1, 0
        %v3339 = vadd.s32 %v3335, %v3331
        %v3340 = vadd.s32 %v3336, %v3338
        %v3341 = vadd.s32 %v3340, %v3330
        %v3342 = vadd.s32 %v3341, %v3332
        %v3343 = vshrl.u32 %v3342, 4
        %v3344 = vmul.u32 %v3343, 18
        %v3345 = vsub.s32 %v3321, %v3344
        %v3346 = vsub.s32 0, %v3345
        %v3347 = vsel %vm3319, %v3346, %v3345
        %vm3348 = vcmp.lt.s32.totalorder %v2444, 0
        %v3349 = vsub.s32 0, %v2444
        %v3350 = vsel %vm3348, %v3349, %v2444
        %v3351 = vand.u32 %v3350, 65535
        %v3352 = vshrl.u32 %v3350, 16
        %v3354 = vmul.u32 %v3351, 14564
        %v3355 = vmul.u32 %v3351, 58254
        %v3356 = vmul.u32 %v3352, 14564
        %v3357 = vmul.u32 %v3352, 58254
        %v3358 = vshll.u32 %v3355, 16
        %v3359 = vshrl.u32 %v3355, 16
        %v3360 = vshll.u32 %v3356, 16
        %v3361 = vshrl.u32 %v3356, 16
        %vm3362 = vc.u32 %v3354, %v3358
        %v3363 = vsel %vm3362, 1, 0
        %v3364 = vadd.s32 %v3354, %v3358
        %v3365 = vadd.s32 %v3357, %v3363
        %vm3366 = vc.u32 %v3364, %v3360
        %v3367 = vsel %vm3366, 1, 0
        %v3368 = vadd.s32 %v3364, %v3360
        %v3369 = vadd.s32 %v3365, %v3367
        %v3370 = vadd.s32 %v3369, %v3359
        %v3371 = vadd.s32 %v3370, %v3361
        %v3372 = vshrl.u32 %v3371, 4
        %v3373 = vmul.u32 %v3372, 18
        %v3374 = vsub.s32 %v3350, %v3373
        %v3375 = vsub.s32 0, %v3374
        %v3376 = vsel %vm3348, %v3375, %v3374
        %vm3377 = vcmp.lt.s32.totalorder %v2445, 0
        %v3378 = vsub.s32 0, %v2445
        %v3379 = vsel %vm3377, %v3378, %v2445
        %v3380 = vand.u32 %v3379, 65535
        %v3381 = vshrl.u32 %v3379, 16
        %v3383 = vmul.u32 %v3380, 14564
        %v3384 = vmul.u32 %v3380, 58254
        %v3385 = vmul.u32 %v3381, 14564
        %v3386 = vmul.u32 %v3381, 58254
        %v3387 = vshll.u32 %v3384, 16
        %v3388 = vshrl.u32 %v3384, 16
        %v3389 = vshll.u32 %v3385, 16
        %v3390 = vshrl.u32 %v3385, 16
        %vm3391 = vc.u32 %v3383, %v3387
        %v3392 = vsel %vm3391, 1, 0
        %v3393 = vadd.s32 %v3383, %v3387
        %v3394 = vadd.s32 %v3386, %v3392
        %vm3395 = vc.u32 %v3393, %v3389
        %v3396 = vsel %vm3395, 1, 0
        %v3397 = vadd.s32 %v3393, %v3389
        %v3398 = vadd.s32 %v3394, %v3396
        %v3399 = vadd.s32 %v3398, %v3388
        %v3400 = vadd.s32 %v3399, %v3390
        %v3401 = vshrl.u32 %v3400, 4
        %v3402 = vmul.u32 %v3401, 18
        %v3403 = vsub.s32 %v3379, %v3402
        %v3404 = vsub.s32 0, %v3403
        %v3405 = vsel %vm3377, %v3404, %v3403
        %vm3406 = vcmp.lt.s32.totalorder %v2446, 0
        %v3407 = vsub.s32 0, %v2446
        %v3408 = vsel %vm3406, %v3407, %v2446
        %v3409 = vand.u32 %v3408, 65535
        %v3410 = vshrl.u32 %v3408, 16
        %v3412 = vmul.u32 %v3409, 14564
        %v3413 = vmul.u32 %v3409, 58254
        %v3414 = vmul.u32 %v3410, 14564
        %v3415 = vmul.u32 %v3410, 58254
        %v3416 = vshll.u32 %v3413, 16
        %v3417 = vshrl.u32 %v3413, 16
        %v3418 = vshll.u32 %v3414, 16
        %v3419 = vshrl.u32 %v3414, 16
        %vm3420 = vc.u32 %v3412, %v3416
        %v3421 = vsel %vm3420, 1, 0
        %v3422 = vadd.s32 %v3412, %v3416
        %v3423 = vadd.s32 %v3415, %v3421
        %vm3424 = vc.u32 %v3422, %v3418
        %v3425 = vsel %vm3424, 1, 0
        %v3426 = vadd.s32 %v3422, %v3418
        %v3427 = vadd.s32 %v3423, %v3425
        %v3428 = vadd.s32 %v3427, %v3417
        %v3429 = vadd.s32 %v3428, %v3419
        %v3430 = vshrl.u32 %v3429, 4
        %v3431 = vmul.u32 %v3430, 18
        %v3432 = vsub.s32 %v3408, %v3431
        %v3433 = vsub.s32 0, %v3432
        %v3434 = vsel %vm3406, %v3433, %v3432
        %vm3435 = vcmp.lt.s32.totalorder %v2447, 0
        %v3436 = vsub.s32 0, %v2447
        %v3437 = vsel %vm3435, %v3436, %v2447
        %v3438 = vand.u32 %v3437, 65535
        %v3439 = vshrl.u32 %v3437, 16
        %v3441 = vmul.u32 %v3438, 14564
        %v3442 = vmul.u32 %v3438, 58254
        %v3443 = vmul.u32 %v3439, 14564
        %v3444 = vmul.u32 %v3439, 58254
        %v3445 = vshll.u32 %v3442, 16
        %v3446 = vshrl.u32 %v3442, 16
        %v3447 = vshll.u32 %v3443, 16
        %v3448 = vshrl.u32 %v3443, 16
        %vm3449 = vc.u32 %v3441, %v3445
        %v3450 = vsel %vm3449, 1, 0
        %v3451 = vadd.s32 %v3441, %v3445
        %v3452 = vadd.s32 %v3444, %v3450
        %vm3453 = vc.u32 %v3451, %v3447
        %v3454 = vsel %vm3453, 1, 0
        %v3455 = vadd.s32 %v3451, %v3447
        %v3456 = vadd.s32 %v3452, %v3454
        %v3457 = vadd.s32 %v3456, %v3446
        %v3458 = vadd.s32 %v3457, %v3448
        %v3459 = vshrl.u32 %v3458, 4
        %v3460 = vmul.u32 %v3459, 18
        %v3461 = vsub.s32 %v3437, %v3460
        %v3462 = vsub.s32 0, %v3461
        %v3463 = vsel %vm3435, %v3462, %v3461
        %vm3464 = vcmp.lt.s32.totalorder %v2448, 0
        %v3465 = vsub.s32 0, %v2448
        %v3466 = vsel %vm3464, %v3465, %v2448
        %v3467 = vand.u32 %v3466, 65535
        %v3468 = vshrl.u32 %v3466, 16
        %v3470 = vmul.u32 %v3467, 14564
        %v3471 = vmul.u32 %v3467, 58254
        %v3472 = vmul.u32 %v3468, 14564
        %v3473 = vmul.u32 %v3468, 58254
        %v3474 = vshll.u32 %v3471, 16
        %v3475 = vshrl.u32 %v3471, 16
        %v3476 = vshll.u32 %v3472, 16
        %v3477 = vshrl.u32 %v3472, 16
        %vm3478 = vc.u32 %v3470, %v3474
        %v3479 = vsel %vm3478, 1, 0
        %v3480 = vadd.s32 %v3470, %v3474
        %v3481 = vadd.s32 %v3473, %v3479
        %vm3482 = vc.u32 %v3480, %v3476
        %v3483 = vsel %vm3482, 1, 0
        %v3484 = vadd.s32 %v3480, %v3476
        %v3485 = vadd.s32 %v3481, %v3483
        %v3486 = vadd.s32 %v3485, %v3475
        %v3487 = vadd.s32 %v3486, %v3477
        %v3488 = vshrl.u32 %v3487, 4
        %v3489 = vmul.u32 %v3488, 18
        %v3490 = vsub.s32 %v3466, %v3489
        %v3491 = vsub.s32 0, %v3490
        %v3492 = vsel %vm3464, %v3491, %v3490
        %vm3493 = vcmp.ne.s32.totalorder %v2477, 0
        %vm3494 = vcmp.ne.s32.totalorder %v2506, 0
        %vm3495 = vcmp.ne.s32.totalorder %v2535, 0
        %vm3496 = vcmp.ne.s32.totalorder %v2564, 0
        %vm3497 = vcmp.ne.s32.totalorder %v2593, 0
        %vm3498 = vcmp.ne.s32.totalorder %v2622, 0
        %vm3499 = vcmp.ne.s32.totalorder %v2651, 0
        %vm3500 = vcmp.ne.s32.totalorder %v2680, 0
        %vm3501 = vcmp.ne.s32.totalorder %v2709, 0
        %vm3502 = vcmp.ne.s32.totalorder %v2738, 0
        %vm3503 = vcmp.ne.s32.totalorder %v2767, 0
        %vm3504 = vcmp.ne.s32.totalorder %v2796, 0
        %vm3505 = vcmp.ne.s32.totalorder %v2825, 0
        %vm3506 = vcmp.ne.s32.totalorder %v2854, 0
        %vm3507 = vcmp.ne.s32.totalorder %v2883, 0
        %vm3508 = vcmp.ne.s32.totalorder %v2912, 0
        %vm3509 = vcmp.ne.s32.totalorder %v2941, 0
        %vm3510 = vcmp.ne.s32.totalorder %v2970, 0
        %vm3511 = vcmp.ne.s32.totalorder %v2999, 0
        %vm3512 = vcmp.ne.s32.totalorder %v3028, 0
        %vm3513 = vcmp.ne.s32.totalorder %v3057, 0
        %vm3514 = vcmp.ne.s32.totalorder %v3086, 0
        %vm3515 = vcmp.ne.s32.totalorder %v3115, 0
        %vm3516 = vcmp.ne.s32.totalorder %v3144, 0
        %vm3517 = vcmp.ne.s32.totalorder %v3173, 0
        %vm3518 = vcmp.ne.s32.totalorder %v3202, 0
        %vm3519 = vcmp.ne.s32.totalorder %v3231, 0
        %vm3520 = vcmp.ne.s32.totalorder %v3260, 0
        %vm3521 = vcmp.ne.s32.totalorder %v3289, 0
        %vm3522 = vcmp.ne.s32.totalorder %v3318, 0
        %vm3523 = vcmp.ne.s32.totalorder %v3347, 0
        %vm3524 = vcmp.ne.s32.totalorder %v3376, 0
        %vm3525 = vcmp.ne.s32.totalorder %v3405, 0
        %vm3526 = vcmp.ne.s32.totalorder %v3434, 0
        %vm3527 = vcmp.ne.s32.totalorder %v3463, 0
        %vm3528 = vcmp.ne.s32.totalorder %v3492, 0
        %vm3529 = vcmp.lt.s32.totalorder %v2477, 0
        %vm3530 = vcmp.lt.s32.totalorder %v2506, 0
        %vm3531 = vcmp.lt.s32.totalorder %v2535, 0
        %vm3532 = vcmp.lt.s32.totalorder %v2564, 0
        %vm3533 = vcmp.lt.s32.totalorder %v2593, 0
        %vm3534 = vcmp.lt.s32.totalorder %v2622, 0
        %vm3535 = vcmp.lt.s32.totalorder %v2651, 0
        %vm3536 = vcmp.lt.s32.totalorder %v2680, 0
        %vm3537 = vcmp.lt.s32.totalorder %v2709, 0
        %vm3538 = vcmp.lt.s32.totalorder %v2738, 0
        %vm3539 = vcmp.lt.s32.totalorder %v2767, 0
        %vm3540 = vcmp.lt.s32.totalorder %v2796, 0
        %vm3541 = vcmp.lt.s32.totalorder %v2825, 0
        %vm3542 = vcmp.lt.s32.totalorder %v2854, 0
        %vm3543 = vcmp.lt.s32.totalorder %v2883, 0
        %vm3544 = vcmp.lt.s32.totalorder %v2912, 0
        %vm3545 = vcmp.lt.s32.totalorder %v2941, 0
        %vm3546 = vcmp.lt.s32.totalorder %v2970, 0
        %vm3547 = vcmp.lt.s32.totalorder %v2999, 0
        %vm3548 = vcmp.lt.s32.totalorder %v3028, 0
        %vm3549 = vcmp.lt.s32.totalorder %v3057, 0
        %vm3550 = vcmp.lt.s32.totalorder %v3086, 0
        %vm3551 = vcmp.lt.s32.totalorder %v3115, 0
        %vm3552 = vcmp.lt.s32.totalorder %v3144, 0
        %vm3553 = vcmp.lt.s32.totalorder %v3173, 0
        %vm3554 = vcmp.lt.s32.totalorder %v3202, 0
        %vm3555 = vcmp.lt.s32.totalorder %v3231, 0
        %vm3556 = vcmp.lt.s32.totalorder %v3260, 0
        %vm3557 = vcmp.lt.s32.totalorder %v3289, 0
        %vm3558 = vcmp.lt.s32.totalorder %v3318, 0
        %vm3559 = vcmp.lt.s32.totalorder %v3347, 0
        %vm3560 = vcmp.lt.s32.totalorder %v3376, 0
        %vm3561 = vcmp.lt.s32.totalorder %v3405, 0
        %vm3562 = vcmp.lt.s32.totalorder %v3434, 0
        %vm3563 = vcmp.lt.s32.totalorder %v3463, 0
        %vm3564 = vcmp.lt.s32.totalorder %v3492, 0
        %vm3565 = vmand %vm3529, %vm3493
        %vm3566 = vmand %vm3530, %vm3494
        %vm3567 = vmand %vm3531, %vm3495
        %vm3568 = vmand %vm3532, %vm3496
        %vm3569 = vmand %vm3533, %vm3497
        %vm3570 = vmand %vm3534, %vm3498
        %vm3571 = vmand %vm3535, %vm3499
        %vm3572 = vmand %vm3536, %vm3500
        %vm3573 = vmand %vm3537, %vm3501
        %vm3574 = vmand %vm3538, %vm3502
        %vm3575 = vmand %vm3539, %vm3503
        %vm3576 = vmand %vm3540, %vm3504
        %vm3577 = vmand %vm3541, %vm3505
        %vm3578 = vmand %vm3542, %vm3506
        %vm3579 = vmand %vm3543, %vm3507
        %vm3580 = vmand %vm3544, %vm3508
        %vm3581 = vmand %vm3545, %vm3509
        %vm3582 = vmand %vm3546, %vm3510
        %vm3583 = vmand %vm3547, %vm3511
        %vm3584 = vmand %vm3548, %vm3512
        %vm3585 = vmand %vm3549, %vm3513
        %vm3586 = vmand %vm3550, %vm3514
        %vm3587 = vmand %vm3551, %vm3515
        %vm3588 = vmand %vm3552, %vm3516
        %vm3589 = vmand %vm3553, %vm3517
        %vm3590 = vmand %vm3554, %vm3518
        %vm3591 = vmand %vm3555, %vm3519
        %vm3592 = vmand %vm3556, %vm3520
        %vm3593 = vmand %vm3557, %vm3521
        %vm3594 = vmand %vm3558, %vm3522
        %vm3595 = vmand %vm3559, %vm3523
        %vm3596 = vmand %vm3560, %vm3524
        %vm3597 = vmand %vm3561, %vm3525
        %vm3598 = vmand %vm3562, %vm3526
        %vm3599 = vmand %vm3563, %vm3527
        %vm3600 = vmand %vm3564, %vm3528
        %v3601 = vadd.s32 %v2477, 18
        %v3602 = vadd.s32 %v2506, 18
        %v3603 = vadd.s32 %v2535, 18
        %v3604 = vadd.s32 %v2564, 18
        %v3605 = vadd.s32 %v2593, 18
        %v3606 = vadd.s32 %v2622, 18
        %v3607 = vadd.s32 %v2651, 18
        %v3608 = vadd.s32 %v2680, 18
        %v3609 = vadd.s32 %v2709, 18
        %v3610 = vadd.s32 %v2738, 18
        %v3611 = vadd.s32 %v2767, 18
        %v3612 = vadd.s32 %v2796, 18
        %v3613 = vadd.s32 %v2825, 18
        %v3614 = vadd.s32 %v2854, 18
        %v3615 = vadd.s32 %v2883, 18
        %v3616 = vadd.s32 %v2912, 18
        %v3617 = vadd.s32 %v2941, 18
        %v3618 = vadd.s32 %v2970, 18
        %v3619 = vadd.s32 %v2999, 18
        %v3620 = vadd.s32 %v3028, 18
        %v3621 = vadd.s32 %v3057, 18
        %v3622 = vadd.s32 %v3086, 18
        %v3623 = vadd.s32 %v3115, 18
        %v3624 = vadd.s32 %v3144, 18
        %v3625 = vadd.s32 %v3173, 18
        %v3626 = vadd.s32 %v3202, 18
        %v3627 = vadd.s32 %v3231, 18
        %v3628 = vadd.s32 %v3260, 18
        %v3629 = vadd.s32 %v3289, 18
        %v3630 = vadd.s32 %v3318, 18
        %v3631 = vadd.s32 %v3347, 18
        %v3632 = vadd.s32 %v3376, 18
        %v3633 = vadd.s32 %v3405, 18
        %v3634 = vadd.s32 %v3434, 18
        %v3635 = vadd.s32 %v3463, 18
        %v3636 = vadd.s32 %v3492, 18
        %v3637 = vsel %vm3565, %v3601, %v2477
        %v3638 = vsel %vm3566, %v3602, %v2506
        %v3639 = vsel %vm3567, %v3603, %v2535
        %v3640 = vsel %vm3568, %v3604, %v2564
        %v3641 = vsel %vm3569, %v3605, %v2593
        %v3642 = vsel %vm3570, %v3606, %v2622
        %v3643 = vsel %vm3571, %v3607, %v2651
        %v3644 = vsel %vm3572, %v3608, %v2680
        %v3645 = vsel %vm3573, %v3609, %v2709
        %v3646 = vsel %vm3574, %v3610, %v2738
        %v3647 = vsel %vm3575, %v3611, %v2767
        %v3648 = vsel %vm3576, %v3612, %v2796
        %v3649 = vsel %vm3577, %v3613, %v2825
        %v3650 = vsel %vm3578, %v3614, %v2854
        %v3651 = vsel %vm3579, %v3615, %v2883
        %v3652 = vsel %vm3580, %v3616, %v2912
        %v3653 = vsel %vm3581, %v3617, %v2941
        %v3654 = vsel %vm3582, %v3618, %v2970
        %v3655 = vsel %vm3583, %v3619, %v2999
        %v3656 = vsel %vm3584, %v3620, %v3028
        %v3657 = vsel %vm3585, %v3621, %v3057
        %v3658 = vsel %vm3586, %v3622, %v3086
        %v3659 = vsel %vm3587, %v3623, %v3115
        %v3660 = vsel %vm3588, %v3624, %v3144
        %v3661 = vsel %vm3589, %v3625, %v3173
        %v3662 = vsel %vm3590, %v3626, %v3202
        %v3663 = vsel %vm3591, %v3627, %v3231
        %v3664 = vsel %vm3592, %v3628, %v3260
        %v3665 = vsel %vm3593, %v3629, %v3289
        %v3666 = vsel %vm3594, %v3630, %v3318
        %v3667 = vsel %vm3595, %v3631, %v3347
        %v3668 = vsel %vm3596, %v3632, %v3376
        %v3669 = vsel %vm3597, %v3633, %v3405
        %v3670 = vsel %vm3598, %v3634, %v3434
        %v3671 = vsel %vm3599, %v3635, %v3463
        %v3672 = vsel %vm3600, %v3636, %v3492
        %vm3673 = vcmp.lt.s32.totalorder %v3637, 16
        %vm3674 = vcmp.lt.s32.totalorder %v3638, 16
        %vm3675 = vcmp.lt.s32.totalorder %v3639, 16
        %vm3676 = vcmp.lt.s32.totalorder %v3640, 16
        %vm3677 = vcmp.lt.s32.totalorder %v3641, 16
        %vm3678 = vcmp.lt.s32.totalorder %v3642, 16
        %vm3679 = vcmp.lt.s32.totalorder %v3643, 16
        %vm3680 = vcmp.lt.s32.totalorder %v3644, 16
        %vm3681 = vcmp.lt.s32.totalorder %v3645, 16
        %vm3682 = vcmp.lt.s32.totalorder %v3646, 16
        %vm3683 = vcmp.lt.s32.totalorder %v3647, 16
        %vm3684 = vcmp.lt.s32.totalorder %v3648, 16
        %vm3685 = vcmp.lt.s32.totalorder %v3649, 16
        %vm3686 = vcmp.lt.s32.totalorder %v3650, 16
        %vm3687 = vcmp.lt.s32.totalorder %v3651, 16
        %vm3688 = vcmp.lt.s32.totalorder %v3652, 16
        %vm3689 = vcmp.lt.s32.totalorder %v3653, 16
        %vm3690 = vcmp.lt.s32.totalorder %v3654, 16
        %vm3691 = vcmp.lt.s32.totalorder %v3655, 16
        %vm3692 = vcmp.lt.s32.totalorder %v3656, 16
        %vm3693 = vcmp.lt.s32.totalorder %v3657, 16
        %vm3694 = vcmp.lt.s32.totalorder %v3658, 16
        %vm3695 = vcmp.lt.s32.totalorder %v3659, 16
        %vm3696 = vcmp.lt.s32.totalorder %v3660, 16
        %vm3697 = vcmp.lt.s32.totalorder %v3661, 16
        %vm3698 = vcmp.lt.s32.totalorder %v3662, 16
        %vm3699 = vcmp.lt.s32.totalorder %v3663, 16
        %vm3700 = vcmp.lt.s32.totalorder %v3664, 16
        %vm3701 = vcmp.lt.s32.totalorder %v3665, 16
        %vm3702 = vcmp.lt.s32.totalorder %v3666, 16
        %vm3703 = vcmp.lt.s32.totalorder %v3667, 16
        %vm3704 = vcmp.lt.s32.totalorder %v3668, 16
        %vm3705 = vcmp.lt.s32.totalorder %v3669, 16
        %vm3706 = vcmp.lt.s32.totalorder %v3670, 16
        %vm3707 = vcmp.lt.s32.totalorder %v3671, 16
        %vm3708 = vcmp.lt.s32.totalorder %v3672, 16
        %v3709 = vsel %vm3673, %v2340, 0.0
        %v3710 = vsel %vm3674, %v2341, 0.0
        %v3711 = vsel %vm3675, %v2342, 0.0
        %v3712 = vsel %vm3676, %v2343, 0.0
        %v3713 = vsel %vm3677, %v2344, 0.0
        %v3714 = vsel %vm3678, %v2345, 0.0
        %v3715 = vsel %vm3679, %v2346, 0.0
        %v3716 = vsel %vm3680, %v2347, 0.0
        %v3717 = vsel %vm3681, %v2348, 0.0
        %v3718 = vsel %vm3682, %v2349, 0.0
        %v3719 = vsel %vm3683, %v2350, 0.0
        %v3720 = vsel %vm3684, %v2351, 0.0
        %v3721 = vsel %vm3685, %v2352, 0.0
        %v3722 = vsel %vm3686, %v2353, 0.0
        %v3723 = vsel %vm3687, %v2354, 0.0
        %v3724 = vsel %vm3688, %v2355, 0.0
        %v3725 = vsel %vm3689, %v2356, 0.0
        %v3726 = vsel %vm3690, %v2357, 0.0
        %v3727 = vsel %vm3691, %v2358, 0.0
        %v3728 = vsel %vm3692, %v2359, 0.0
        %v3729 = vsel %vm3693, %v2360, 0.0
        %v3730 = vsel %vm3694, %v2361, 0.0
        %v3731 = vsel %vm3695, %v2362, 0.0
        %v3732 = vsel %vm3696, %v2363, 0.0
        %v3733 = vsel %vm3697, %v2364, 0.0
        %v3734 = vsel %vm3698, %v2365, 0.0
        %v3735 = vsel %vm3699, %v2366, 0.0
        %v3736 = vsel %vm3700, %v2367, 0.0
        %v3737 = vsel %vm3701, %v2368, 0.0
        %v3738 = vsel %vm3702, %v2369, 0.0
        %v3739 = vsel %vm3703, %v2370, 0.0
        %v3740 = vsel %vm3704, %v2371, 0.0
        %v3741 = vsel %vm3705, %v2372, 0.0
        %v3742 = vsel %vm3706, %v2373, 0.0
        %v3743 = vsel %vm3707, %v2374, 0.0
        %v3744 = vsel %vm3708, %v2375, 0.0
        %v3745 = vadd.f32 %v3709, %v3710
        %v3746 = vadd.f32 %v3745, %v3711
        %v3747 = vadd.f32 %v3746, %v3712
        %v3748 = vadd.f32 %v3747, %v3713
        %v3749 = vadd.f32 %v3748, %v3714
        %v3750 = vadd.f32 %v3749, %v3715
        %v3751 = vadd.f32 %v3750, %v3716
        %v3752 = vadd.f32 %v3751, %v3717
        %v3753 = vadd.f32 %v3752, %v3718
        %v3754 = vadd.f32 %v3753, %v3719
        %v3755 = vadd.f32 %v3754, %v3720
        %v3756 = vadd.f32 %v3755, %v3721
        %v3757 = vadd.f32 %v3756, %v3722
        %v3758 = vadd.f32 %v3757, %v3723
        %v3759 = vadd.f32 %v3758, %v3724
        %v3760 = vadd.f32 %v3759, %v3725
        %v3761 = vadd.f32 %v3760, %v3726
        %v3762 = vadd.f32 %v3761, %v3727
        %v3763 = vadd.f32 %v3762, %v3728
        %v3764 = vadd.f32 %v3763, %v3729
        %v3765 = vadd.f32 %v3764, %v3730
        %v3766 = vadd.f32 %v3765, %v3731
        %v3767 = vadd.f32 %v3766, %v3732
        %v3768 = vadd.f32 %v3767, %v3733
        %v3769 = vadd.f32 %v3768, %v3734
        %v3770 = vadd.f32 %v3769, %v3735
        %v3771 = vadd.f32 %v3770, %v3736
        %v3772 = vadd.f32 %v3771, %v3737
        %v3773 = vadd.f32 %v3772, %v3738
        %v3774 = vadd.f32 %v3773, %v3739
        %v3775 = vadd.f32 %v3774, %v3740
        %v3776 = vadd.f32 %v3775, %v3741
        %v3777 = vadd.f32 %v3776, %v3742
        %v3778 = vadd.f32 %v3777, %v3743
        %v3779 = vadd.f32 %v3778, %v3744
        %v3780 = vrot.slane %v3779, 4
        %v3781 = vadd.f32 %v3779, %v3780
        %v3782 = vrot.slane %v3781, 2
        %v3783 = vadd.f32 %v3781, %v3782
        %v3784 = vrot.slane %v3783, 1
        %v3785 = vadd.f32 %v3783, %v3784
        %3786 = vst [vmem:[%s201] sm:$0xff] %v3785
        %v3787 = vmul.f32 %v3709, %v3709
        %v3788 = vmul.f32 %v3710, %v3710
        %v3789 = vmul.f32 %v3711, %v3711
        %v3790 = vmul.f32 %v3712, %v3712
        %v3791 = vmul.f32 %v3713, %v3713
        %v3792 = vmul.f32 %v3714, %v3714
        %v3793 = vmul.f32 %v3715, %v3715
        %v3794 = vmul.f32 %v3716, %v3716
        %v3795 = vmul.f32 %v3717, %v3717
        %v3796 = vmul.f32 %v3718, %v3718
        %v3797 = vmul.f32 %v3719, %v3719
        %v3798 = vmul.f32 %v3720, %v3720
        %v3799 = vmul.f32 %v3721, %v3721
        %v3800 = vmul.f32 %v3722, %v3722
        %v3801 = vmul.f32 %v3723, %v3723
        %v3802 = vmul.f32 %v3724, %v3724
        %v3803 = vmul.f32 %v3725, %v3725
        %v3804 = vmul.f32 %v3726, %v3726
        %v3805 = vmul.f32 %v3727, %v3727
        %v3806 = vmul.f32 %v3728, %v3728
        %v3807 = vmul.f32 %v3729, %v3729
        %v3808 = vmul.f32 %v3730, %v3730
        %v3809 = vmul.f32 %v3731, %v3731
        %v3810 = vmul.f32 %v3732, %v3732
        %v3811 = vmul.f32 %v3733, %v3733
        %v3812 = vmul.f32 %v3734, %v3734
        %v3813 = vmul.f32 %v3735, %v3735
        %v3814 = vmul.f32 %v3736, %v3736
        %v3815 = vmul.f32 %v3737, %v3737
        %v3816 = vmul.f32 %v3738, %v3738
        %v3817 = vmul.f32 %v3739, %v3739
        %v3818 = vmul.f32 %v3740, %v3740
        %v3819 = vmul.f32 %v3741, %v3741
        %v3820 = vmul.f32 %v3742, %v3742
        %v3821 = vmul.f32 %v3743, %v3743
        %v3822 = vmul.f32 %v3744, %v3744
        %v3823 = vadd.f32 %v3787, %v3788
        %v3824 = vadd.f32 %v3823, %v3789
        %v3825 = vadd.f32 %v3824, %v3790
        %v3826 = vadd.f32 %v3825, %v3791
        %v3827 = vadd.f32 %v3826, %v3792
        %v3828 = vadd.f32 %v3827, %v3793
        %v3829 = vadd.f32 %v3828, %v3794
        %v3830 = vadd.f32 %v3829, %v3795
        %v3831 = vadd.f32 %v3830, %v3796
        %v3832 = vadd.f32 %v3831, %v3797
        %v3833 = vadd.f32 %v3832, %v3798
        %v3834 = vadd.f32 %v3833, %v3799
        %v3835 = vadd.f32 %v3834, %v3800
        %v3836 = vadd.f32 %v3835, %v3801
        %v3837 = vadd.f32 %v3836, %v3802
        %v3838 = vadd.f32 %v3837, %v3803
        %v3839 = vadd.f32 %v3838, %v3804
        %v3840 = vadd.f32 %v3839, %v3805
        %v3841 = vadd.f32 %v3840, %v3806
        %v3842 = vadd.f32 %v3841, %v3807
        %v3843 = vadd.f32 %v3842, %v3808
        %v3844 = vadd.f32 %v3843, %v3809
        %v3845 = vadd.f32 %v3844, %v3810
        %v3846 = vadd.f32 %v3845, %v3811
        %v3847 = vadd.f32 %v3846, %v3812
        %v3848 = vadd.f32 %v3847, %v3813
        %v3849 = vadd.f32 %v3848, %v3814
        %v3850 = vadd.f32 %v3849, %v3815
        %v3851 = vadd.f32 %v3850, %v3816
        %v3852 = vadd.f32 %v3851, %v3817
        %v3853 = vadd.f32 %v3852, %v3818
        %v3854 = vadd.f32 %v3853, %v3819
        %v3855 = vadd.f32 %v3854, %v3820
        %v3856 = vadd.f32 %v3855, %v3821
        %v3857 = vadd.f32 %v3856, %v3822
        %v3858 = vrot.slane %v3857, 4
        %v3859 = vadd.f32 %v3857, %v3858
        %v3860 = vrot.slane %v3859, 2
        %v3861 = vadd.f32 %v3859, %v3860
        %v3862 = vrot.slane %v3861, 1
        %v3863 = vadd.f32 %v3861, %v3862
        %3864 = vst [vmem:[%s208] sm:$0xff] %v3863
        %s3865 = sand.u32 %s77, 1
        %s3866 = scalar_lea.sflag [#allocation3], %s3865
        %s3867 = sand.u32 %s77, 1
        %s3868 = smul.addr %s3867, 288
        %s3869 = scalar_lea.vmem [#allocation2], %s3868
        %s3870 = sand.u32 %s22, 1
        %s3871 = scalar_lea.sflag [#allocation5], %s3870
        %s3872 = sand.u32 %s103, 1
        %s3873 = smul.addr %s3872, 8
        %s3874 = scalar_lea.vmem [#allocation4], %s3873
        %s3875 = sand.u32 %s22, 1
        %s3876 = scalar_lea.sflag [#allocation5], %s3875
        %s3877 = sand.u32 %s129, 1
        %s3878 = smul.addr %s3877, 8
        %s3879 = scalar_lea.vmem [#allocation6], %s3878
        // Predicated region
        $region29: #{tpu_custom_call.1} parent=27 // pred_check
          %p3880 = pneg %p87
        $region30: #{tpu_custom_call.1} parent=27 // pred_check_branch
          %3882 = sbr.rel (%p3880) target = $region32
        $region31: #{tpu_custom_call.1} parent=27 // pred_region
          %3884 = vsyncadd %s3866, 0
          %s3885 = smul.addr %s22, 36
          %s3886 = smul.addr %s3885, 8
          %s3887 = scalar_lea.hbm %s2, %s3886
          %s3888 = sshll.u32 %s3869, 4
          %s3889 = int_to_ptr.vmem [resolvable:$true] %s3888
          %s3890 = sshll.u32 %s3887, 4
          %s3891 = int_to_ptr.hbm [resolvable:$true] %s3890
          %3896 = dma.vmem_to_hbm [thread:$0]  %s3889, 4608, %s3891, %s3866, 128, 128, 8
        $region32: #{tpu_custom_call.1} parent=27 // pred_fallthru
          _
        // Predicated region
        $region33: #{tpu_custom_call.1} parent=27 // pred_check
          %p3897 = pneg %p113
        $region34: #{tpu_custom_call.1} parent=27 // pred_check_branch
          %3899 = sbr.rel (%p3897) target = $region36
        $region35: #{tpu_custom_call.1} parent=27 // pred_region
          %3901 = vsyncadd %s3871, 0
          %s3902 = smul.addr %s22, 8
          %s3903 = scalar_lea.hbm %s3, %s3902
          %s3905 = sshll.u32 %s3874, 4
          %s3906 = int_to_ptr.vmem [resolvable:$true] %s3905
          %s3907 = sshll.u32 %s3903, 4
          %s3908 = int_to_ptr.hbm [resolvable:$true] %s3907
          %3910 = dma.vmem_to_hbm [thread:$0]  %s3906, 128, %s3908, %s3871
        $region36: #{tpu_custom_call.1} parent=27 // pred_fallthru
          _
        // Predicated region
        $region37: #{tpu_custom_call.1} parent=27 // pred_check
          %p3911 = pneg %p139
        $region38: #{tpu_custom_call.1} parent=27 // pred_check_branch
          %3913 = sbr.rel (%p3911) target = $region40
        $region39: #{tpu_custom_call.1} parent=27 // pred_region
          %3915 = vsyncadd %s3876, 0
          %s3916 = smul.addr %s22, 8
          %s3917 = scalar_lea.hbm %s4, %s3916
          %s3919 = sshll.u32 %s3879, 4
          %s3920 = int_to_ptr.vmem [resolvable:$true] %s3919
          %s3921 = sshll.u32 %s3917, 4
          %s3922 = int_to_ptr.hbm [resolvable:$true] %s3921
          %3924 = dma.vmem_to_hbm [thread:$0]  %s3920, 128, %s3922, %s3876
        $region40: #{tpu_custom_call.1} parent=27 // pred_fallthru
          _
      $region28: #{tpu_custom_call.1} parent=5 // pred_fallthru
        _
      %p3925 = scmp.le.s32.totalorder 2, %s17
      // Predicated region
      $region41: #{tpu_custom_call.1} parent=5 // pred_check
        %p3926 = pneg %p3925
      $region42: #{tpu_custom_call.1} parent=5 // pred_check_branch
        %3928 = sbr.rel (%p3926) target = $region44
      $region43: #{tpu_custom_call.1} parent=5 // pred_region
        %s3929 = ssub.s32 %s17, 2
        // Predicated region
        $region45: #{tpu_custom_call.1} parent=43 // pred_check
          %p3930 = pneg %p93
        $region46: #{tpu_custom_call.1} parent=43 // pred_check_branch
          %3932 = sbr.rel (%p3930) target = $region48
        $region47: #{tpu_custom_call.1} parent=43 // pred_region
          %s3933 = sand.u32 %s78, 1
          %s3934 = scalar_lea.sflag [#allocation3], %s3933
          %s3935 = sand.u32 %s78, 1
          %s3936 = smul.addr %s3935, 288
          %s3937 = scalar_lea.vmem [#allocation2], %s3936
          %3939 = dma.done %s3934, 4608
        $region48: #{tpu_custom_call.1} parent=43 // pred_fallthru
          _
        // Predicated region
        $region49: #{tpu_custom_call.1} parent=43 // pred_check
          %p3940 = pneg %p119
        $region50: #{tpu_custom_call.1} parent=43 // pred_check_branch
          %3942 = sbr.rel (%p3940) target = $region52
        $region51: #{tpu_custom_call.1} parent=43 // pred_region
          %s3943 = sand.u32 %s23, 1
          %s3944 = scalar_lea.sflag [#allocation5], %s3943
          %s3945 = sand.u32 %s104, 1
          %s3946 = smul.addr %s3945, 8
          %s3947 = scalar_lea.vmem [#allocation4], %s3946
          %3949 = dma.done %s3944, 128
        $region52: #{tpu_custom_call.1} parent=43 // pred_fallthru
          _
        // Predicated region
        $region53: #{tpu_custom_call.1} parent=43 // pred_check
          %p3950 = pneg %p145
        $region54: #{tpu_custom_call.1} parent=43 // pred_check_branch
          %3952 = sbr.rel (%p3950) target = $region56
        $region55: #{tpu_custom_call.1} parent=43 // pred_region
          %s3953 = sand.u32 %s23, 1
          %s3954 = scalar_lea.sflag [#allocation5], %s3953
          %s3955 = sand.u32 %s130, 1
          %s3956 = smul.addr %s3955, 8
          %s3957 = scalar_lea.vmem [#allocation6], %s3956
          %3959 = dma.done %s3954, 128
        $region56: #{tpu_custom_call.1} parent=43 // pred_fallthru
          _
      $region44: #{tpu_custom_call.1} parent=5 // pred_fallthru
        _
    $region6: #{tpu_custom_call.1} parent=1 // loop_footer
      %s21 = sadd.s32 1, %s17
    $region7: #{tpu_custom_call.1} parent=1 // loop_footer_branch
      %16 = sbr.rel target = $region3
    $region8: #{tpu_custom_call.1} parent=1 // loop_exit
      _
    %3960 = vsyncpa [#allocation3], 1
    %s3961 = scalar_lea.sflag [#allocation3], 1
    %3962 = vsyncpa %s3961, 1
    %3963 = vsyncpa [#allocation5], 1
    %s3964 = scalar_lea.sflag [#allocation5], 1
    %3965 = vsyncpa %s3964, 1

</llo_original>
